<compile_context>
chip_gen: v7x
topology: tpu7x:2x2x1
jax: 0.10.0
libtpu: 0.0.40
codegen_flags: <defaults>
</compile_context>

<pallas_src>
import functools

import jax
import jax.numpy as jnp
from jax.experimental import pallas as pl
from jax.experimental.pallas import tpu as pltpu

# ----------------------------- config ---------------------------------------
B = 2
C_IN = 3
IMG = 32
PATCH = 8
GRID = IMG // PATCH              # 4
NUM_PATCHES = GRID * GRID        # 16
SEQ = NUM_PATCHES + 1            # 17 (cls + patches)
SEQ_PAD = 24                     # padded token count per image (multiple of 8)
WIDTH = 64
HEADS = 4
HEAD_DIM = WIDTH // HEADS        # 16
LAYERS = 2
OUT_DIM = 32
MLP_DIM = 4 * WIDTH              # 256
CPP = C_IN * PATCH * PATCH       # 192
LN_EPS = 1e-5
ATTN_SCALE = 1.0 / (HEAD_DIM ** 0.5)

PARAM_ORDER = (
    "w_patch", "ln_pre_g", "ln_pre_b",
    "ln1_g", "ln1_b", "w_qkv", "b_qkv", "w_out", "b_out",
    "ln2_g", "ln2_b", "w_fc", "b_fc", "w_cproj", "b_cproj",
    "ln_post_g", "ln_post_b", "w_proj",
)


# ----------------------------- fused Pallas kernel ---------------------------
def _clip_encoder_kernel(
    patches_ref,                    # (B*NUM_PATCHES, CPP)  f32  real patches only
    pos_ref,                        # (TOT, WIDTH)          f32  pos(+cls) per token slot
    bias_ref,                       # (TOT, TOT)            f32  additive attn bias {0,-1e30}
    w_patch_ref,                    # (CPP, WIDTH)          bf16
    lnpre_g_ref, lnpre_b_ref,       # (1, WIDTH)            f32
    ln1_g_ref, ln1_b_ref,           # (LAYERS, 1, WIDTH)    f32
    w_qkv_ref,                      # (LAYERS, WIDTH, 3W)   bf16 (q cols pre-scaled by 1/sqrt(d))
    b_qkv_ref,                      # (LAYERS, 1, 3W)       f32  (q part pre-scaled)
    w_out_ref,                      # (LAYERS, WIDTH, WIDTH) bf16
    b_out_ref,                      # (LAYERS, 1, WIDTH)    f32
    ln2_g_ref, ln2_b_ref,           # (LAYERS, 1, WIDTH)    f32
    w_fc_ref,                       # (LAYERS, WIDTH, MLP_DIM) bf16
    b_fc_ref,                       # (LAYERS, 1, MLP_DIM)  f32
    w_cproj_ref,                    # (LAYERS, MLP_DIM, WIDTH) bf16
    b_cproj_ref,                    # (LAYERS, 1, WIDTH)    f32
    lnpost_g_ref, lnpost_b_ref,     # (1, WIDTH)            f32
    w_proj_ref,                     # (WIDTH, OUT_DIM)      bf16
    out_ref,                        # (B, OUT_DIM)          f32
    *,
    num_images,
):
    f32 = jnp.float32
    bf16 = jnp.bfloat16

    def ln(v, g, b):
        mu = jnp.mean(v, axis=-1, keepdims=True)
        vc = v - mu
        var = jnp.mean(vc * vc, axis=-1, keepdims=True)
        return vc * jax.lax.rsqrt(var + LN_EPS) * g + b

    def mm(a, w):
        # bf16 MXU operands, f32 accumulation (astype is a no-op if already bf16).
        return jnp.dot(a.astype(bf16), w.astype(bf16), preferred_element_type=f32)

    def mm_nt(a, b_):
        # a @ b^T with bf16 operands, f32 accumulation (no explicit transpose).
        return jax.lax.dot_general(
            a.astype(bf16), b_.astype(bf16),
            dimension_numbers=(((1,), (1,)), ((), ())),
            preferred_element_type=f32)

    # ---- patch-embedding conv (stride=kernel=PATCH, no bias) as one matmul ----
    # Token layout per image: [16 patch tokens | cls token | 7 pad tokens];
    # every per-image group starts on an 8-sublane boundary, so assembly below
    # only uses aligned, full-sublane-group pieces.
    pe = mm(patches_ref[...], w_patch_ref[...])            # (B*NP, WIDTH) f32
    pad_rows = jnp.zeros((SEQ_PAD - NUM_PATCHES, WIDTH), f32)
    parts = []
    for b in range(num_images):
        parts.append(pe[b * NUM_PATCHES:(b + 1) * NUM_PATCHES, :])
        parts.append(pad_rows)                             # cls slot + pad (filled by pos_ref)
    x = jnp.concatenate(parts, axis=0) + pos_ref[...]      # (TOT, WIDTH) f32

    # ---- ln_pre ----
    x = ln(x, lnpre_g_ref[...], lnpre_b_ref[...])

    # additive attention bias: 0 for valid keys of the same image, -1e30 otherwise
    bias = bias_ref[...]                                   # (TOT, TOT) f32

    for l in range(LAYERS):                                # unrolled; weights resident in VMEM
        # -------- multi-head self-attention (pre-LN residual block) --------
        h_ln = ln(x, ln1_g_ref[l], ln1_b_ref[l])
        qkv = mm(h_ln, w_qkv_ref[l]) + b_qkv_ref[l]        # (TOT, 3W) f32, q pre-scaled
        qkv_bf = qkv.astype(bf16)                          # single cast; sliced per head
        ctx_parts = []
        for h in range(HEADS):                             # unrolled head loop
            lo = h * HEAD_DIM
            q = qkv_bf[:, lo:lo + HEAD_DIM]
            k = qkv_bf[:, WIDTH + lo:WIDTH + lo + HEAD_DIM]
            v = qkv_bf[:, 2 * WIDTH + lo:2 * WIDTH + lo + HEAD_DIM]
            s = mm_nt(q, k) + bias                         # (TOT, TOT) f32
            s = s - jnp.max(s, axis=-1, keepdims=True)
            p = jnp.exp(s)
            p = p * pl.reciprocal(jnp.sum(p, axis=-1, keepdims=True), approx=True)
            ctx_parts.append(mm(p, v))                     # (TOT, HEAD_DIM) f32
        # fold the output projection into ONE K=WIDTH matmul over concatenated heads
        ctx_all = jnp.concatenate(ctx_parts, axis=-1).astype(bf16)   # (TOT, WIDTH)
        x = x + mm(ctx_all, w_out_ref[l]) + b_out_ref[l]

        # -------- MLP: c_fc -> QuickGELU -> c_proj (pre-LN residual) --------
        h_ln = ln(x, ln2_g_ref[l], ln2_b_ref[l])
        h1 = mm(h_ln, w_fc_ref[l]) + b_fc_ref[l]           # (TOT, MLP_DIM) f32
        h1 = h1 * jax.nn.sigmoid(1.702 * h1)               # QuickGELU (CLIP), f32
        x = x + mm(h1, w_cproj_ref[l]) + b_cproj_ref[l]

    # ---- epilogue (fused): cls tokens -> ln_post -> final projection ----
    cls_rows = jnp.concatenate(
        [x[b * SEQ_PAD + NUM_PATCHES:b * SEQ_PAD + NUM_PATCHES + 1, :]
         for b in range(num_images)], axis=0)              # (B, WIDTH), aligned row picks
    cls_rows = ln(cls_rows, lnpost_g_ref[...], lnpost_b_ref[...])
    out_ref[...] = mm(cls_rows, w_proj_ref[...])           # (B, OUT_DIM) f32


# ----------------------------- parameters -----------------------------------
def init_params(key):
    """Deterministic synthetic parameters; shapes follow CLIP VisionTransformer (PyTorch layout)."""
    ks = list(jax.random.split(key, 8 + LAYERS * 12))
    nk = iter(ks)
    s = 0.02

    def rnd(shape):
        return s * jax.random.normal(next(nk), shape, dtype=jnp.float32)

    params = {
        "conv1_w": rnd((WIDTH, C_IN, PATCH, PATCH)),   # conv1: (width, C, P, P), no bias
        "class_embedding": rnd((WIDTH,)),
        "pos_embedding": rnd((SEQ, WIDTH)),
        "ln_pre_g": jnp.ones((WIDTH,), jnp.float32),
        "ln_pre_b": jnp.zeros((WIDTH,), jnp.float32),
        "ln_post_g": jnp.ones((WIDTH,), jnp.float32),
        "ln_post_b": jnp.zeros((WIDTH,), jnp.float32),
        "proj": rnd((WIDTH, OUT_DIM)),
        "blocks": [],
    }
    for _ in range(LAYERS):
        blk = {
            "ln1_g": jnp.ones((WIDTH,), jnp.float32),
            "ln1_b": jnp.zeros((WIDTH,), jnp.float32),
            "in_proj_w": rnd((3 * WIDTH, WIDTH)),      # nn.MultiheadAttention in_proj
            "in_proj_b": rnd((3 * WIDTH,)),
            "out_proj_w": rnd((WIDTH, WIDTH)),         # (out, in) like torch Linear
            "out_proj_b": rnd((WIDTH,)),
            "ln2_g": jnp.ones((WIDTH,), jnp.float32),
            "ln2_b": jnp.zeros((WIDTH,), jnp.float32),
            "fc_w": rnd((MLP_DIM, WIDTH)),             # c_fc   (out, in)
            "fc_b": rnd((MLP_DIM,)),
            "proj_w": rnd((WIDTH, MLP_DIM)),           # c_proj (out, in)
            "proj_b": rnd((WIDTH,)),
        }
        params["blocks"].append(blk)
    return params


def prepare_params(params):
    """One-time prep: pre-transpose, pre-cast (bf16 matmul weights), stack per-layer
    weights, fold the attention scale into q, and build the per-image pos block."""
    bf16 = jnp.bfloat16
    f32 = jnp.float32
    blocks = params["blocks"]

    pos = params["pos_embedding"].astype(f32)                      # (SEQ, W)
    cls_row = (params["class_embedding"] + pos[0]).reshape(1, WIDTH)
    # per-image token order: [16 patch tokens | cls token | pad]
    pos_block = jnp.concatenate(
        [pos[1:], cls_row, jnp.zeros((SEQ_PAD - SEQ, WIDTH), f32)], axis=0)  # (SEQ_PAD, W)

    # fold 1/sqrt(head_dim) into the q columns of the in-projection
    qkv_scale = jnp.concatenate(
        [jnp.full((WIDTH,), ATTN_SCALE, f32), jnp.ones((2 * WIDTH,), f32)])

    return {
        "pos_block": pos_block,
        "w_patch": params["conv1_w"].reshape(WIDTH, CPP).T.astype(bf16),     # (CPP, W)
        "ln_pre_g": params["ln_pre_g"].reshape(1, WIDTH),
        "ln_pre_b": params["ln_pre_b"].reshape(1, WIDTH),
        "ln1_g": jnp.stack([b["ln1_g"].reshape(1, WIDTH) for b in blocks]),
        "ln1_b": jnp.stack([b["ln1_b"].reshape(1, WIDTH) for b in blocks]),
        "w_qkv": jnp.stack([b["in_proj_w"].T * qkv_scale[None, :]
                            for b in blocks]).astype(bf16),                   # (L, W, 3W)
        "b_qkv": jnp.stack([(b["in_proj_b"] * qkv_scale).reshape(1, 3 * WIDTH)
                            for b in blocks]),
        "w_out": jnp.stack([b["out_proj_w"].T for b in blocks]).astype(bf16),  # (L, W, W)
        "b_out": jnp.stack([b["out_proj_b"].reshape(1, WIDTH) for b in blocks]),
        "ln2_g": jnp.stack([b["ln2_g"].reshape(1, WIDTH) for b in blocks]),
        "ln2_b": jnp.stack([b["ln2_b"].reshape(1, WIDTH) for b in blocks]),
        "w_fc": jnp.stack([b["fc_w"].T for b in blocks]).astype(bf16),         # (L, W, 4W)
        "b_fc": jnp.stack([b["fc_b"].reshape(1, MLP_DIM) for b in blocks]),
        "w_cproj": jnp.stack([b["proj_w"].T for b in blocks]).astype(bf16),    # (L, 4W, W)
        "b_cproj": jnp.stack([b["proj_b"].reshape(1, WIDTH) for b in blocks]),
        "ln_post_g": params["ln_post_g"].reshape(1, WIDTH),
        "ln_post_b": params["ln_post_b"].reshape(1, WIDTH),
        "w_proj": params["proj"].astype(bf16),                                 # (W, OUT_DIM)
    }


# ----------------------------- forward --------------------------------------
@jax.jit
def clip_image_encoder_forward(x, prep):
    """x: (B, C, H, W) float32 (NCHW, like PyTorch) -> (B, OUT_DIM) float32."""
    b, c, h, w = x.shape
    gh, gw = h // PATCH, w // PATCH
    n_patches = gh * gw
    tot = b * SEQ_PAD

    # Patch extraction (pure layout glue); NO padded HBM materialization — only the
    # real (B*16, CPP) patch rows are DMA'd, the kernel assembles the token slab.
    patches = (
        x.reshape(b, c, gh, PATCH, gw, PATCH)
        .transpose(0, 2, 4, 1, 3, 5)
        .reshape(b * n_patches, c * PATCH * PATCH)
    ).astype(jnp.float32)

    # per-token positional (+cls) rows, tiled over the batch folded into M
    pos_tot = jnp.tile(prep["pos_block"], (b, 1))                    # (tot, W)

    # additive attention bias: 0 iff key is a valid token of the SAME image
    tok = jnp.arange(tot)
    same_img = (tok[:, None] // SEQ_PAD) == (tok[None, :] // SEQ_PAD)
    valid_key = (tok % SEQ_PAD) < SEQ
    attn_bias = jnp.where(same_img & valid_key[None, :], 0.0, -1e30).astype(jnp.float32)

    ordered = [prep[k] for k in PARAM_ORDER]
    args = [patches, pos_tot, attn_bias] + ordered
    in_specs = [pl.BlockSpec(a.shape, lambda i, _n=a.ndim: (0,) * _n) for a in args]

    kernel = functools.partial(_clip_encoder_kernel, num_images=b)
    out = pl.pallas_call(
        kernel,
        out_shape=jax.ShapeDtypeStruct((b, OUT_DIM), jnp.float32),
        grid=(1,),                                     # batch folded into sublanes -> 1 step
        in_specs=in_specs,
        out_specs=pl.BlockSpec((b, OUT_DIM), lambda i: (0, 0)),
        compiler_params=pltpu.CompilerParams(
            dimension_semantics=("arbitrary",)),
    )(*args)
    return out


# TODO(synk): GetPreprocess / MakeUncondTensor are CPU-side preprocessing helpers
# (albumentations / cv2 / torch.zeros) with no kernel equivalent; not translated.


if __name__ == "__main__":
    key = jax.random.PRNGKey(0)
    pkey, xkey = jax.random.split(key)
    params = init_params(pkey)
    prep = prepare_params(params)
    x = jax.random.normal(xkey, (B, C_IN, IMG, IMG), dtype=jnp.float32)

    out = clip_image_encoder_forward(x, prep)
    out = jax.block_until_ready(out)

    assert out.shape == (B, OUT_DIM), out.shape
    assert bool(jnp.all(jnp.isfinite(out)))
    print("KERNEL_OK")
</pallas_src>

<mosaic_0001>
module attributes {stable_mosaic.version = 11 : i64} {
  func.func @_clip_encoder_kernel(%arg0: i32, %arg1: memref<32x192xf32, #tpu.memory_space<vmem>>, %arg2: memref<48x64xf32, #tpu.memory_space<vmem>>, %arg3: memref<48x48xf32, #tpu.memory_space<vmem>>, %arg4: memref<192x64xbf16, #tpu.memory_space<vmem>>, %arg5: memref<1x64xf32, #tpu.memory_space<vmem>>, %arg6: memref<1x64xf32, #tpu.memory_space<vmem>>, %arg7: memref<2x1x64xf32, #tpu.memory_space<vmem>>, %arg8: memref<2x1x64xf32, #tpu.memory_space<vmem>>, %arg9: memref<2x64x192xbf16, #tpu.memory_space<vmem>>, %arg10: memref<2x1x192xf32, #tpu.memory_space<vmem>>, %arg11: memref<2x64x64xbf16, #tpu.memory_space<vmem>>, %arg12: memref<2x1x64xf32, #tpu.memory_space<vmem>>, %arg13: memref<2x1x64xf32, #tpu.memory_space<vmem>>, %arg14: memref<2x1x64xf32, #tpu.memory_space<vmem>>, %arg15: memref<2x64x256xbf16, #tpu.memory_space<vmem>>, %arg16: memref<2x1x256xf32, #tpu.memory_space<vmem>>, %arg17: memref<2x256x64xbf16, #tpu.memory_space<vmem>>, %arg18: memref<2x1x64xf32, #tpu.memory_space<vmem>>, %arg19: memref<1x64xf32, #tpu.memory_space<vmem>>, %arg20: memref<1x64xf32, #tpu.memory_space<vmem>>, %arg21: memref<64x32xbf16, #tpu.memory_space<vmem>>, %arg22: memref<2x32xf32, #tpu.memory_space<vmem>>) attributes {dimension_semantics = [#tpu.dimension_semantics<arbitrary>], iteration_bounds = array<i64: 1>, scalar_prefetch = 0 : i64, scratch_operands = 0 : i64, tpu.core_type = #tpu.core_type<tc>, window_params = [{pipeline_mode = #tpu.pipeline_mode<synchronous>, transform_indices = @transform_0, window_bounds = array<i64: 32, 192>}, {pipeline_mode = #tpu.pipeline_mode<synchronous>, transform_indices = @transform_1, window_bounds = array<i64: 48, 64>}, {pipeline_mode = #tpu.pipeline_mode<synchronous>, transform_indices = @transform_2, window_bounds = array<i64: 48, 48>}, {pipeline_mode = #tpu.pipeline_mode<synchronous>, transform_indices = @transform_3, window_bounds = array<i64: 192, 64>}, {pipeline_mode = #tpu.pipeline_mode<synchronous>, transform_indices = @transform_4, window_bounds = array<i64: 1, 64>}, {pipeline_mode = #tpu.pipeline_mode<synchronous>, transform_indices = @transform_5, window_bounds = array<i64: 1, 64>}, {pipeline_mode = #tpu.pipeline_mode<synchronous>, transform_indices = @transform_6, window_bounds = array<i64: 2, 1, 64>}, {pipeline_mode = #tpu.pipeline_mode<synchronous>, transform_indices = @transform_7, window_bounds = array<i64: 2, 1, 64>}, {pipeline_mode = #tpu.pipeline_mode<synchronous>, transform_indices = @transform_8, window_bounds = array<i64: 2, 64, 192>}, {pipeline_mode = #tpu.pipeline_mode<synchronous>, transform_indices = @transform_9, window_bounds = array<i64: 2, 1, 192>}, {pipeline_mode = #tpu.pipeline_mode<synchronous>, transform_indices = @transform_10, window_bounds = array<i64: 2, 64, 64>}, {pipeline_mode = #tpu.pipeline_mode<synchronous>, transform_indices = @transform_11, window_bounds = array<i64: 2, 1, 64>}, {pipeline_mode = #tpu.pipeline_mode<synchronous>, transform_indices = @transform_12, window_bounds = array<i64: 2, 1, 64>}, {pipeline_mode = #tpu.pipeline_mode<synchronous>, transform_indices = @transform_13, window_bounds = array<i64: 2, 1, 64>}, {pipeline_mode = #tpu.pipeline_mode<synchronous>, transform_indices = @transform_14, window_bounds = array<i64: 2, 64, 256>}, {pipeline_mode = #tpu.pipeline_mode<synchronous>, transform_indices = @transform_15, window_bounds = array<i64: 2, 1, 256>}, {pipeline_mode = #tpu.pipeline_mode<synchronous>, transform_indices = @transform_16, window_bounds = array<i64: 2, 256, 64>}, {pipeline_mode = #tpu.pipeline_mode<synchronous>, transform_indices = @transform_17, window_bounds = array<i64: 2, 1, 64>}, {pipeline_mode = #tpu.pipeline_mode<synchronous>, transform_indices = @transform_18, window_bounds = array<i64: 1, 64>}, {pipeline_mode = #tpu.pipeline_mode<synchronous>, transform_indices = @transform_19, window_bounds = array<i64: 1, 64>}, {pipeline_mode = #tpu.pipeline_mode<synchronous>, transform_indices = @transform_20, window_bounds = array<i64: 64, 32>}, {pipeline_mode = #tpu.pipeline_mode<synchronous>, transform_indices = @transform_21, window_bounds = array<i64: 2, 32>}]} {
    %c0 = arith.constant 0 : index
    %c0_0 = arith.constant 0 : index
    %0 = vector.load %arg1[%c0, %c0_0] : memref<32x192xf32, #tpu.memory_space<vmem>>, vector<32x192xf32>
    %c0_1 = arith.constant 0 : index
    %c0_2 = arith.constant 0 : index
    %1 = vector.load %arg4[%c0_1, %c0_2] : memref<192x64xbf16, #tpu.memory_space<vmem>>, vector<192x64xbf16>
    %2 = arith.truncf %0 : vector<32x192xf32> to vector<32x192xbf16>
    %cst = arith.constant dense<0.000000e+00> : vector<32x64xf32>
    %3 = tpu.matmul %2, %1, %cst {dimension_numbers = #tpu.dot_dimension_numbers<[1], [0], [0], [1], [0, 0, 1, 1], [], []>} : vector<32x192xbf16>, vector<192x64xbf16>, vector<32x64xf32> -> vector<32x64xf32>
    %cst_3 = arith.constant 0.000000e+00 : f32
    %4 = vector.broadcast %cst_3 : f32 to vector<8x64xf32>
    %5 = vector.extract_strided_slice %3 {offsets = [0, 0], sizes = [16, 64], strides = [1, 1]} : vector<32x64xf32> to vector<16x64xf32>
    %6 = vector.extract_strided_slice %3 {offsets = [16, 0], sizes = [16, 64], strides = [1, 1]} : vector<32x64xf32> to vector<16x64xf32>
    %7 = tpu.concatenate %5, %4, %6, %4 in 0 : vector<16x64xf32>, vector<8x64xf32>, vector<16x64xf32>, vector<8x64xf32> -> vector<48x64xf32>
    %c0_4 = arith.constant 0 : index
    %c0_5 = arith.constant 0 : index
    %8 = vector.load %arg2[%c0_4, %c0_5] : memref<48x64xf32, #tpu.memory_space<vmem>>, vector<48x64xf32>
    %9 = arith.addf %7, %8 : vector<48x64xf32>
    %c0_6 = arith.constant 0 : index
    %c0_7 = arith.constant 0 : index
    %10 = vector.load %arg5[%c0_6, %c0_7] : memref<1x64xf32, #tpu.memory_space<vmem>>, vector<1x64xf32>
    %c0_8 = arith.constant 0 : index
    %c0_9 = arith.constant 0 : index
    %11 = vector.load %arg6[%c0_8, %c0_9] : memref<1x64xf32, #tpu.memory_space<vmem>>, vector<1x64xf32>
    %cst_10 = arith.constant dense<0.000000e+00> : vector<48xf32>
    %12 = vector.multi_reduction <add>, %9, %cst_10 [1] : vector<48x64xf32> to vector<48xf32>
    %13 = vector.shape_cast %12 : vector<48xf32> to vector<48x1xf32>
    %cst_11 = arith.constant 6.400000e+01 : f32
    %14 = vector.broadcast %cst_11 : f32 to vector<48x1xf32>
    %15 = arith.divf %13, %14 : vector<48x1xf32>
    %16 = vector.broadcast %15 : vector<48x1xf32> to vector<48x64xf32>
    %17 = arith.subf %9, %16 : vector<48x64xf32>
    %18 = arith.mulf %17, %17 : vector<48x64xf32>
    %cst_12 = arith.constant dense<0.000000e+00> : vector<48xf32>
    %19 = vector.multi_reduction <add>, %18, %cst_12 [1] : vector<48x64xf32> to vector<48xf32>
    %20 = vector.shape_cast %19 : vector<48xf32> to vector<48x1xf32>
    %cst_13 = arith.constant 6.400000e+01 : f32
    %21 = vector.broadcast %cst_13 : f32 to vector<48x1xf32>
    %22 = arith.divf %20, %21 : vector<48x1xf32>
    %cst_14 = arith.constant 9.99999974E-6 : f32
    %23 = vector.broadcast %cst_14 : f32 to vector<48x1xf32>
    %24 = arith.addf %22, %23 : vector<48x1xf32>
    %25 = math.rsqrt %24 : vector<48x1xf32>
    %26 = vector.broadcast %25 : vector<48x1xf32> to vector<48x64xf32>
    %27 = arith.mulf %17, %26 : vector<48x64xf32>
    %28 = vector.broadcast %10 : vector<1x64xf32> to vector<48x64xf32>
    %29 = arith.mulf %27, %28 : vector<48x64xf32>
    %30 = vector.broadcast %11 : vector<1x64xf32> to vector<48x64xf32>
    %31 = arith.addf %29, %30 : vector<48x64xf32>
    %c0_15 = arith.constant 0 : index
    %c0_16 = arith.constant 0 : index
    %32 = vector.load %arg3[%c0_15, %c0_16] : memref<48x48xf32, #tpu.memory_space<vmem>>, vector<48x48xf32>
    %c0_17 = arith.constant 0 : index
    %c0_18 = arith.constant 0 : index
    %c0_19 = arith.constant 0 : index
    %33 = vector.load %arg7[%c0_17, %c0_18, %c0_19] : memref<2x1x64xf32, #tpu.memory_space<vmem>>, vector<1x1x64xf32>
    %34 = vector.shape_cast %33 : vector<1x1x64xf32> to vector<1x64xf32>
    %c0_20 = arith.constant 0 : index
    %c0_21 = arith.constant 0 : index
    %c0_22 = arith.constant 0 : index
    %35 = vector.load %arg8[%c0_20, %c0_21, %c0_22] : memref<2x1x64xf32, #tpu.memory_space<vmem>>, vector<1x1x64xf32>
    %36 = vector.shape_cast %35 : vector<1x1x64xf32> to vector<1x64xf32>
    %cst_23 = arith.constant dense<0.000000e+00> : vector<48xf32>
    %37 = vector.multi_reduction <add>, %31, %cst_23 [1] : vector<48x64xf32> to vector<48xf32>
    %38 = vector.shape_cast %37 : vector<48xf32> to vector<48x1xf32>
    %cst_24 = arith.constant 6.400000e+01 : f32
    %39 = vector.broadcast %cst_24 : f32 to vector<48x1xf32>
    %40 = arith.divf %38, %39 : vector<48x1xf32>
    %41 = vector.broadcast %40 : vector<48x1xf32> to vector<48x64xf32>
    %42 = arith.subf %31, %41 : vector<48x64xf32>
    %43 = arith.mulf %42, %42 : vector<48x64xf32>
    %cst_25 = arith.constant dense<0.000000e+00> : vector<48xf32>
    %44 = vector.multi_reduction <add>, %43, %cst_25 [1] : vector<48x64xf32> to vector<48xf32>
    %45 = vector.shape_cast %44 : vector<48xf32> to vector<48x1xf32>
    %cst_26 = arith.constant 6.400000e+01 : f32
    %46 = vector.broadcast %cst_26 : f32 to vector<48x1xf32>
    %47 = arith.divf %45, %46 : vector<48x1xf32>
    %cst_27 = arith.constant 9.99999974E-6 : f32
    %48 = vector.broadcast %cst_27 : f32 to vector<48x1xf32>
    %49 = arith.addf %47, %48 : vector<48x1xf32>
    %50 = math.rsqrt %49 : vector<48x1xf32>
    %51 = vector.broadcast %50 : vector<48x1xf32> to vector<48x64xf32>
    %52 = arith.mulf %42, %51 : vector<48x64xf32>
    %53 = vector.broadcast %34 : vector<1x64xf32> to vector<48x64xf32>
    %54 = arith.mulf %52, %53 : vector<48x64xf32>
    %55 = vector.broadcast %36 : vector<1x64xf32> to vector<48x64xf32>
    %56 = arith.addf %54, %55 : vector<48x64xf32>
    %c0_28 = arith.constant 0 : index
    %c0_29 = arith.constant 0 : index
    %c0_30 = arith.constant 0 : index
    %57 = vector.load %arg9[%c0_28, %c0_29, %c0_30] : memref<2x64x192xbf16, #tpu.memory_space<vmem>>, vector<1x64x192xbf16>
    %58 = vector.shape_cast %57 : vector<1x64x192xbf16> to vector<64x192xbf16>
    %59 = arith.truncf %56 : vector<48x64xf32> to vector<48x64xbf16>
    %cst_31 = arith.constant dense<0.000000e+00> : vector<48x192xf32>
    %60 = tpu.matmul %59, %58, %cst_31 {dimension_numbers = #tpu.dot_dimension_numbers<[1], [0], [0], [1], [0, 0, 1, 1], [], []>} : vector<48x64xbf16>, vector<64x192xbf16>, vector<48x192xf32> -> vector<48x192xf32>
    %c0_32 = arith.constant 0 : index
    %c0_33 = arith.constant 0 : index
    %c0_34 = arith.constant 0 : index
    %61 = vector.load %arg10[%c0_32, %c0_33, %c0_34] : memref<2x1x192xf32, #tpu.memory_space<vmem>>, vector<1x1x192xf32>
    %62 = vector.shape_cast %61 : vector<1x1x192xf32> to vector<1x192xf32>
    %63 = vector.broadcast %62 : vector<1x192xf32> to vector<48x192xf32>
    %64 = arith.addf %60, %63 : vector<48x192xf32>
    %65 = arith.truncf %64 : vector<48x192xf32> to vector<48x192xbf16>
    %66 = vector.extract_strided_slice %65 {offsets = [0, 0], sizes = [48, 16], strides = [1, 1]} : vector<48x192xbf16> to vector<48x16xbf16>
    %67 = vector.extract_strided_slice %65 {offsets = [0, 64], sizes = [48, 16], strides = [1, 1]} : vector<48x192xbf16> to vector<48x16xbf16>
    %68 = vector.extract_strided_slice %65 {offsets = [0, 128], sizes = [48, 16], strides = [1, 1]} : vector<48x192xbf16> to vector<48x16xbf16>
    %cst_35 = arith.constant dense<0.000000e+00> : vector<48x48xf32>
    %69 = tpu.matmul %66, %67, %cst_35 {dimension_numbers = #tpu.dot_dimension_numbers<[1], [1], [0], [0], [0, 0, 1, 0], [], []>} : vector<48x16xbf16>, vector<48x16xbf16>, vector<48x48xf32> -> vector<48x48xf32>
    %70 = arith.addf %69, %32 : vector<48x48xf32>
    %cst_36 = arith.constant dense<0xFF800000> : vector<48xf32>
    %71 = vector.multi_reduction <maximumf>, %70, %cst_36 [1] : vector<48x48xf32> to vector<48xf32>
    %72 = vector.shape_cast %71 : vector<48xf32> to vector<48x1xf32>
    %73 = vector.broadcast %72 : vector<48x1xf32> to vector<48x48xf32>
    %74 = arith.subf %70, %73 : vector<48x48xf32>
    %75 = math.exp %74 : vector<48x48xf32>
    %cst_37 = arith.constant dense<0.000000e+00> : vector<48xf32>
    %76 = vector.multi_reduction <add>, %75, %cst_37 [1] : vector<48x48xf32> to vector<48xf32>
    %77 = vector.shape_cast %76 : vector<48xf32> to vector<48x1xf32>
    %78 = tpu.reciprocal %77 {approx = true} : vector<48x1xf32> -> vector<48x1xf32>
    %79 = vector.broadcast %78 : vector<48x1xf32> to vector<48x48xf32>
    %80 = arith.mulf %75, %79 : vector<48x48xf32>
    %81 = arith.truncf %80 : vector<48x48xf32> to vector<48x48xbf16>
    %cst_38 = arith.constant dense<0.000000e+00> : vector<48x16xf32>
    %82 = tpu.matmul %81, %68, %cst_38 {dimension_numbers = #tpu.dot_dimension_numbers<[1], [0], [0], [1], [0, 0, 1, 1], [], []>} : vector<48x48xbf16>, vector<48x16xbf16>, vector<48x16xf32> -> vector<48x16xf32>
    %83 = vector.extract_strided_slice %65 {offsets = [0, 16], sizes = [48, 16], strides = [1, 1]} : vector<48x192xbf16> to vector<48x16xbf16>
    %84 = vector.extract_strided_slice %65 {offsets = [0, 80], sizes = [48, 16], strides = [1, 1]} : vector<48x192xbf16> to vector<48x16xbf16>
    %85 = vector.extract_strided_slice %65 {offsets = [0, 144], sizes = [48, 16], strides = [1, 1]} : vector<48x192xbf16> to vector<48x16xbf16>
    %cst_39 = arith.constant dense<0.000000e+00> : vector<48x48xf32>
    %86 = tpu.matmul %83, %84, %cst_39 {dimension_numbers = #tpu.dot_dimension_numbers<[1], [1], [0], [0], [0, 0, 1, 0], [], []>} : vector<48x16xbf16>, vector<48x16xbf16>, vector<48x48xf32> -> vector<48x48xf32>
    %87 = arith.addf %86, %32 : vector<48x48xf32>
    %cst_40 = arith.constant dense<0xFF800000> : vector<48xf32>
    %88 = vector.multi_reduction <maximumf>, %87, %cst_40 [1] : vector<48x48xf32> to vector<48xf32>
    %89 = vector.shape_cast %88 : vector<48xf32> to vector<48x1xf32>
    %90 = vector.broadcast %89 : vector<48x1xf32> to vector<48x48xf32>
    %91 = arith.subf %87, %90 : vector<48x48xf32>
    %92 = math.exp %91 : vector<48x48xf32>
    %cst_41 = arith.constant dense<0.000000e+00> : vector<48xf32>
    %93 = vector.multi_reduction <add>, %92, %cst_41 [1] : vector<48x48xf32> to vector<48xf32>
    %94 = vector.shape_cast %93 : vector<48xf32> to vector<48x1xf32>
    %95 = tpu.reciprocal %94 {approx = true} : vector<48x1xf32> -> vector<48x1xf32>
    %96 = vector.broadcast %95 : vector<48x1xf32> to vector<48x48xf32>
    %97 = arith.mulf %92, %96 : vector<48x48xf32>
    %98 = arith.truncf %97 : vector<48x48xf32> to vector<48x48xbf16>
    %cst_42 = arith.constant dense<0.000000e+00> : vector<48x16xf32>
    %99 = tpu.matmul %98, %85, %cst_42 {dimension_numbers = #tpu.dot_dimension_numbers<[1], [0], [0], [1], [0, 0, 1, 1], [], []>} : vector<48x48xbf16>, vector<48x16xbf16>, vector<48x16xf32> -> vector<48x16xf32>
    %100 = vector.extract_strided_slice %65 {offsets = [0, 32], sizes = [48, 16], strides = [1, 1]} : vector<48x192xbf16> to vector<48x16xbf16>
    %101 = vector.extract_strided_slice %65 {offsets = [0, 96], sizes = [48, 16], strides = [1, 1]} : vector<48x192xbf16> to vector<48x16xbf16>
    %102 = vector.extract_strided_slice %65 {offsets = [0, 160], sizes = [48, 16], strides = [1, 1]} : vector<48x192xbf16> to vector<48x16xbf16>
    %cst_43 = arith.constant dense<0.000000e+00> : vector<48x48xf32>
    %103 = tpu.matmul %100, %101, %cst_43 {dimension_numbers = #tpu.dot_dimension_numbers<[1], [1], [0], [0], [0, 0, 1, 0], [], []>} : vector<48x16xbf16>, vector<48x16xbf16>, vector<48x48xf32> -> vector<48x48xf32>
    %104 = arith.addf %103, %32 : vector<48x48xf32>
    %cst_44 = arith.constant dense<0xFF800000> : vector<48xf32>
    %105 = vector.multi_reduction <maximumf>, %104, %cst_44 [1] : vector<48x48xf32> to vector<48xf32>
    %106 = vector.shape_cast %105 : vector<48xf32> to vector<48x1xf32>
    %107 = vector.broadcast %106 : vector<48x1xf32> to vector<48x48xf32>
    %108 = arith.subf %104, %107 : vector<48x48xf32>
    %109 = math.exp %108 : vector<48x48xf32>
    %cst_45 = arith.constant dense<0.000000e+00> : vector<48xf32>
    %110 = vector.multi_reduction <add>, %109, %cst_45 [1] : vector<48x48xf32> to vector<48xf32>
    %111 = vector.shape_cast %110 : vector<48xf32> to vector<48x1xf32>
    %112 = tpu.reciprocal %111 {approx = true} : vector<48x1xf32> -> vector<48x1xf32>
    %113 = vector.broadcast %112 : vector<48x1xf32> to vector<48x48xf32>
    %114 = arith.mulf %109, %113 : vector<48x48xf32>
    %115 = arith.truncf %114 : vector<48x48xf32> to vector<48x48xbf16>
    %cst_46 = arith.constant dense<0.000000e+00> : vector<48x16xf32>
    %116 = tpu.matmul %115, %102, %cst_46 {dimension_numbers = #tpu.dot_dimension_numbers<[1], [0], [0], [1], [0, 0, 1, 1], [], []>} : vector<48x48xbf16>, vector<48x16xbf16>, vector<48x16xf32> -> vector<48x16xf32>
    %117 = vector.extract_strided_slice %65 {offsets = [0, 48], sizes = [48, 16], strides = [1, 1]} : vector<48x192xbf16> to vector<48x16xbf16>
    %118 = vector.extract_strided_slice %65 {offsets = [0, 112], sizes = [48, 16], strides = [1, 1]} : vector<48x192xbf16> to vector<48x16xbf16>
    %119 = vector.extract_strided_slice %65 {offsets = [0, 176], sizes = [48, 16], strides = [1, 1]} : vector<48x192xbf16> to vector<48x16xbf16>
    %cst_47 = arith.constant dense<0.000000e+00> : vector<48x48xf32>
    %120 = tpu.matmul %117, %118, %cst_47 {dimension_numbers = #tpu.dot_dimension_numbers<[1], [1], [0], [0], [0, 0, 1, 0], [], []>} : vector<48x16xbf16>, vector<48x16xbf16>, vector<48x48xf32> -> vector<48x48xf32>
    %121 = arith.addf %120, %32 : vector<48x48xf32>
    %cst_48 = arith.constant dense<0xFF800000> : vector<48xf32>
    %122 = vector.multi_reduction <maximumf>, %121, %cst_48 [1] : vector<48x48xf32> to vector<48xf32>
    %123 = vector.shape_cast %122 : vector<48xf32> to vector<48x1xf32>
    %124 = vector.broadcast %123 : vector<48x1xf32> to vector<48x48xf32>
    %125 = arith.subf %121, %124 : vector<48x48xf32>
    %126 = math.exp %125 : vector<48x48xf32>
    %cst_49 = arith.constant dense<0.000000e+00> : vector<48xf32>
    %127 = vector.multi_reduction <add>, %126, %cst_49 [1] : vector<48x48xf32> to vector<48xf32>
    %128 = vector.shape_cast %127 : vector<48xf32> to vector<48x1xf32>
    %129 = tpu.reciprocal %128 {approx = true} : vector<48x1xf32> -> vector<48x1xf32>
    %130 = vector.broadcast %129 : vector<48x1xf32> to vector<48x48xf32>
    %131 = arith.mulf %126, %130 : vector<48x48xf32>
    %132 = arith.truncf %131 : vector<48x48xf32> to vector<48x48xbf16>
    %cst_50 = arith.constant dense<0.000000e+00> : vector<48x16xf32>
    %133 = tpu.matmul %132, %119, %cst_50 {dimension_numbers = #tpu.dot_dimension_numbers<[1], [0], [0], [1], [0, 0, 1, 1], [], []>} : vector<48x48xbf16>, vector<48x16xbf16>, vector<48x16xf32> -> vector<48x16xf32>
    %134 = tpu.concatenate %82, %99, %116, %133 in 1 : vector<48x16xf32>, vector<48x16xf32>, vector<48x16xf32>, vector<48x16xf32> -> vector<48x64xf32>
    %135 = arith.truncf %134 : vector<48x64xf32> to vector<48x64xbf16>
    %c0_51 = arith.constant 0 : index
    %c0_52 = arith.constant 0 : index
    %c0_53 = arith.constant 0 : index
    %136 = vector.load %arg11[%c0_51, %c0_52, %c0_53] : memref<2x64x64xbf16, #tpu.memory_space<vmem>>, vector<1x64x64xbf16>
    %137 = vector.shape_cast %136 : vector<1x64x64xbf16> to vector<64x64xbf16>
    %cst_54 = arith.constant dense<0.000000e+00> : vector<48x64xf32>
    %138 = tpu.matmul %135, %137, %cst_54 {dimension_numbers = #tpu.dot_dimension_numbers<[1], [0], [0], [1], [0, 0, 1, 1], [], []>} : vector<48x64xbf16>, vector<64x64xbf16>, vector<48x64xf32> -> vector<48x64xf32>
    %139 = arith.addf %31, %138 : vector<48x64xf32>
    %c0_55 = arith.constant 0 : index
    %c0_56 = arith.constant 0 : index
    %c0_57 = arith.constant 0 : index
    %140 = vector.load %arg12[%c0_55, %c0_56, %c0_57] : memref<2x1x64xf32, #tpu.memory_space<vmem>>, vector<1x1x64xf32>
    %141 = vector.shape_cast %140 : vector<1x1x64xf32> to vector<1x64xf32>
    %142 = vector.broadcast %141 : vector<1x64xf32> to vector<48x64xf32>
    %143 = arith.addf %139, %142 : vector<48x64xf32>
    %c0_58 = arith.constant 0 : index
    %c0_59 = arith.constant 0 : index
    %c0_60 = arith.constant 0 : index
    %144 = vector.load %arg13[%c0_58, %c0_59, %c0_60] : memref<2x1x64xf32, #tpu.memory_space<vmem>>, vector<1x1x64xf32>
    %145 = vector.shape_cast %144 : vector<1x1x64xf32> to vector<1x64xf32>
    %c0_61 = arith.constant 0 : index
    %c0_62 = arith.constant 0 : index
    %c0_63 = arith.constant 0 : index
    %146 = vector.load %arg14[%c0_61, %c0_62, %c0_63] : memref<2x1x64xf32, #tpu.memory_space<vmem>>, vector<1x1x64xf32>
    %147 = vector.shape_cast %146 : vector<1x1x64xf32> to vector<1x64xf32>
    %cst_64 = arith.constant dense<0.000000e+00> : vector<48xf32>
    %148 = vector.multi_reduction <add>, %143, %cst_64 [1] : vector<48x64xf32> to vector<48xf32>
    %149 = vector.shape_cast %148 : vector<48xf32> to vector<48x1xf32>
    %cst_65 = arith.constant 6.400000e+01 : f32
    %150 = vector.broadcast %cst_65 : f32 to vector<48x1xf32>
    %151 = arith.divf %149, %150 : vector<48x1xf32>
    %152 = vector.broadcast %151 : vector<48x1xf32> to vector<48x64xf32>
    %153 = arith.subf %143, %152 : vector<48x64xf32>
    %154 = arith.mulf %153, %153 : vector<48x64xf32>
    %cst_66 = arith.constant dense<0.000000e+00> : vector<48xf32>
    %155 = vector.multi_reduction <add>, %154, %cst_66 [1] : vector<48x64xf32> to vector<48xf32>
    %156 = vector.shape_cast %155 : vector<48xf32> to vector<48x1xf32>
    %cst_67 = arith.constant 6.400000e+01 : f32
    %157 = vector.broadcast %cst_67 : f32 to vector<48x1xf32>
    %158 = arith.divf %156, %157 : vector<48x1xf32>
    %cst_68 = arith.constant 9.99999974E-6 : f32
    %159 = vector.broadcast %cst_68 : f32 to vector<48x1xf32>
    %160 = arith.addf %158, %159 : vector<48x1xf32>
    %161 = math.rsqrt %160 : vector<48x1xf32>
    %162 = vector.broadcast %161 : vector<48x1xf32> to vector<48x64xf32>
    %163 = arith.mulf %153, %162 : vector<48x64xf32>
    %164 = vector.broadcast %145 : vector<1x64xf32> to vector<48x64xf32>
    %165 = arith.mulf %163, %164 : vector<48x64xf32>
    %166 = vector.broadcast %147 : vector<1x64xf32> to vector<48x64xf32>
    %167 = arith.addf %165, %166 : vector<48x64xf32>
    %c0_69 = arith.constant 0 : index
    %c0_70 = arith.constant 0 : index
    %c0_71 = arith.constant 0 : index
    %168 = vector.load %arg15[%c0_69, %c0_70, %c0_71] : memref<2x64x256xbf16, #tpu.memory_space<vmem>>, vector<1x64x256xbf16>
    %169 = vector.shape_cast %168 : vector<1x64x256xbf16> to vector<64x256xbf16>
    %170 = arith.truncf %167 : vector<48x64xf32> to vector<48x64xbf16>
    %cst_72 = arith.constant dense<0.000000e+00> : vector<48x256xf32>
    %171 = tpu.matmul %170, %169, %cst_72 {dimension_numbers = #tpu.dot_dimension_numbers<[1], [0], [0], [1], [0, 0, 1, 1], [], []>} : vector<48x64xbf16>, vector<64x256xbf16>, vector<48x256xf32> -> vector<48x256xf32>
    %c0_73 = arith.constant 0 : index
    %c0_74 = arith.constant 0 : index
    %c0_75 = arith.constant 0 : index
    %172 = vector.load %arg16[%c0_73, %c0_74, %c0_75] : memref<2x1x256xf32, #tpu.memory_space<vmem>>, vector<1x1x256xf32>
    %173 = vector.shape_cast %172 : vector<1x1x256xf32> to vector<1x256xf32>
    %174 = vector.broadcast %173 : vector<1x256xf32> to vector<48x256xf32>
    %175 = arith.addf %171, %174 : vector<48x256xf32>
    %cst_76 = arith.constant 1.702000e+00 : f32
    %176 = vector.broadcast %cst_76 : f32 to vector<48x256xf32>
    %177 = arith.mulf %176, %175 : vector<48x256xf32>
    %178 = arith.negf %177 : vector<48x256xf32>
    %179 = math.exp %178 : vector<48x256xf32>
    %cst_77 = arith.constant 1.000000e+00 : f32
    %180 = vector.broadcast %cst_77 : f32 to vector<48x256xf32>
    %181 = arith.addf %180, %179 : vector<48x256xf32>
    %182 = arith.divf %180, %181 : vector<48x256xf32>
    %183 = arith.mulf %175, %182 : vector<48x256xf32>
    %c0_78 = arith.constant 0 : index
    %c0_79 = arith.constant 0 : index
    %c0_80 = arith.constant 0 : index
    %184 = vector.load %arg17[%c0_78, %c0_79, %c0_80] : memref<2x256x64xbf16, #tpu.memory_space<vmem>>, vector<1x256x64xbf16>
    %185 = vector.shape_cast %184 : vector<1x256x64xbf16> to vector<256x64xbf16>
    %186 = arith.truncf %183 : vector<48x256xf32> to vector<48x256xbf16>
    %cst_81 = arith.constant dense<0.000000e+00> : vector<48x64xf32>
    %187 = tpu.matmul %186, %185, %cst_81 {dimension_numbers = #tpu.dot_dimension_numbers<[1], [0], [0], [1], [0, 0, 1, 1], [], []>} : vector<48x256xbf16>, vector<256x64xbf16>, vector<48x64xf32> -> vector<48x64xf32>
    %188 = arith.addf %143, %187 : vector<48x64xf32>
    %c0_82 = arith.constant 0 : index
    %c0_83 = arith.constant 0 : index
    %c0_84 = arith.constant 0 : index
    %189 = vector.load %arg18[%c0_82, %c0_83, %c0_84] : memref<2x1x64xf32, #tpu.memory_space<vmem>>, vector<1x1x64xf32>
    %190 = vector.shape_cast %189 : vector<1x1x64xf32> to vector<1x64xf32>
    %191 = vector.broadcast %190 : vector<1x64xf32> to vector<48x64xf32>
    %192 = arith.addf %188, %191 : vector<48x64xf32>
    %c1 = arith.constant 1 : index
    %c0_85 = arith.constant 0 : index
    %c0_86 = arith.constant 0 : index
    %193 = vector.load %arg7[%c1, %c0_85, %c0_86] : memref<2x1x64xf32, #tpu.memory_space<vmem>>, vector<1x1x64xf32>
    %194 = vector.shape_cast %193 : vector<1x1x64xf32> to vector<1x64xf32>
    %c1_87 = arith.constant 1 : index
    %c0_88 = arith.constant 0 : index
    %c0_89 = arith.constant 0 : index
    %195 = vector.load %arg8[%c1_87, %c0_88, %c0_89] : memref<2x1x64xf32, #tpu.memory_space<vmem>>, vector<1x1x64xf32>
    %196 = vector.shape_cast %195 : vector<1x1x64xf32> to vector<1x64xf32>
    %cst_90 = arith.constant dense<0.000000e+00> : vector<48xf32>
    %197 = vector.multi_reduction <add>, %192, %cst_90 [1] : vector<48x64xf32> to vector<48xf32>
    %198 = vector.shape_cast %197 : vector<48xf32> to vector<48x1xf32>
    %cst_91 = arith.constant 6.400000e+01 : f32
    %199 = vector.broadcast %cst_91 : f32 to vector<48x1xf32>
    %200 = arith.divf %198, %199 : vector<48x1xf32>
    %201 = vector.broadcast %200 : vector<48x1xf32> to vector<48x64xf32>
    %202 = arith.subf %192, %201 : vector<48x64xf32>
    %203 = arith.mulf %202, %202 : vector<48x64xf32>
    %cst_92 = arith.constant dense<0.000000e+00> : vector<48xf32>
    %204 = vector.multi_reduction <add>, %203, %cst_92 [1] : vector<48x64xf32> to vector<48xf32>
    %205 = vector.shape_cast %204 : vector<48xf32> to vector<48x1xf32>
    %cst_93 = arith.constant 6.400000e+01 : f32
    %206 = vector.broadcast %cst_93 : f32 to vector<48x1xf32>
    %207 = arith.divf %205, %206 : vector<48x1xf32>
    %cst_94 = arith.constant 9.99999974E-6 : f32
    %208 = vector.broadcast %cst_94 : f32 to vector<48x1xf32>
    %209 = arith.addf %207, %208 : vector<48x1xf32>
    %210 = math.rsqrt %209 : vector<48x1xf32>
    %211 = vector.broadcast %210 : vector<48x1xf32> to vector<48x64xf32>
    %212 = arith.mulf %202, %211 : vector<48x64xf32>
    %213 = vector.broadcast %194 : vector<1x64xf32> to vector<48x64xf32>
    %214 = arith.mulf %212, %213 : vector<48x64xf32>
    %215 = vector.broadcast %196 : vector<1x64xf32> to vector<48x64xf32>
    %216 = arith.addf %214, %215 : vector<48x64xf32>
    %c1_95 = arith.constant 1 : index
    %c0_96 = arith.constant 0 : index
    %c0_97 = arith.constant 0 : index
    %217 = vector.load %arg9[%c1_95, %c0_96, %c0_97] : memref<2x64x192xbf16, #tpu.memory_space<vmem>>, vector<1x64x192xbf16>
    %218 = vector.shape_cast %217 : vector<1x64x192xbf16> to vector<64x192xbf16>
    %219 = arith.truncf %216 : vector<48x64xf32> to vector<48x64xbf16>
    %cst_98 = arith.constant dense<0.000000e+00> : vector<48x192xf32>
    %220 = tpu.matmul %219, %218, %cst_98 {dimension_numbers = #tpu.dot_dimension_numbers<[1], [0], [0], [1], [0, 0, 1, 1], [], []>} : vector<48x64xbf16>, vector<64x192xbf16>, vector<48x192xf32> -> vector<48x192xf32>
    %c1_99 = arith.constant 1 : index
    %c0_100 = arith.constant 0 : index
    %c0_101 = arith.constant 0 : index
    %221 = vector.load %arg10[%c1_99, %c0_100, %c0_101] : memref<2x1x192xf32, #tpu.memory_space<vmem>>, vector<1x1x192xf32>
    %222 = vector.shape_cast %221 : vector<1x1x192xf32> to vector<1x192xf32>
    %223 = vector.broadcast %222 : vector<1x192xf32> to vector<48x192xf32>
    %224 = arith.addf %220, %223 : vector<48x192xf32>
    %225 = arith.truncf %224 : vector<48x192xf32> to vector<48x192xbf16>
    %226 = vector.extract_strided_slice %225 {offsets = [0, 0], sizes = [48, 16], strides = [1, 1]} : vector<48x192xbf16> to vector<48x16xbf16>
    %227 = vector.extract_strided_slice %225 {offsets = [0, 64], sizes = [48, 16], strides = [1, 1]} : vector<48x192xbf16> to vector<48x16xbf16>
    %228 = vector.extract_strided_slice %225 {offsets = [0, 128], sizes = [48, 16], strides = [1, 1]} : vector<48x192xbf16> to vector<48x16xbf16>
    %cst_102 = arith.constant dense<0.000000e+00> : vector<48x48xf32>
    %229 = tpu.matmul %226, %227, %cst_102 {dimension_numbers = #tpu.dot_dimension_numbers<[1], [1], [0], [0], [0, 0, 1, 0], [], []>} : vector<48x16xbf16>, vector<48x16xbf16>, vector<48x48xf32> -> vector<48x48xf32>
    %230 = arith.addf %229, %32 : vector<48x48xf32>
    %cst_103 = arith.constant dense<0xFF800000> : vector<48xf32>
    %231 = vector.multi_reduction <maximumf>, %230, %cst_103 [1] : vector<48x48xf32> to vector<48xf32>
    %232 = vector.shape_cast %231 : vector<48xf32> to vector<48x1xf32>
    %233 = vector.broadcast %232 : vector<48x1xf32> to vector<48x48xf32>
    %234 = arith.subf %230, %233 : vector<48x48xf32>
    %235 = math.exp %234 : vector<48x48xf32>
    %cst_104 = arith.constant dense<0.000000e+00> : vector<48xf32>
    %236 = vector.multi_reduction <add>, %235, %cst_104 [1] : vector<48x48xf32> to vector<48xf32>
    %237 = vector.shape_cast %236 : vector<48xf32> to vector<48x1xf32>
    %238 = tpu.reciprocal %237 {approx = true} : vector<48x1xf32> -> vector<48x1xf32>
    %239 = vector.broadcast %238 : vector<48x1xf32> to vector<48x48xf32>
    %240 = arith.mulf %235, %239 : vector<48x48xf32>
    %241 = arith.truncf %240 : vector<48x48xf32> to vector<48x48xbf16>
    %cst_105 = arith.constant dense<0.000000e+00> : vector<48x16xf32>
    %242 = tpu.matmul %241, %228, %cst_105 {dimension_numbers = #tpu.dot_dimension_numbers<[1], [0], [0], [1], [0, 0, 1, 1], [], []>} : vector<48x48xbf16>, vector<48x16xbf16>, vector<48x16xf32> -> vector<48x16xf32>
    %243 = vector.extract_strided_slice %225 {offsets = [0, 16], sizes = [48, 16], strides = [1, 1]} : vector<48x192xbf16> to vector<48x16xbf16>
    %244 = vector.extract_strided_slice %225 {offsets = [0, 80], sizes = [48, 16], strides = [1, 1]} : vector<48x192xbf16> to vector<48x16xbf16>
    %245 = vector.extract_strided_slice %225 {offsets = [0, 144], sizes = [48, 16], strides = [1, 1]} : vector<48x192xbf16> to vector<48x16xbf16>
    %cst_106 = arith.constant dense<0.000000e+00> : vector<48x48xf32>
    %246 = tpu.matmul %243, %244, %cst_106 {dimension_numbers = #tpu.dot_dimension_numbers<[1], [1], [0], [0], [0, 0, 1, 0], [], []>} : vector<48x16xbf16>, vector<48x16xbf16>, vector<48x48xf32> -> vector<48x48xf32>
    %247 = arith.addf %246, %32 : vector<48x48xf32>
    %cst_107 = arith.constant dense<0xFF800000> : vector<48xf32>
    %248 = vector.multi_reduction <maximumf>, %247, %cst_107 [1] : vector<48x48xf32> to vector<48xf32>
    %249 = vector.shape_cast %248 : vector<48xf32> to vector<48x1xf32>
    %250 = vector.broadcast %249 : vector<48x1xf32> to vector<48x48xf32>
    %251 = arith.subf %247, %250 : vector<48x48xf32>
    %252 = math.exp %251 : vector<48x48xf32>
    %cst_108 = arith.constant dense<0.000000e+00> : vector<48xf32>
    %253 = vector.multi_reduction <add>, %252, %cst_108 [1] : vector<48x48xf32> to vector<48xf32>
    %254 = vector.shape_cast %253 : vector<48xf32> to vector<48x1xf32>
    %255 = tpu.reciprocal %254 {approx = true} : vector<48x1xf32> -> vector<48x1xf32>
    %256 = vector.broadcast %255 : vector<48x1xf32> to vector<48x48xf32>
    %257 = arith.mulf %252, %256 : vector<48x48xf32>
    %258 = arith.truncf %257 : vector<48x48xf32> to vector<48x48xbf16>
    %cst_109 = arith.constant dense<0.000000e+00> : vector<48x16xf32>
    %259 = tpu.matmul %258, %245, %cst_109 {dimension_numbers = #tpu.dot_dimension_numbers<[1], [0], [0], [1], [0, 0, 1, 1], [], []>} : vector<48x48xbf16>, vector<48x16xbf16>, vector<48x16xf32> -> vector<48x16xf32>
    %260 = vector.extract_strided_slice %225 {offsets = [0, 32], sizes = [48, 16], strides = [1, 1]} : vector<48x192xbf16> to vector<48x16xbf16>
    %261 = vector.extract_strided_slice %225 {offsets = [0, 96], sizes = [48, 16], strides = [1, 1]} : vector<48x192xbf16> to vector<48x16xbf16>
    %262 = vector.extract_strided_slice %225 {offsets = [0, 160], sizes = [48, 16], strides = [1, 1]} : vector<48x192xbf16> to vector<48x16xbf16>
    %cst_110 = arith.constant dense<0.000000e+00> : vector<48x48xf32>
    %263 = tpu.matmul %260, %261, %cst_110 {dimension_numbers = #tpu.dot_dimension_numbers<[1], [1], [0], [0], [0, 0, 1, 0], [], []>} : vector<48x16xbf16>, vector<48x16xbf16>, vector<48x48xf32> -> vector<48x48xf32>
    %264 = arith.addf %263, %32 : vector<48x48xf32>
    %cst_111 = arith.constant dense<0xFF800000> : vector<48xf32>
    %265 = vector.multi_reduction <maximumf>, %264, %cst_111 [1] : vector<48x48xf32> to vector<48xf32>
    %266 = vector.shape_cast %265 : vector<48xf32> to vector<48x1xf32>
    %267 = vector.broadcast %266 : vector<48x1xf32> to vector<48x48xf32>
    %268 = arith.subf %264, %267 : vector<48x48xf32>
    %269 = math.exp %268 : vector<48x48xf32>
    %cst_112 = arith.constant dense<0.000000e+00> : vector<48xf32>
    %270 = vector.multi_reduction <add>, %269, %cst_112 [1] : vector<48x48xf32> to vector<48xf32>
    %271 = vector.shape_cast %270 : vector<48xf32> to vector<48x1xf32>
    %272 = tpu.reciprocal %271 {approx = true} : vector<48x1xf32> -> vector<48x1xf32>
    %273 = vector.broadcast %272 : vector<48x1xf32> to vector<48x48xf32>
    %274 = arith.mulf %269, %273 : vector<48x48xf32>
    %275 = arith.truncf %274 : vector<48x48xf32> to vector<48x48xbf16>
    %cst_113 = arith.constant dense<0.000000e+00> : vector<48x16xf32>
    %276 = tpu.matmul %275, %262, %cst_113 {dimension_numbers = #tpu.dot_dimension_numbers<[1], [0], [0], [1], [0, 0, 1, 1], [], []>} : vector<48x48xbf16>, vector<48x16xbf16>, vector<48x16xf32> -> vector<48x16xf32>
    %277 = vector.extract_strided_slice %225 {offsets = [0, 48], sizes = [48, 16], strides = [1, 1]} : vector<48x192xbf16> to vector<48x16xbf16>
    %278 = vector.extract_strided_slice %225 {offsets = [0, 112], sizes = [48, 16], strides = [1, 1]} : vector<48x192xbf16> to vector<48x16xbf16>
    %279 = vector.extract_strided_slice %225 {offsets = [0, 176], sizes = [48, 16], strides = [1, 1]} : vector<48x192xbf16> to vector<48x16xbf16>
    %cst_114 = arith.constant dense<0.000000e+00> : vector<48x48xf32>
    %280 = tpu.matmul %277, %278, %cst_114 {dimension_numbers = #tpu.dot_dimension_numbers<[1], [1], [0], [0], [0, 0, 1, 0], [], []>} : vector<48x16xbf16>, vector<48x16xbf16>, vector<48x48xf32> -> vector<48x48xf32>
    %281 = arith.addf %280, %32 : vector<48x48xf32>
    %cst_115 = arith.constant dense<0xFF800000> : vector<48xf32>
    %282 = vector.multi_reduction <maximumf>, %281, %cst_115 [1] : vector<48x48xf32> to vector<48xf32>
    %283 = vector.shape_cast %282 : vector<48xf32> to vector<48x1xf32>
    %284 = vector.broadcast %283 : vector<48x1xf32> to vector<48x48xf32>
    %285 = arith.subf %281, %284 : vector<48x48xf32>
    %286 = math.exp %285 : vector<48x48xf32>
    %cst_116 = arith.constant dense<0.000000e+00> : vector<48xf32>
    %287 = vector.multi_reduction <add>, %286, %cst_116 [1] : vector<48x48xf32> to vector<48xf32>
    %288 = vector.shape_cast %287 : vector<48xf32> to vector<48x1xf32>
    %289 = tpu.reciprocal %288 {approx = true} : vector<48x1xf32> -> vector<48x1xf32>
    %290 = vector.broadcast %289 : vector<48x1xf32> to vector<48x48xf32>
    %291 = arith.mulf %286, %290 : vector<48x48xf32>
    %292 = arith.truncf %291 : vector<48x48xf32> to vector<48x48xbf16>
    %cst_117 = arith.constant dense<0.000000e+00> : vector<48x16xf32>
    %293 = tpu.matmul %292, %279, %cst_117 {dimension_numbers = #tpu.dot_dimension_numbers<[1], [0], [0], [1], [0, 0, 1, 1], [], []>} : vector<48x48xbf16>, vector<48x16xbf16>, vector<48x16xf32> -> vector<48x16xf32>
    %294 = tpu.concatenate %242, %259, %276, %293 in 1 : vector<48x16xf32>, vector<48x16xf32>, vector<48x16xf32>, vector<48x16xf32> -> vector<48x64xf32>
    %295 = arith.truncf %294 : vector<48x64xf32> to vector<48x64xbf16>
    %c1_118 = arith.constant 1 : index
    %c0_119 = arith.constant 0 : index
    %c0_120 = arith.constant 0 : index
    %296 = vector.load %arg11[%c1_118, %c0_119, %c0_120] : memref<2x64x64xbf16, #tpu.memory_space<vmem>>, vector<1x64x64xbf16>
    %297 = vector.shape_cast %296 : vector<1x64x64xbf16> to vector<64x64xbf16>
    %cst_121 = arith.constant dense<0.000000e+00> : vector<48x64xf32>
    %298 = tpu.matmul %295, %297, %cst_121 {dimension_numbers = #tpu.dot_dimension_numbers<[1], [0], [0], [1], [0, 0, 1, 1], [], []>} : vector<48x64xbf16>, vector<64x64xbf16>, vector<48x64xf32> -> vector<48x64xf32>
    %299 = arith.addf %192, %298 : vector<48x64xf32>
    %c1_122 = arith.constant 1 : index
    %c0_123 = arith.constant 0 : index
    %c0_124 = arith.constant 0 : index
    %300 = vector.load %arg12[%c1_122, %c0_123, %c0_124] : memref<2x1x64xf32, #tpu.memory_space<vmem>>, vector<1x1x64xf32>
    %301 = vector.shape_cast %300 : vector<1x1x64xf32> to vector<1x64xf32>
    %302 = vector.broadcast %301 : vector<1x64xf32> to vector<48x64xf32>
    %303 = arith.addf %299, %302 : vector<48x64xf32>
    %c1_125 = arith.constant 1 : index
    %c0_126 = arith.constant 0 : index
    %c0_127 = arith.constant 0 : index
    %304 = vector.load %arg13[%c1_125, %c0_126, %c0_127] : memref<2x1x64xf32, #tpu.memory_space<vmem>>, vector<1x1x64xf32>
    %305 = vector.shape_cast %304 : vector<1x1x64xf32> to vector<1x64xf32>
    %c1_128 = arith.constant 1 : index
    %c0_129 = arith.constant 0 : index
    %c0_130 = arith.constant 0 : index
    %306 = vector.load %arg14[%c1_128, %c0_129, %c0_130] : memref<2x1x64xf32, #tpu.memory_space<vmem>>, vector<1x1x64xf32>
    %307 = vector.shape_cast %306 : vector<1x1x64xf32> to vector<1x64xf32>
    %cst_131 = arith.constant dense<0.000000e+00> : vector<48xf32>
    %308 = vector.multi_reduction <add>, %303, %cst_131 [1] : vector<48x64xf32> to vector<48xf32>
    %309 = vector.shape_cast %308 : vector<48xf32> to vector<48x1xf32>
    %cst_132 = arith.constant 6.400000e+01 : f32
    %310 = vector.broadcast %cst_132 : f32 to vector<48x1xf32>
    %311 = arith.divf %309, %310 : vector<48x1xf32>
    %312 = vector.broadcast %311 : vector<48x1xf32> to vector<48x64xf32>
    %313 = arith.subf %303, %312 : vector<48x64xf32>
    %314 = arith.mulf %313, %313 : vector<48x64xf32>
    %cst_133 = arith.constant dense<0.000000e+00> : vector<48xf32>
    %315 = vector.multi_reduction <add>, %314, %cst_133 [1] : vector<48x64xf32> to vector<48xf32>
    %316 = vector.shape_cast %315 : vector<48xf32> to vector<48x1xf32>
    %cst_134 = arith.constant 6.400000e+01 : f32
    %317 = vector.broadcast %cst_134 : f32 to vector<48x1xf32>
    %318 = arith.divf %316, %317 : vector<48x1xf32>
    %cst_135 = arith.constant 9.99999974E-6 : f32
    %319 = vector.broadcast %cst_135 : f32 to vector<48x1xf32>
    %320 = arith.addf %318, %319 : vector<48x1xf32>
    %321 = math.rsqrt %320 : vector<48x1xf32>
    %322 = vector.broadcast %321 : vector<48x1xf32> to vector<48x64xf32>
    %323 = arith.mulf %313, %322 : vector<48x64xf32>
    %324 = vector.broadcast %305 : vector<1x64xf32> to vector<48x64xf32>
    %325 = arith.mulf %323, %324 : vector<48x64xf32>
    %326 = vector.broadcast %307 : vector<1x64xf32> to vector<48x64xf32>
    %327 = arith.addf %325, %326 : vector<48x64xf32>
    %c1_136 = arith.constant 1 : index
    %c0_137 = arith.constant 0 : index
    %c0_138 = arith.constant 0 : index
    %328 = vector.load %arg15[%c1_136, %c0_137, %c0_138] : memref<2x64x256xbf16, #tpu.memory_space<vmem>>, vector<1x64x256xbf16>
    %329 = vector.shape_cast %328 : vector<1x64x256xbf16> to vector<64x256xbf16>
    %330 = arith.truncf %327 : vector<48x64xf32> to vector<48x64xbf16>
    %cst_139 = arith.constant dense<0.000000e+00> : vector<48x256xf32>
    %331 = tpu.matmul %330, %329, %cst_139 {dimension_numbers = #tpu.dot_dimension_numbers<[1], [0], [0], [1], [0, 0, 1, 1], [], []>} : vector<48x64xbf16>, vector<64x256xbf16>, vector<48x256xf32> -> vector<48x256xf32>
    %c1_140 = arith.constant 1 : index
    %c0_141 = arith.constant 0 : index
    %c0_142 = arith.constant 0 : index
    %332 = vector.load %arg16[%c1_140, %c0_141, %c0_142] : memref<2x1x256xf32, #tpu.memory_space<vmem>>, vector<1x1x256xf32>
    %333 = vector.shape_cast %332 : vector<1x1x256xf32> to vector<1x256xf32>
    %334 = vector.broadcast %333 : vector<1x256xf32> to vector<48x256xf32>
    %335 = arith.addf %331, %334 : vector<48x256xf32>
    %cst_143 = arith.constant 1.702000e+00 : f32
    %336 = vector.broadcast %cst_143 : f32 to vector<48x256xf32>
    %337 = arith.mulf %336, %335 : vector<48x256xf32>
    %338 = arith.negf %337 : vector<48x256xf32>
    %339 = math.exp %338 : vector<48x256xf32>
    %cst_144 = arith.constant 1.000000e+00 : f32
    %340 = vector.broadcast %cst_144 : f32 to vector<48x256xf32>
    %341 = arith.addf %340, %339 : vector<48x256xf32>
    %342 = arith.divf %340, %341 : vector<48x256xf32>
    %343 = arith.mulf %335, %342 : vector<48x256xf32>
    %c1_145 = arith.constant 1 : index
    %c0_146 = arith.constant 0 : index
    %c0_147 = arith.constant 0 : index
    %344 = vector.load %arg17[%c1_145, %c0_146, %c0_147] : memref<2x256x64xbf16, #tpu.memory_space<vmem>>, vector<1x256x64xbf16>
    %345 = vector.shape_cast %344 : vector<1x256x64xbf16> to vector<256x64xbf16>
    %346 = arith.truncf %343 : vector<48x256xf32> to vector<48x256xbf16>
    %cst_148 = arith.constant dense<0.000000e+00> : vector<48x64xf32>
    %347 = tpu.matmul %346, %345, %cst_148 {dimension_numbers = #tpu.dot_dimension_numbers<[1], [0], [0], [1], [0, 0, 1, 1], [], []>} : vector<48x256xbf16>, vector<256x64xbf16>, vector<48x64xf32> -> vector<48x64xf32>
    %348 = arith.addf %303, %347 : vector<48x64xf32>
    %c1_149 = arith.constant 1 : index
    %c0_150 = arith.constant 0 : index
    %c0_151 = arith.constant 0 : index
    %349 = vector.load %arg18[%c1_149, %c0_150, %c0_151] : memref<2x1x64xf32, #tpu.memory_space<vmem>>, vector<1x1x64xf32>
    %350 = vector.shape_cast %349 : vector<1x1x64xf32> to vector<1x64xf32>
    %351 = vector.broadcast %350 : vector<1x64xf32> to vector<48x64xf32>
    %352 = arith.addf %348, %351 : vector<48x64xf32>
    %353 = vector.extract_strided_slice %352 {offsets = [16, 0], sizes = [1, 64], strides = [1, 1]} : vector<48x64xf32> to vector<1x64xf32>
    %354 = vector.extract_strided_slice %352 {offsets = [40, 0], sizes = [1, 64], strides = [1, 1]} : vector<48x64xf32> to vector<1x64xf32>
    %355 = tpu.concatenate %353, %354 in 0 : vector<1x64xf32>, vector<1x64xf32> -> vector<2x64xf32>
    %c0_152 = arith.constant 0 : index
    %c0_153 = arith.constant 0 : index
    %356 = vector.load %arg19[%c0_152, %c0_153] : memref<1x64xf32, #tpu.memory_space<vmem>>, vector<1x64xf32>
    %c0_154 = arith.constant 0 : index
    %c0_155 = arith.constant 0 : index
    %357 = vector.load %arg20[%c0_154, %c0_155] : memref<1x64xf32, #tpu.memory_space<vmem>>, vector<1x64xf32>
    %cst_156 = arith.constant dense<0.000000e+00> : vector<2xf32>
    %358 = vector.multi_reduction <add>, %355, %cst_156 [1] : vector<2x64xf32> to vector<2xf32>
    %359 = vector.shape_cast %358 : vector<2xf32> to vector<2x1xf32>
    %cst_157 = arith.constant 6.400000e+01 : f32
    %360 = vector.broadcast %cst_157 : f32 to vector<2x1xf32>
    %361 = arith.divf %359, %360 : vector<2x1xf32>
    %362 = vector.broadcast %361 : vector<2x1xf32> to vector<2x64xf32>
    %363 = arith.subf %355, %362 : vector<2x64xf32>
    %364 = arith.mulf %363, %363 : vector<2x64xf32>
    %cst_158 = arith.constant dense<0.000000e+00> : vector<2xf32>
    %365 = vector.multi_reduction <add>, %364, %cst_158 [1] : vector<2x64xf32> to vector<2xf32>
    %366 = vector.shape_cast %365 : vector<2xf32> to vector<2x1xf32>
    %cst_159 = arith.constant 6.400000e+01 : f32
    %367 = vector.broadcast %cst_159 : f32 to vector<2x1xf32>
    %368 = arith.divf %366, %367 : vector<2x1xf32>
    %cst_160 = arith.constant 9.99999974E-6 : f32
    %369 = vector.broadcast %cst_160 : f32 to vector<2x1xf32>
    %370 = arith.addf %368, %369 : vector<2x1xf32>
    %371 = math.rsqrt %370 : vector<2x1xf32>
    %372 = vector.broadcast %371 : vector<2x1xf32> to vector<2x64xf32>
    %373 = arith.mulf %363, %372 : vector<2x64xf32>
    %374 = vector.broadcast %356 : vector<1x64xf32> to vector<2x64xf32>
    %375 = arith.mulf %373, %374 : vector<2x64xf32>
    %376 = vector.broadcast %357 : vector<1x64xf32> to vector<2x64xf32>
    %377 = arith.addf %375, %376 : vector<2x64xf32>
    %c0_161 = arith.constant 0 : index
    %c0_162 = arith.constant 0 : index
    %378 = vector.load %arg21[%c0_161, %c0_162] : memref<64x32xbf16, #tpu.memory_space<vmem>>, vector<64x32xbf16>
    %379 = arith.truncf %377 : vector<2x64xf32> to vector<2x64xbf16>
    %cst_163 = arith.constant dense<0.000000e+00> : vector<2x32xf32>
    %380 = tpu.matmul %379, %378, %cst_163 {dimension_numbers = #tpu.dot_dimension_numbers<[1], [0], [0], [1], [0, 0, 1, 1], [], []>} : vector<2x64xbf16>, vector<64x32xbf16>, vector<2x32xf32> -> vector<2x32xf32>
    %c0_164 = arith.constant 0 : index
    %c0_165 = arith.constant 0 : index
    %381 = vector.load %arg22[%c0_164, %c0_165] : memref<2x32xf32, #tpu.memory_space<vmem>>, vector<2x32xf32>
    tpu.vector_store %arg22[%c0_164, %c0_165], %380 {strides = array<i32>} : memref<2x32xf32, #tpu.memory_space<vmem>>, vector<2x32xf32>,
    return
  }
  func.func @transform_0(%arg0: i32) -> (i32, i32) {
    %c0_i32 = arith.constant 0 : i32
    %c0_i32_0 = arith.constant 0 : i32
    %c0_i32_1 = arith.constant 0 : i32
    return %c0_i32, %c0_i32_0 : i32, i32
  }
  func.func @transform_1(%arg0: i32) -> (i32, i32) {
    %c0_i32 = arith.constant 0 : i32
    %c0_i32_0 = arith.constant 0 : i32
    %c0_i32_1 = arith.constant 0 : i32
    return %c0_i32, %c0_i32_0 : i32, i32
  }
  func.func @transform_2(%arg0: i32) -> (i32, i32) {
    %c0_i32 = arith.constant 0 : i32
    %c0_i32_0 = arith.constant 0 : i32
    %c0_i32_1 = arith.constant 0 : i32
    return %c0_i32, %c0_i32_0 : i32, i32
  }
  func.func @transform_3(%arg0: i32) -> (i32, i32) {
    %c0_i32 = arith.constant 0 : i32
    %c0_i32_0 = arith.constant 0 : i32
    %c0_i32_1 = arith.constant 0 : i32
    return %c0_i32, %c0_i32_0 : i32, i32
  }
  func.func @transform_4(%arg0: i32) -> (i32, i32) {
    %c0_i32 = arith.constant 0 : i32
    %c0_i32_0 = arith.constant 0 : i32
    %c0_i32_1 = arith.constant 0 : i32
    return %c0_i32, %c0_i32_0 : i32, i32
  }
  func.func @transform_5(%arg0: i32) -> (i32, i32) {
    %c0_i32 = arith.constant 0 : i32
    %c0_i32_0 = arith.constant 0 : i32
    %c0_i32_1 = arith.constant 0 : i32
    return %c0_i32, %c0_i32_0 : i32, i32
  }
  func.func @transform_6(%arg0: i32) -> (i32, i32, i32) {
    %c0_i32 = arith.constant 0 : i32
    %c0_i32_0 = arith.constant 0 : i32
    %c0_i32_1 = arith.constant 0 : i32
    %c0_i32_2 = arith.constant 0 : i32
    return %c0_i32, %c0_i32_0, %c0_i32_1 : i32, i32, i32
  }
  func.func @transform_7(%arg0: i32) -> (i32, i32, i32) {
    %c0_i32 = arith.constant 0 : i32
    %c0_i32_0 = arith.constant 0 : i32
    %c0_i32_1 = arith.constant 0 : i32
    %c0_i32_2 = arith.constant 0 : i32
    return %c0_i32, %c0_i32_0, %c0_i32_1 : i32, i32, i32
  }
  func.func @transform_8(%arg0: i32) -> (i32, i32, i32) {
    %c0_i32 = arith.constant 0 : i32
    %c0_i32_0 = arith.constant 0 : i32
    %c0_i32_1 = arith.constant 0 : i32
    %c0_i32_2 = arith.constant 0 : i32
    return %c0_i32, %c0_i32_0, %c0_i32_1 : i32, i32, i32
  }
  func.func @transform_9(%arg0: i32) -> (i32, i32, i32) {
    %c0_i32 = arith.constant 0 : i32
    %c0_i32_0 = arith.constant 0 : i32
    %c0_i32_1 = arith.constant 0 : i32
    %c0_i32_2 = arith.constant 0 : i32
    return %c0_i32, %c0_i32_0, %c0_i32_1 : i32, i32, i32
  }
  func.func @transform_10(%arg0: i32) -> (i32, i32, i32) {
    %c0_i32 = arith.constant 0 : i32
    %c0_i32_0 = arith.constant 0 : i32
    %c0_i32_1 = arith.constant 0 : i32
    %c0_i32_2 = arith.constant 0 : i32
    return %c0_i32, %c0_i32_0, %c0_i32_1 : i32, i32, i32
  }
  func.func @transform_11(%arg0: i32) -> (i32, i32, i32) {
    %c0_i32 = arith.constant 0 : i32
    %c0_i32_0 = arith.constant 0 : i32
    %c0_i32_1 = arith.constant 0 : i32
    %c0_i32_2 = arith.constant 0 : i32
    return %c0_i32, %c0_i32_0, %c0_i32_1 : i32, i32, i32
  }
  func.func @transform_12(%arg0: i32) -> (i32, i32, i32) {
    %c0_i32 = arith.constant 0 : i32
    %c0_i32_0 = arith.constant 0 : i32
    %c0_i32_1 = arith.constant 0 : i32
    %c0_i32_2 = arith.constant 0 : i32
    return %c0_i32, %c0_i32_0, %c0_i32_1 : i32, i32, i32
  }
  func.func @transform_13(%arg0: i32) -> (i32, i32, i32) {
    %c0_i32 = arith.constant 0 : i32
    %c0_i32_0 = arith.constant 0 : i32
    %c0_i32_1 = arith.constant 0 : i32
    %c0_i32_2 = arith.constant 0 : i32
    return %c0_i32, %c0_i32_0, %c0_i32_1 : i32, i32, i32
  }
  func.func @transform_14(%arg0: i32) -> (i32, i32, i32) {
    %c0_i32 = arith.constant 0 : i32
    %c0_i32_0 = arith.constant 0 : i32
    %c0_i32_1 = arith.constant 0 : i32
    %c0_i32_2 = arith.constant 0 : i32
    return %c0_i32, %c0_i32_0, %c0_i32_1 : i32, i32, i32
  }
  func.func @transform_15(%arg0: i32) -> (i32, i32, i32) {
    %c0_i32 = arith.constant 0 : i32
    %c0_i32_0 = arith.constant 0 : i32
    %c0_i32_1 = arith.constant 0 : i32
    %c0_i32_2 = arith.constant 0 : i32
    return %c0_i32, %c0_i32_0, %c0_i32_1 : i32, i32, i32
  }
  func.func @transform_16(%arg0: i32) -> (i32, i32, i32) {
    %c0_i32 = arith.constant 0 : i32
    %c0_i32_0 = arith.constant 0 : i32
    %c0_i32_1 = arith.constant 0 : i32
    %c0_i32_2 = arith.constant 0 : i32
    return %c0_i32, %c0_i32_0, %c0_i32_1 : i32, i32, i32
  }
  func.func @transform_17(%arg0: i32) -> (i32, i32, i32) {
    %c0_i32 = arith.constant 0 : i32
    %c0_i32_0 = arith.constant 0 : i32
    %c0_i32_1 = arith.constant 0 : i32
    %c0_i32_2 = arith.constant 0 : i32
    return %c0_i32, %c0_i32_0, %c0_i32_1 : i32, i32, i32
  }
  func.func @transform_18(%arg0: i32) -> (i32, i32) {
    %c0_i32 = arith.constant 0 : i32
    %c0_i32_0 = arith.constant 0 : i32
    %c0_i32_1 = arith.constant 0 : i32
    return %c0_i32, %c0_i32_0 : i32, i32
  }
  func.func @transform_19(%arg0: i32) -> (i32, i32) {
    %c0_i32 = arith.constant 0 : i32
    %c0_i32_0 = arith.constant 0 : i32
    %c0_i32_1 = arith.constant 0 : i32
    return %c0_i32, %c0_i32_0 : i32, i32
  }
  func.func @transform_20(%arg0: i32) -> (i32, i32) {
    %c0_i32 = arith.constant 0 : i32
    %c0_i32_0 = arith.constant 0 : i32
    %c0_i32_1 = arith.constant 0 : i32
    return %c0_i32, %c0_i32_0 : i32, i32
  }
  func.func @transform_21(%arg0: i32) -> (i32, i32) {
    %c0_i32 = arith.constant 0 : i32
    %c0_i32_0 = arith.constant 0 : i32
    %c0_i32_1 = arith.constant 0 : i32
    return %c0_i32, %c0_i32_0 : i32, i32
  }
}

</mosaic_0001>

<llo_original>
// kernel: clip_image_encoder_forward.1
$region0: #{clip_image_encoder_forward.1}
  #allocation0 [shape = 'u32[]', space=smem, size = 0x4, offset = 0x4, fixed_abs, tag = 'smem constant byte address 0x4 - core index']
  #allocation1 [shape = 'u32[144,128]{1,0:T(1,128)}', space=vmem, size = 0x12000, scoped, tag = 'internal scratch']
  %s0 = inlined_call_operand.vmem [shape: f32[32,192], index: 0, kind: input, shape index: {}]
  %s1 = inlined_call_operand.vmem [shape: f32[48,64], index: 1, kind: input, shape index: {}]
  %s2 = inlined_call_operand.vmem [shape: f32[48,48], index: 2, kind: input, shape index: {}]
  %s3 = inlined_call_operand.vmem [shape: bf16[192,64], index: 3, kind: input, shape index: {}]
  %s4 = inlined_call_operand.vmem [shape: f32[1,64], index: 4, kind: input, shape index: {}]
  %s5 = inlined_call_operand.vmem [shape: f32[1,64], index: 5, kind: input, shape index: {}]
  %s6 = inlined_call_operand.vmem [shape: f32[2,1,64], index: 6, kind: input, shape index: {}]
  %s7 = inlined_call_operand.vmem [shape: f32[2,1,64], index: 7, kind: input, shape index: {}]
  %s8 = inlined_call_operand.vmem [shape: bf16[2,64,192], index: 8, kind: input, shape index: {}]
  %s9 = inlined_call_operand.vmem [shape: f32[2,1,192], index: 9, kind: input, shape index: {}]
  %s10 = inlined_call_operand.vmem [shape: bf16[2,64,64], index: 10, kind: input, shape index: {}]
  %s11 = inlined_call_operand.vmem [shape: f32[2,1,64], index: 11, kind: input, shape index: {}]
  %s12 = inlined_call_operand.vmem [shape: f32[2,1,64], index: 12, kind: input, shape index: {}]
  %s13 = inlined_call_operand.vmem [shape: f32[2,1,64], index: 13, kind: input, shape index: {}]
  %s14 = inlined_call_operand.vmem [shape: bf16[2,64,256], index: 14, kind: input, shape index: {}]
  %s15 = inlined_call_operand.vmem [shape: f32[2,1,256], index: 15, kind: input, shape index: {}]
  %s16 = inlined_call_operand.vmem [shape: bf16[2,256,64], index: 16, kind: input, shape index: {}]
  %s17 = inlined_call_operand.vmem [shape: f32[2,1,64], index: 17, kind: input, shape index: {}]
  %s18 = inlined_call_operand.vmem [shape: f32[1,64], index: 18, kind: input, shape index: {}]
  %s19 = inlined_call_operand.vmem [shape: f32[1,64], index: 19, kind: input, shape index: {}]
  %s20 = inlined_call_operand.vmem [shape: bf16[64,32], index: 20, kind: input, shape index: {}]
  %s21 = inlined_call_operand.hbm [shape: f32[2,32], index: 21, kind: output, shape index: {}]
  %s22 = sld [smem:[#allocation0]]
  $region94: #{clip_image_encoder_forward.1} parent=0
    _
  %s24 = ssub.s32 1, %s22
  %s25 = scalar_select 0, %s24, %s22
  $region1: #{clip_image_encoder_forward.1} parent=0
    #allocation2 [shape = 'u8[1024]{0}', space=vmem, size = 0x400, scoped, tag = 'output window, operand 0, single buffered']
    #allocation3 [shape = 's32[1]{0}', space=sflag, size = 0x4, scoped, tag = 'scoped memory for clip_image_encoder_forward.1']
    %26 = vsyncpa [#allocation3], 0
    // Predicated region
    $region2: #{clip_image_encoder_forward.1} parent=1 // pred_check
      _
    $region3: #{clip_image_encoder_forward.1} parent=1 // pred_check_branch
      %28 = sbr.rel (0) target = $region5
    $region4: #{clip_image_encoder_forward.1} parent=1 // pred_region
      _
    $region5: #{clip_image_encoder_forward.1} parent=1 // pred_fallthru
      _
    // Predicated region
    $region6: #{clip_image_encoder_forward.1} parent=1 // pred_check
      _
    $region7: #{clip_image_encoder_forward.1} parent=1 // pred_check_branch
      %30 = sbr.rel (0) target = $region9
    $region8: #{clip_image_encoder_forward.1} parent=1 // pred_region
      _
    $region9: #{clip_image_encoder_forward.1} parent=1 // pred_fallthru
      _
    // Predicated region
    $region10: #{clip_image_encoder_forward.1} parent=1 // pred_check
      _
    $region11: #{clip_image_encoder_forward.1} parent=1 // pred_check_branch
      %32 = sbr.rel (0) target = $region13
    $region12: #{clip_image_encoder_forward.1} parent=1 // pred_region
      _
    $region13: #{clip_image_encoder_forward.1} parent=1 // pred_fallthru
      _
    // Predicated region
    $region14: #{clip_image_encoder_forward.1} parent=1 // pred_check
      _
    $region15: #{clip_image_encoder_forward.1} parent=1 // pred_check_branch
      %34 = sbr.rel (0) target = $region17
    $region16: #{clip_image_encoder_forward.1} parent=1 // pred_region
      _
    $region17: #{clip_image_encoder_forward.1} parent=1 // pred_fallthru
      _
    // Predicated region
    $region18: #{clip_image_encoder_forward.1} parent=1 // pred_check
      _
    $region19: #{clip_image_encoder_forward.1} parent=1 // pred_check_branch
      %36 = sbr.rel (0) target = $region21
    $region20: #{clip_image_encoder_forward.1} parent=1 // pred_region
      _
    $region21: #{clip_image_encoder_forward.1} parent=1 // pred_fallthru
      _
    // Predicated region
    $region22: #{clip_image_encoder_forward.1} parent=1 // pred_check
      _
    $region23: #{clip_image_encoder_forward.1} parent=1 // pred_check_branch
      %38 = sbr.rel (0) target = $region25
    $region24: #{clip_image_encoder_forward.1} parent=1 // pred_region
      _
    $region25: #{clip_image_encoder_forward.1} parent=1 // pred_fallthru
      _
    // Predicated region
    $region26: #{clip_image_encoder_forward.1} parent=1 // pred_check
      _
    $region27: #{clip_image_encoder_forward.1} parent=1 // pred_check_branch
      %40 = sbr.rel (0) target = $region29
    $region28: #{clip_image_encoder_forward.1} parent=1 // pred_region
      _
    $region29: #{clip_image_encoder_forward.1} parent=1 // pred_fallthru
      _
    // Predicated region
    $region30: #{clip_image_encoder_forward.1} parent=1 // pred_check
      _
    $region31: #{clip_image_encoder_forward.1} parent=1 // pred_check_branch
      %42 = sbr.rel (0) target = $region33
    $region32: #{clip_image_encoder_forward.1} parent=1 // pred_region
      _
    $region33: #{clip_image_encoder_forward.1} parent=1 // pred_fallthru
      _
    // Predicated region
    $region34: #{clip_image_encoder_forward.1} parent=1 // pred_check
      _
    $region35: #{clip_image_encoder_forward.1} parent=1 // pred_check_branch
      %44 = sbr.rel (0) target = $region37
    $region36: #{clip_image_encoder_forward.1} parent=1 // pred_region
      _
    $region37: #{clip_image_encoder_forward.1} parent=1 // pred_fallthru
      _
    // Predicated region
    $region38: #{clip_image_encoder_forward.1} parent=1 // pred_check
      _
    $region39: #{clip_image_encoder_forward.1} parent=1 // pred_check_branch
      %46 = sbr.rel (0) target = $region41
    $region40: #{clip_image_encoder_forward.1} parent=1 // pred_region
      _
    $region41: #{clip_image_encoder_forward.1} parent=1 // pred_fallthru
      _
    // Predicated region
    $region42: #{clip_image_encoder_forward.1} parent=1 // pred_check
      _
    $region43: #{clip_image_encoder_forward.1} parent=1 // pred_check_branch
      %48 = sbr.rel (0) target = $region45
    $region44: #{clip_image_encoder_forward.1} parent=1 // pred_region
      _
    $region45: #{clip_image_encoder_forward.1} parent=1 // pred_fallthru
      _
    // Predicated region
    $region46: #{clip_image_encoder_forward.1} parent=1 // pred_check
      _
    $region47: #{clip_image_encoder_forward.1} parent=1 // pred_check_branch
      %50 = sbr.rel (0) target = $region49
    $region48: #{clip_image_encoder_forward.1} parent=1 // pred_region
      _
    $region49: #{clip_image_encoder_forward.1} parent=1 // pred_fallthru
      _
    // Predicated region
    $region50: #{clip_image_encoder_forward.1} parent=1 // pred_check
      _
    $region51: #{clip_image_encoder_forward.1} parent=1 // pred_check_branch
      %52 = sbr.rel (0) target = $region53
    $region52: #{clip_image_encoder_forward.1} parent=1 // pred_region
      _
    $region53: #{clip_image_encoder_forward.1} parent=1 // pred_fallthru
      _
    // Predicated region
    $region54: #{clip_image_encoder_forward.1} parent=1 // pred_check
      _
    $region55: #{clip_image_encoder_forward.1} parent=1 // pred_check_branch
      %54 = sbr.rel (0) target = $region57
    $region56: #{clip_image_encoder_forward.1} parent=1 // pred_region
      _
    $region57: #{clip_image_encoder_forward.1} parent=1 // pred_fallthru
      _
    // Predicated region
    $region58: #{clip_image_encoder_forward.1} parent=1 // pred_check
      _
    $region59: #{clip_image_encoder_forward.1} parent=1 // pred_check_branch
      %56 = sbr.rel (0) target = $region61
    $region60: #{clip_image_encoder_forward.1} parent=1 // pred_region
      _
    $region61: #{clip_image_encoder_forward.1} parent=1 // pred_fallthru
      _
    // Predicated region
    $region62: #{clip_image_encoder_forward.1} parent=1 // pred_check
      _
    $region63: #{clip_image_encoder_forward.1} parent=1 // pred_check_branch
      %58 = sbr.rel (0) target = $region65
    $region64: #{clip_image_encoder_forward.1} parent=1 // pred_region
      _
    $region65: #{clip_image_encoder_forward.1} parent=1 // pred_fallthru
      _
    // Predicated region
    $region66: #{clip_image_encoder_forward.1} parent=1 // pred_check
      _
    $region67: #{clip_image_encoder_forward.1} parent=1 // pred_check_branch
      %60 = sbr.rel (0) target = $region69
    $region68: #{clip_image_encoder_forward.1} parent=1 // pred_region
      _
    $region69: #{clip_image_encoder_forward.1} parent=1 // pred_fallthru
      _
    // Predicated region
    $region70: #{clip_image_encoder_forward.1} parent=1 // pred_check
      _
    $region71: #{clip_image_encoder_forward.1} parent=1 // pred_check_branch
      %62 = sbr.rel (0) target = $region73
    $region72: #{clip_image_encoder_forward.1} parent=1 // pred_region
      _
    $region73: #{clip_image_encoder_forward.1} parent=1 // pred_fallthru
      _
    // Predicated region
    $region74: #{clip_image_encoder_forward.1} parent=1 // pred_check
      _
    $region75: #{clip_image_encoder_forward.1} parent=1 // pred_check_branch
      %64 = sbr.rel (0) target = $region77
    $region76: #{clip_image_encoder_forward.1} parent=1 // pred_region
      _
    $region77: #{clip_image_encoder_forward.1} parent=1 // pred_fallthru
      _
    // Predicated region
    $region78: #{clip_image_encoder_forward.1} parent=1 // pred_check
      _
    $region79: #{clip_image_encoder_forward.1} parent=1 // pred_check_branch
      %66 = sbr.rel (0) target = $region81
    $region80: #{clip_image_encoder_forward.1} parent=1 // pred_region
      _
    $region81: #{clip_image_encoder_forward.1} parent=1 // pred_fallthru
      _
    // Predicated region
    $region82: #{clip_image_encoder_forward.1} parent=1 // pred_check
      _
    $region83: #{clip_image_encoder_forward.1} parent=1 // pred_check_branch
      %68 = sbr.rel (0) target = $region85
    $region84: #{clip_image_encoder_forward.1} parent=1 // pred_region
      _
    $region85: #{clip_image_encoder_forward.1} parent=1 // pred_fallthru
      _
    %v70 = vld [vmem:[%s0] sm:$0xff]
    %v71 = vld [vmem:[%s0 + $0x8] sm:$0xff]
    %v72 = vld [vmem:[%s0 + $0x10] sm:$0xff]
    %v73 = vld [vmem:[%s0 + $0x18] sm:$0xff]
    %v74 = vld [vmem:[%s0 + $0x20] sm:$0xff]
    %v75 = vld [vmem:[%s0 + $0x28] sm:$0xff]
    %v76 = vld [vmem:[%s0 + $0x30] sm:$0xff]
    %v77 = vld [vmem:[%s0 + $0x38] sm:$0xff]
    %v78 = vld [vmem:[%s3] sm:$0xf]
    %v79 = vld [vmem:[%s3 + $0x4] sm:$0xf]
    %v80 = vld [vmem:[%s3 + $0x8] sm:$0xf]
    %v81 = vld [vmem:[%s3 + $0xc] sm:$0xf]
    %v82 = vld [vmem:[%s3 + $0x10] sm:$0xf]
    %v83 = vld [vmem:[%s3 + $0x14] sm:$0xf]
    %v84 = vld [vmem:[%s3 + $0x18] sm:$0xf]
    %v85 = vld [vmem:[%s3 + $0x1c] sm:$0xf]
    %v86 = vld [vmem:[%s3 + $0x20] sm:$0xf]
    %v87 = vld [vmem:[%s3 + $0x24] sm:$0xf]
    %v88 = vld [vmem:[%s3 + $0x28] sm:$0xf]
    %v89 = vld [vmem:[%s3 + $0x2c] sm:$0xf]
    %v90 = vld [vmem:[%s3 + $0x30] sm:$0xf]
    %v91 = vld [vmem:[%s3 + $0x34] sm:$0xf]
    %v92 = vld [vmem:[%s3 + $0x38] sm:$0xf]
    %v93 = vld [vmem:[%s3 + $0x3c] sm:$0xf]
    %v94 = vld [vmem:[%s3 + $0x40] sm:$0xf]
    %v95 = vld [vmem:[%s3 + $0x44] sm:$0xf]
    %v96 = vld [vmem:[%s3 + $0x48] sm:$0xf]
    %v97 = vld [vmem:[%s3 + $0x4c] sm:$0xf]
    %v98 = vld [vmem:[%s3 + $0x50] sm:$0xf]
    %v99 = vld [vmem:[%s3 + $0x54] sm:$0xf]
    %v100 = vld [vmem:[%s3 + $0x58] sm:$0xf]
    %v101 = vld [vmem:[%s3 + $0x5c] sm:$0xf]
    %v102 = vpack.c.bf16 %v72, %v70
    %v103 = vpack.c.bf16 %v73, %v71
    %v104 = vpack.c.bf16 %v76, %v74
    %v105 = vpack.c.bf16 %v77, %v75
    %v130 = vunpack.c.l.b16 %v78
    %v131 = vunpack.c.l.b16 %v79
    %v132 = vunpack.c.l.b16 %v80
    %v133 = vunpack.c.l.b16 %v81
    %v134 = vunpack.c.l.b16 %v82
    %v135 = vunpack.c.l.b16 %v83
    %v136 = vunpack.c.l.b16 %v84
    %v137 = vunpack.c.l.b16 %v85
    %v138 = vunpack.c.l.b16 %v86
    %v139 = vunpack.c.l.b16 %v87
    %v140 = vunpack.c.l.b16 %v88
    %v141 = vunpack.c.l.b16 %v89
    %v142 = vunpack.c.l.b16 %v90
    %v143 = vunpack.c.l.b16 %v91
    %v144 = vunpack.c.l.b16 %v92
    %v145 = vunpack.c.l.b16 %v93
    %v146 = vunpack.c.l.b16 %v94
    %v147 = vunpack.c.l.b16 %v95
    %v148 = vunpack.c.l.b16 %v96
    %v149 = vunpack.c.l.b16 %v97
    %v150 = vunpack.c.l.b16 %v98
    %v151 = vunpack.c.l.b16 %v99
    %v152 = vunpack.c.l.b16 %v100
    %v153 = vunpack.c.l.b16 %v101
    %v154 = vpack.c.b16 %v131, %v130
    %v155 = vpack.c.b16 %v133, %v132
    %v156 = vpack.c.b16 %v135, %v134
    %v157 = vpack.c.b16 %v137, %v136
    %v158 = vpack.c.b16 %v139, %v138
    %v159 = vpack.c.b16 %v141, %v140
    %v160 = vpack.c.b16 %v143, %v142
    %v161 = vpack.c.b16 %v145, %v144
    %v162 = vpack.c.b16 %v147, %v146
    %v163 = vpack.c.b16 %v149, %v148
    %v164 = vpack.c.b16 %v151, %v150
    %v165 = vpack.c.b16 %v153, %v152
    %vm178 = vcmask 523264
    %v180 = vsel %vm178, %v103, 0
    %v183 = vsel %vm178, %v105, 0
    %185 = vmatprep.subr.bf16.mxu0 0
    %186 = vmatpush1.bf16.msra.mxu0 %v154
    %187 = vmatprep.subr.bf16.mxu0 0
    %188 = vmatpush1.bf16.msra.mxu0 %v155
    %189 = vmatprep.subr.bf16.mxu0 0
    %190 = vmatpush1.bf16.msra.mxu0 %v156
    %191 = vmatprep.subr.bf16.mxu0 0
    %192 = vmatpush1.bf16.msra.mxu0 %v157
    %193 = vmatprep.subr.bf16.mxu0 0
    %194 = vmatpush1.bf16.msra.mxu0 %v158
    %195 = vmatprep.subr.bf16.mxu0 0
    %196 = vmatpush1.bf16.msra.mxu0 %v159
    %197 = vmatprep.subr.bf16.mxu0 0
    %198 = vmatpush1.bf16.msra.mxu0 %v160
    %199 = vmatprep.subr.bf16.mxu0 0
    %200 = vmatpush1.bf16.msra.mxu0 %v161
    %201 = vmatprep.subr.bf16.mxu0 0
    %202 = vmatpush1.bf16.msra.mxu0 %v162
    %203 = vmatprep.subr.bf16.mxu0 0
    %204 = vmatpush1.bf16.msra.mxu0 %v163
    %205 = vmatprep.subr.bf16.mxu0 0
    %206 = vmatpush1.bf16.msra.mxu0 %v164
    %207 = vmatprep.subr.bf16.mxu0 0
    %208 = vmatpush1.bf16.msra.mxu0 %v165
    %209 = vmatprep.subr.bf16.mxu0 0
    %210 = vmatpush1.bf16.msra.mxu0 0
    %211 = vmatprep.subr.bf16.mxu0 0
    %212 = vmatpush1.bf16.msra.mxu0 0
    %213 = vmatprep.subr.bf16.mxu0 0
    %214 = vmatpush1.bf16.msra.mxu0 0
    %215 = vmatprep.subr.bf16.mxu0 0
    %216 = vmatpush1.bf16.msra.mxu0 0
    %217 = vmatprep.mubr.bf16.mxu0 %v180
    %218 = vmatmul.mubr.bf16.gmra.mrb[0].mxu0 %v102
    %v219 = vpop.f32.mrb[0].mxu0
    %v220 = vadd.f32 0.0, %v219
    %v221 = vpop.f32.mrb[0].mxu0
    %v222 = vpop.f32.mrb[0].mxu0
    %v223 = vadd.f32 0.0, %v222
    %v224 = vpop.f32.mrb[0].mxu0
    %225 = vmatprep.mubr.bf16.mxu0 %v183
    %226 = vmatmul.mubr.bf16.gmra.mrb[0].mxu0 %v104
    %v227 = vpop.f32.mrb[0].mxu0
    %v228 = vadd.f32 0.0, %v227
    %v229 = vpop.f32.mrb[0].mxu0
    %v230 = vpop.f32.mrb[0].mxu0
    %v231 = vadd.f32 0.0, %v230
    %v232 = vpop.f32.mrb[0].mxu0
    %233 = vdwg.mxu0
    %v234 = vld [vmem:[%s1] sm:$0xff]
    %v235 = vld [vmem:[%s1 + $0x8] sm:$0xff]
    %v236 = vld [vmem:[%s1 + $0x10] sm:$0xff]
    %v237 = vld [vmem:[%s1 + $0x18] sm:$0xff]
    %v238 = vld [vmem:[%s1 + $0x20] sm:$0xff]
    %v239 = vld [vmem:[%s1 + $0x28] sm:$0xff]
    %v240 = vadd.f32 %v220, %v234
    %v241 = vadd.f32 %v223, %v235
    %v242 = vadd.f32 %v236, 0.0
    %v243 = vadd.f32 %v228, %v237
    %v244 = vadd.f32 %v231, %v238
    %v245 = vadd.f32 %v239, 0.0
    %v246 = vld [vmem:[%s4] sm:$0x1]
    %v247 = vld [vmem:[%s5] sm:$0x1]
    %v248 = vsel %vm178, %v240, 0.0
    %249 = vadd.xlane.f32.xlu0 %v248
    %v250 = vpop.xlane.xlu0 %249
    %v251 = vsel %vm178, %v241, 0.0
    %252 = vadd.xlane.f32.xlu0 %v251
    %v253 = vpop.xlane.xlu0 %252
    %v254 = vsel %vm178, %v242, 0.0
    %255 = vadd.xlane.f32.xlu0 %v254
    %v256 = vpop.xlane.xlu0 %255
    %v257 = vsel %vm178, %v243, 0.0
    %258 = vadd.xlane.f32.xlu0 %v257
    %v259 = vpop.xlane.xlu0 %258
    %v260 = vsel %vm178, %v244, 0.0
    %261 = vadd.xlane.f32.xlu0 %v260
    %v262 = vpop.xlane.xlu0 %261
    %v263 = vsel %vm178, %v245, 0.0
    %264 = vadd.xlane.f32.xlu0 %v263
    %v265 = vpop.xlane.xlu0 %264
    %v266 = vrcp.pop 64.0
    %v267 = vmul.f32 %v250, %v266
    %v268 = vmul.f32 %v253, %v266
    %v269 = vmul.f32 %v256, %v266
    %v270 = vmul.f32 %v259, %v266
    %v271 = vmul.f32 %v262, %v266
    %v272 = vmul.f32 %v265, %v266
    %v273 = vsub.f32 %v240, %v267
    %v274 = vsub.f32 %v241, %v268
    %v275 = vsub.f32 %v242, %v269
    %v276 = vsub.f32 %v243, %v270
    %v277 = vsub.f32 %v244, %v271
    %v278 = vsub.f32 %v245, %v272
    %v279 = vmul.f32 %v273, %v273
    %v280 = vmul.f32 %v274, %v274
    %v281 = vmul.f32 %v275, %v275
    %v282 = vmul.f32 %v276, %v276
    %v283 = vmul.f32 %v277, %v277
    %v284 = vmul.f32 %v278, %v278
    %v285 = vsel %vm178, %v279, 0.0
    %286 = vadd.xlane.f32.xlu0 %v285
    %v287 = vpop.xlane.xlu0 %286
    %v288 = vsel %vm178, %v280, 0.0
    %289 = vadd.xlane.f32.xlu0 %v288
    %v290 = vpop.xlane.xlu0 %289
    %v291 = vsel %vm178, %v281, 0.0
    %292 = vadd.xlane.f32.xlu0 %v291
    %v293 = vpop.xlane.xlu0 %292
    %v294 = vsel %vm178, %v282, 0.0
    %295 = vadd.xlane.f32.xlu0 %v294
    %v296 = vpop.xlane.xlu0 %295
    %v297 = vsel %vm178, %v283, 0.0
    %298 = vadd.xlane.f32.xlu0 %v297
    %v299 = vpop.xlane.xlu0 %298
    %v300 = vsel %vm178, %v284, 0.0
    %301 = vadd.xlane.f32.xlu0 %v300
    %v302 = vpop.xlane.xlu0 %301
    %v303 = vmul.f32 %v287, %v266
    %v304 = vmul.f32 %v290, %v266
    %v305 = vmul.f32 %v293, %v266
    %v306 = vmul.f32 %v296, %v266
    %v307 = vmul.f32 %v299, %v266
    %v308 = vmul.f32 %v302, %v266
    %v309 = vadd.f32 %v303, 1e-05
    %v310 = vadd.f32 %v304, 1e-05
    %v311 = vadd.f32 %v305, 1e-05
    %v312 = vadd.f32 %v306, 1e-05
    %v313 = vadd.f32 %v307, 1e-05
    %v314 = vadd.f32 %v308, 1e-05
    %v315 = vrsqrt.pop %v309
    %v316 = vrsqrt.pop %v310
    %v317 = vrsqrt.pop %v311
    %v318 = vrsqrt.pop %v312
    %v319 = vrsqrt.pop %v313
    %v320 = vrsqrt.pop %v314
    %v321 = vmul.f32 %v273, %v315
    %v322 = vmul.f32 %v274, %v316
    %v323 = vmul.f32 %v275, %v317
    %v324 = vmul.f32 %v276, %v318
    %v325 = vmul.f32 %v277, %v319
    %v326 = vmul.f32 %v278, %v320
    %v328 = vlaneseq
    %v329 = vshrl.u32 %v328, 7
    %v330 = vsub.s32 0, %v329
    %v331 = vrot.slane %v246, %v330
    %v333 = vmul.f32 %v321, %v331
    %v334 = vmul.f32 %v322, %v331
    %v335 = vmul.f32 %v323, %v331
    %v336 = vmul.f32 %v324, %v331
    %v337 = vmul.f32 %v325, %v331
    %v338 = vmul.f32 %v326, %v331
    %v340 = vlaneseq
    %v341 = vshrl.u32 %v340, 7
    %v342 = vsub.s32 0, %v341
    %v343 = vrot.slane %v247, %v342
    %v345 = vadd.f32 %v333, %v343
    %v346 = vadd.f32 %v334, %v343
    %v347 = vadd.f32 %v335, %v343
    %v348 = vadd.f32 %v336, %v343
    %v349 = vadd.f32 %v337, %v343
    %v350 = vadd.f32 %v338, %v343
    %v351 = vld [vmem:[%s2] sm:$0xff]
    %v352 = vld [vmem:[%s2 + $0x8] sm:$0xff]
    %v353 = vld [vmem:[%s2 + $0x10] sm:$0xff]
    %v354 = vld [vmem:[%s2 + $0x18] sm:$0xff]
    %v355 = vld [vmem:[%s2 + $0x20] sm:$0xff]
    %v356 = vld [vmem:[%s2 + $0x28] sm:$0xff]
    %v357 = vld [vmem:[%s6] sm:$0x1]
    %v358 = vld [vmem:[%s7] sm:$0x1]
    %v359 = vsel %vm178, %v345, 0.0
    %360 = vadd.xlane.f32.xlu0 %v359
    %v361 = vpop.xlane.xlu0 %360
    %v362 = vsel %vm178, %v346, 0.0
    %363 = vadd.xlane.f32.xlu0 %v362
    %v364 = vpop.xlane.xlu0 %363
    %v365 = vsel %vm178, %v347, 0.0
    %366 = vadd.xlane.f32.xlu0 %v365
    %v367 = vpop.xlane.xlu0 %366
    %v368 = vsel %vm178, %v348, 0.0
    %369 = vadd.xlane.f32.xlu0 %v368
    %v370 = vpop.xlane.xlu0 %369
    %v371 = vsel %vm178, %v349, 0.0
    %372 = vadd.xlane.f32.xlu0 %v371
    %v373 = vpop.xlane.xlu0 %372
    %v374 = vsel %vm178, %v350, 0.0
    %375 = vadd.xlane.f32.xlu0 %v374
    %v376 = vpop.xlane.xlu0 %375
    %v377 = vmul.f32 %v361, %v266
    %v378 = vmul.f32 %v364, %v266
    %v379 = vmul.f32 %v367, %v266
    %v380 = vmul.f32 %v370, %v266
    %v381 = vmul.f32 %v373, %v266
    %v382 = vmul.f32 %v376, %v266
    %v383 = vsub.f32 %v345, %v377
    %v384 = vsub.f32 %v346, %v378
    %v385 = vsub.f32 %v347, %v379
    %v386 = vsub.f32 %v348, %v380
    %v387 = vsub.f32 %v349, %v381
    %v388 = vsub.f32 %v350, %v382
    %v389 = vmul.f32 %v383, %v383
    %v390 = vmul.f32 %v384, %v384
    %v391 = vmul.f32 %v385, %v385
    %v392 = vmul.f32 %v386, %v386
    %v393 = vmul.f32 %v387, %v387
    %v394 = vmul.f32 %v388, %v388
    %v395 = vsel %vm178, %v389, 0.0
    %396 = vadd.xlane.f32.xlu0 %v395
    %v397 = vpop.xlane.xlu0 %396
    %v398 = vsel %vm178, %v390, 0.0
    %399 = vadd.xlane.f32.xlu0 %v398
    %v400 = vpop.xlane.xlu0 %399
    %v401 = vsel %vm178, %v391, 0.0
    %402 = vadd.xlane.f32.xlu0 %v401
    %v403 = vpop.xlane.xlu0 %402
    %v404 = vsel %vm178, %v392, 0.0
    %405 = vadd.xlane.f32.xlu0 %v404
    %v406 = vpop.xlane.xlu0 %405
    %v407 = vsel %vm178, %v393, 0.0
    %408 = vadd.xlane.f32.xlu0 %v407
    %v409 = vpop.xlane.xlu0 %408
    %v410 = vsel %vm178, %v394, 0.0
    %411 = vadd.xlane.f32.xlu0 %v410
    %v412 = vpop.xlane.xlu0 %411
    %v413 = vmul.f32 %v397, %v266
    %v414 = vmul.f32 %v400, %v266
    %v415 = vmul.f32 %v403, %v266
    %v416 = vmul.f32 %v406, %v266
    %v417 = vmul.f32 %v409, %v266
    %v418 = vmul.f32 %v412, %v266
    %v419 = vadd.f32 %v413, 1e-05
    %v420 = vadd.f32 %v414, 1e-05
    %v421 = vadd.f32 %v415, 1e-05
    %v422 = vadd.f32 %v416, 1e-05
    %v423 = vadd.f32 %v417, 1e-05
    %v424 = vadd.f32 %v418, 1e-05
    %v425 = vrsqrt.pop %v419
    %v426 = vrsqrt.pop %v420
    %v427 = vrsqrt.pop %v421
    %v428 = vrsqrt.pop %v422
    %v429 = vrsqrt.pop %v423
    %v430 = vrsqrt.pop %v424
    %v431 = vmul.f32 %v383, %v425
    %v432 = vmul.f32 %v384, %v426
    %v433 = vmul.f32 %v385, %v427
    %v434 = vmul.f32 %v386, %v428
    %v435 = vmul.f32 %v387, %v429
    %v436 = vmul.f32 %v388, %v430
    %v438 = vlaneseq
    %v439 = vshrl.u32 %v438, 7
    %v440 = vsub.s32 0, %v439
    %v441 = vrot.slane %v357, %v440
    %v443 = vmul.f32 %v431, %v441
    %v444 = vmul.f32 %v432, %v441
    %v445 = vmul.f32 %v433, %v441
    %v446 = vmul.f32 %v434, %v441
    %v447 = vmul.f32 %v435, %v441
    %v448 = vmul.f32 %v436, %v441
    %v450 = vlaneseq
    %v451 = vshrl.u32 %v450, 7
    %v452 = vsub.s32 0, %v451
    %v453 = vrot.slane %v358, %v452
    %v455 = vadd.f32 %v443, %v453
    %v456 = vadd.f32 %v444, %v453
    %v457 = vadd.f32 %v445, %v453
    %v458 = vadd.f32 %v446, %v453
    %v459 = vadd.f32 %v447, %v453
    %v460 = vadd.f32 %v448, %v453
    %v461 = vld [vmem:[%s8] sm:$0xff]
    %v462 = vld [vmem:[%s8 + $0x8] sm:$0xff]
    %v463 = vld [vmem:[%s8 + $0x10] sm:$0xff]
    %v464 = vld [vmem:[%s8 + $0x18] sm:$0xff]
    %v465 = vld [vmem:[%s8 + $0x20] sm:$0xff]
    %v466 = vld [vmem:[%s8 + $0x28] sm:$0xff]
    %v467 = vld [vmem:[%s8 + $0x30] sm:$0xff]
    %v468 = vld [vmem:[%s8 + $0x38] sm:$0xff]
    %v469 = vpack.c.bf16 %v456, %v455
    %v470 = vpack.c.bf16 %v458, %v457
    %v471 = vpack.c.bf16 %v460, %v459
    %v472 = vld [vmem:[%s9] sm:$0x3]
    %v474 = vlaneseq
    %v475 = vshrl.u32 %v474, 7
    %v476 = vsub.s32 0, %v475
    %v477 = vrot.slane %v472, %v476
    %v478 = vlaneseq
    %v479 = vshrl.u32 %v478, 7
    %v480 = vsub.s32 1, %v479
    %v481 = vrot.slane %v472, %v480
    %v492 = vunpack.c.l.b16 %v461
    %v493 = vunpack.c.h.b16 %v461
    %v494 = vunpack.c.l.b16 %v462
    %v495 = vunpack.c.h.b16 %v462
    %v496 = vunpack.c.l.b16 %v463
    %v497 = vunpack.c.h.b16 %v463
    %v498 = vunpack.c.l.b16 %v464
    %v499 = vunpack.c.h.b16 %v464
    %v500 = vunpack.c.l.b16 %v465
    %v501 = vunpack.c.h.b16 %v465
    %v502 = vunpack.c.l.b16 %v466
    %v503 = vunpack.c.h.b16 %v466
    %v504 = vunpack.c.l.b16 %v467
    %v505 = vunpack.c.h.b16 %v467
    %v506 = vunpack.c.l.b16 %v468
    %v507 = vunpack.c.h.b16 %v468
    %v508 = vpack.c.b16 %v494, %v492
    %v509 = vpack.c.b16 %v495, %v493
    %v510 = vpack.c.b16 %v498, %v496
    %v511 = vpack.c.b16 %v499, %v497
    %v512 = vpack.c.b16 %v502, %v500
    %v513 = vpack.c.b16 %v503, %v501
    %v514 = vpack.c.b16 %v506, %v504
    %v515 = vpack.c.b16 %v507, %v505
    %v525 = vsel %vm178, %v469, 0
    %v528 = vsel %vm178, %v470, 0
    %v531 = vsel %vm178, %v471, 0
    %533 = vmatprep.subr.bf16.mxu0 %v509
    %534 = vmatpush1.bf16.msra.mxu0 %v508
    %535 = vmatprep.subr.bf16.mxu0 %v511
    %536 = vmatpush1.bf16.msra.mxu0 %v510
    %537 = vmatprep.subr.bf16.mxu0 %v513
    %538 = vmatpush1.bf16.msra.mxu0 %v512
    %539 = vmatprep.subr.bf16.mxu0 %v515
    %540 = vmatpush1.bf16.msra.mxu0 %v514
    %541 = vmatprep.subr.bf16.mxu0 0
    %542 = vmatpush1.bf16.msra.mxu0 0
    %543 = vmatprep.subr.bf16.mxu0 0
    %544 = vmatpush1.bf16.msra.mxu0 0
    %545 = vmatprep.subr.bf16.mxu0 0
    %546 = vmatpush1.bf16.msra.mxu0 0
    %547 = vmatprep.subr.bf16.mxu0 0
    %548 = vmatpush1.bf16.msra.mxu0 0
    %549 = vmatprep.subr.bf16.mxu0 0
    %550 = vmatpush1.bf16.msra.mxu0 0
    %551 = vmatprep.subr.bf16.mxu0 0
    %552 = vmatpush1.bf16.msra.mxu0 0
    %553 = vmatprep.subr.bf16.mxu0 0
    %554 = vmatpush1.bf16.msra.mxu0 0
    %555 = vmatprep.subr.bf16.mxu0 0
    %556 = vmatpush1.bf16.msra.mxu0 0
    %557 = vmatprep.subr.bf16.mxu0 0
    %558 = vmatpush1.bf16.msra.mxu0 0
    %559 = vmatprep.subr.bf16.mxu0 0
    %560 = vmatpush1.bf16.msra.mxu0 0
    %561 = vmatprep.subr.bf16.mxu0 0
    %562 = vmatpush1.bf16.msra.mxu0 0
    %563 = vmatprep.subr.bf16.mxu0 0
    %564 = vmatpush1.bf16.msra.mxu0 0
    %565 = vmatprep.mubr.bf16.mxu0 0
    %566 = vmatmul.mubr.bf16.gmra.mrb[0].mxu0 %v525
    %v567 = vpop.f32.mrb[0].mxu0
    %v568 = vadd.f32 %v477, %v567
    %v569 = vpop.f32.mrb[0].mxu0
    %v570 = vadd.f32 %v481, %v569
    %v571 = vpop.f32.mrb[0].mxu0
    %v572 = vadd.f32 %v477, %v571
    %v573 = vpop.f32.mrb[0].mxu0
    %v574 = vadd.f32 %v481, %v573
    %575 = vmatprep.mubr.bf16.mxu0 0
    %576 = vmatmul.mubr.bf16.gmra.mrb[0].mxu0 %v528
    %v577 = vpop.f32.mrb[0].mxu0
    %v578 = vadd.f32 %v477, %v577
    %v579 = vpop.f32.mrb[0].mxu0
    %v580 = vadd.f32 %v481, %v579
    %v581 = vpop.f32.mrb[0].mxu0
    %v582 = vadd.f32 %v477, %v581
    %v583 = vpop.f32.mrb[0].mxu0
    %v584 = vadd.f32 %v481, %v583
    %585 = vmatprep.mubr.bf16.mxu0 0
    %586 = vmatmul.mubr.bf16.gmra.mrb[0].mxu0 %v531
    %v587 = vpop.f32.mrb[0].mxu0
    %v588 = vadd.f32 %v477, %v587
    %v589 = vpop.f32.mrb[0].mxu0
    %v590 = vadd.f32 %v481, %v589
    %v591 = vpop.f32.mrb[0].mxu0
    %v592 = vadd.f32 %v477, %v591
    %v593 = vpop.f32.mrb[0].mxu0
    %v594 = vadd.f32 %v481, %v593
    %595 = vdwg.mxu0
    %v596 = vpack.c.bf16 %v572, %v568
    %v597 = vpack.c.bf16 %v574, %v570
    %v598 = vpack.c.bf16 %v582, %v578
    %v599 = vpack.c.bf16 %v584, %v580
    %v600 = vpack.c.bf16 %v592, %v588
    %v601 = vpack.c.bf16 %v594, %v590
    %605 = vrot.lane.b32.xlu0 %v596, 64
    %v606 = vpop.permute.xlu0 %605
    %607 = vrot.lane.b32.xlu0 %v598, 64
    %v608 = vpop.permute.xlu0 %607
    %609 = vrot.lane.b32.xlu0 %v600, 64
    %v610 = vpop.permute.xlu0 %609
    %vm611 = vcmask 130048
    %v613 = vsel %vm611, %v596, 0
    %v616 = vsel %vm611, %v598, 0
    %v619 = vsel %vm611, %v600, 0
    %v622 = vsel %vm611, %v606, 0
    %v625 = vsel %vm611, %v608, 0
    %v628 = vsel %vm611, %v610, 0
    %630 = vmatprep.subr.bf16.mxu0 0
    %631 = vmatpush1.bf16.xpose.msra.mxu0 %v622
    %632 = vmatprep.subr.bf16.mxu0 0
    %633 = vmatpush1.bf16.xpose.msra.mxu0 %v625
    %634 = vmatprep.subr.bf16.mxu0 0
    %635 = vmatpush1.bf16.xpose.msra.mxu0 %v628
    %636 = vmatprep.subr.bf16.mxu0 0
    %637 = vmatpush1.bf16.xpose.msra.mxu0 0
    %638 = vmatprep.subr.bf16.mxu0 0
    %639 = vmatpush1.bf16.xpose.msra.mxu0 0
    %640 = vmatprep.subr.bf16.mxu0 0
    %641 = vmatpush1.bf16.xpose.msra.mxu0 0
    %642 = vmatprep.subr.bf16.mxu0 0
    %643 = vmatpush1.bf16.xpose.msra.mxu0 0
    %644 = vmatprep.subr.bf16.mxu0 0
    %645 = vmatpush1.bf16.xpose.msra.mxu0 0
    %646 = vmatprep.subr.bf16.mxu0 0
    %647 = vmatpush1.bf16.xpose.msra.mxu0 0
    %648 = vmatprep.subr.bf16.mxu0 0
    %649 = vmatpush1.bf16.xpose.msra.mxu0 0
    %650 = vmatprep.subr.bf16.mxu0 0
    %651 = vmatpush1.bf16.xpose.msra.mxu0 0
    %652 = vmatprep.subr.bf16.mxu0 0
    %653 = vmatpush1.bf16.xpose.msra.mxu0 0
    %654 = vmatprep.subr.bf16.mxu0 0
    %655 = vmatpush1.bf16.xpose.msra.mxu0 0
    %656 = vmatprep.subr.bf16.mxu0 0
    %657 = vmatpush1.bf16.xpose.msra.mxu0 0
    %658 = vmatprep.subr.bf16.mxu0 0
    %659 = vmatpush1.bf16.xpose.msra.mxu0 0
    %660 = vmatprep.subr.bf16.mxu0 0
    %661 = vmatpush1.bf16.xpose.msra.mxu0 0
    %662 = vmatprep.mubr.bf16.mxu0 0
    %663 = vmatmul.mubr.bf16.gmra.mrb[0].mxu0 %v613
    %v664 = vpop.f32.mrb[0].mxu0
    %v665 = vadd.f32 %v351, %v664
    %v666 = vpop.f32.mrb[0].mxu0
    %v667 = vpop.f32.mrb[0].mxu0
    %v668 = vadd.f32 %v352, %v667
    %v669 = vpop.f32.mrb[0].mxu0
    %670 = vmatprep.mubr.bf16.mxu0 0
    %671 = vmatmul.mubr.bf16.gmra.mrb[0].mxu0 %v616
    %v672 = vpop.f32.mrb[0].mxu0
    %v673 = vadd.f32 %v353, %v672
    %v674 = vpop.f32.mrb[0].mxu0
    %v675 = vpop.f32.mrb[0].mxu0
    %v676 = vadd.f32 %v354, %v675
    %v677 = vpop.f32.mrb[0].mxu0
    %678 = vmatprep.mubr.bf16.mxu0 0
    %679 = vmatmul.mubr.bf16.gmra.mrb[0].mxu0 %v619
    %v680 = vpop.f32.mrb[0].mxu0
    %v681 = vadd.f32 %v355, %v680
    %v682 = vpop.f32.mrb[0].mxu0
    %v683 = vpop.f32.mrb[0].mxu0
    %v684 = vadd.f32 %v356, %v683
    %v685 = vpop.f32.mrb[0].mxu0
    %686 = vdwg.mxu0
    %vm687 = vcmask 392192
    %v688 = vsel %vm687, %v665, -inf
    %689 = vmax.xlane.f32.xlu0 %v688
    %v690 = vpop.xlane.xlu0 %689
    %v691 = vsel %vm687, %v668, -inf
    %692 = vmax.xlane.f32.xlu0 %v691
    %v693 = vpop.xlane.xlu0 %692
    %v694 = vsel %vm687, %v673, -inf
    %695 = vmax.xlane.f32.xlu0 %v694
    %v696 = vpop.xlane.xlu0 %695
    %v697 = vsel %vm687, %v676, -inf
    %698 = vmax.xlane.f32.xlu0 %v697
    %v699 = vpop.xlane.xlu0 %698
    %v700 = vsel %vm687, %v681, -inf
    %701 = vmax.xlane.f32.xlu0 %v700
    %v702 = vpop.xlane.xlu0 %701
    %v703 = vsel %vm687, %v684, -inf
    %704 = vmax.xlane.f32.xlu0 %v703
    %v705 = vpop.xlane.xlu0 %704
    %v706 = vsub.f32 %v665, %v690
    %v707 = vsub.f32 %v668, %v693
    %v708 = vsub.f32 %v673, %v696
    %v709 = vsub.f32 %v676, %v699
    %v710 = vsub.f32 %v681, %v702
    %v711 = vsub.f32 %v684, %v705
    %v712 = vmul.f32 %v706, 1.442695
    %v713 = vpow.pop %v712
    %v714 = vmul.f32 %v707, 1.442695
    %v715 = vpow.pop %v714
    %v716 = vmul.f32 %v708, 1.442695
    %v717 = vpow.pop %v716
    %v718 = vmul.f32 %v709, 1.442695
    %v719 = vpow.pop %v718
    %v720 = vmul.f32 %v710, 1.442695
    %v721 = vpow.pop %v720
    %v722 = vmul.f32 %v711, 1.442695
    %v723 = vpow.pop %v722
    %v724 = vsel %vm687, %v713, 0.0
    %725 = vadd.xlane.f32.xlu0 %v724
    %v726 = vpop.xlane.xlu0 %725
    %v727 = vsel %vm687, %v715, 0.0
    %728 = vadd.xlane.f32.xlu0 %v727
    %v729 = vpop.xlane.xlu0 %728
    %v730 = vsel %vm687, %v717, 0.0
    %731 = vadd.xlane.f32.xlu0 %v730
    %v732 = vpop.xlane.xlu0 %731
    %v733 = vsel %vm687, %v719, 0.0
    %734 = vadd.xlane.f32.xlu0 %v733
    %v735 = vpop.xlane.xlu0 %734
    %v736 = vsel %vm687, %v721, 0.0
    %737 = vadd.xlane.f32.xlu0 %v736
    %v738 = vpop.xlane.xlu0 %737
    %v739 = vsel %vm687, %v723, 0.0
    %740 = vadd.xlane.f32.xlu0 %v739
    %v741 = vpop.xlane.xlu0 %740
    %v742 = vrcp.pop %v726
    %v743 = vrcp.pop %v729
    %v744 = vrcp.pop %v732
    %v745 = vrcp.pop %v735
    %v746 = vrcp.pop %v738
    %v747 = vrcp.pop %v741
    %v748 = vmul.f32 %v713, %v742
    %v749 = vmul.f32 %v715, %v743
    %v750 = vmul.f32 %v717, %v744
    %v751 = vmul.f32 %v719, %v745
    %v752 = vmul.f32 %v721, %v746
    %v753 = vmul.f32 %v723, %v747
    %v754 = vpack.c.bf16 %v749, %v748
    %v755 = vpack.c.bf16 %v751, %v750
    %v756 = vpack.c.bf16 %v753, %v752
    %v758 = vsel %vm687, %v754, 0
    %v761 = vsel %vm687, %v755, 0
    %v764 = vsel %vm687, %v756, 0
    %766 = vmatprep.subr.bf16.mxu0 0
    %767 = vmatpush1.bf16.msra.mxu0 %v597
    %768 = vmatprep.subr.bf16.mxu0 0
    %769 = vmatpush1.bf16.msra.mxu0 %v599
    %770 = vmatprep.subr.bf16.mxu0 0
    %771 = vmatpush1.bf16.msra.mxu0 %v601
    %772 = vmatprep.subr.bf16.mxu0 0
    %773 = vmatpush1.bf16.msra.mxu0 0
    %774 = vmatprep.subr.bf16.mxu0 0
    %775 = vmatpush1.bf16.msra.mxu0 0
    %776 = vmatprep.subr.bf16.mxu0 0
    %777 = vmatpush1.bf16.msra.mxu0 0
    %778 = vmatprep.subr.bf16.mxu0 0
    %779 = vmatpush1.bf16.msra.mxu0 0
    %780 = vmatprep.subr.bf16.mxu0 0
    %781 = vmatpush1.bf16.msra.mxu0 0
    %782 = vmatprep.subr.bf16.mxu0 0
    %783 = vmatpush1.bf16.msra.mxu0 0
    %784 = vmatprep.subr.bf16.mxu0 0
    %785 = vmatpush1.bf16.msra.mxu0 0
    %786 = vmatprep.subr.bf16.mxu0 0
    %787 = vmatpush1.bf16.msra.mxu0 0
    %788 = vmatprep.subr.bf16.mxu0 0
    %789 = vmatpush1.bf16.msra.mxu0 0
    %790 = vmatprep.subr.bf16.mxu0 0
    %791 = vmatpush1.bf16.msra.mxu0 0
    %792 = vmatprep.subr.bf16.mxu0 0
    %793 = vmatpush1.bf16.msra.mxu0 0
    %794 = vmatprep.subr.bf16.mxu0 0
    %795 = vmatpush1.bf16.msra.mxu0 0
    %796 = vmatprep.subr.bf16.mxu0 0
    %797 = vmatpush1.bf16.msra.mxu0 0
    %798 = vmatprep.mubr.bf16.mxu0 0
    %799 = vmatmul.mubr.bf16.gmra.mrb[0].mxu0 %v758
    %v800 = vpop.f32.mrb[0].mxu0
    %v801 = vadd.f32 0.0, %v800
    %v802 = vpop.f32.mrb[0].mxu0
    %v803 = vpop.f32.mrb[0].mxu0
    %v804 = vadd.f32 0.0, %v803
    %v805 = vpop.f32.mrb[0].mxu0
    %806 = vmatprep.mubr.bf16.mxu0 0
    %807 = vmatmul.mubr.bf16.gmra.mrb[0].mxu0 %v761
    %v808 = vpop.f32.mrb[0].mxu0
    %v809 = vadd.f32 0.0, %v808
    %v810 = vpop.f32.mrb[0].mxu0
    %v811 = vpop.f32.mrb[0].mxu0
    %v812 = vadd.f32 0.0, %v811
    %v813 = vpop.f32.mrb[0].mxu0
    %814 = vmatprep.mubr.bf16.mxu0 0
    %815 = vmatmul.mubr.bf16.gmra.mrb[0].mxu0 %v764
    %v816 = vpop.f32.mrb[0].mxu0
    %v817 = vadd.f32 0.0, %v816
    %v818 = vpop.f32.mrb[0].mxu0
    %v819 = vpop.f32.mrb[0].mxu0
    %v820 = vadd.f32 0.0, %v819
    %v821 = vpop.f32.mrb[0].mxu0
    %822 = vdwg.mxu0
    %823 = vrot.lane.b32.xlu0 %v596, 112
    %v824 = vpop.permute.xlu0 %823
    %825 = vrot.lane.b32.xlu0 %v598, 112
    %v826 = vpop.permute.xlu0 %825
    %827 = vrot.lane.b32.xlu0 %v600, 112
    %v828 = vpop.permute.xlu0 %827
    %829 = vrot.lane.b32.xlu0 %v596, 48
    %v830 = vpop.permute.xlu0 %829
    %831 = vrot.lane.b32.xlu0 %v598, 48
    %v832 = vpop.permute.xlu0 %831
    %833 = vrot.lane.b32.xlu0 %v600, 48
    %v834 = vpop.permute.xlu0 %833
    %v836 = vsel %vm611, %v824, 0
    %v839 = vsel %vm611, %v826, 0
    %v842 = vsel %vm611, %v828, 0
    %v845 = vsel %vm611, %v830, 0
    %v848 = vsel %vm611, %v832, 0
    %v851 = vsel %vm611, %v834, 0
    %853 = vmatprep.subr.bf16.mxu0 0
    %854 = vmatpush1.bf16.xpose.msra.mxu0 %v845
    %855 = vmatprep.subr.bf16.mxu0 0
    %856 = vmatpush1.bf16.xpose.msra.mxu0 %v848
    %857 = vmatprep.subr.bf16.mxu0 0
    %858 = vmatpush1.bf16.xpose.msra.mxu0 %v851
    %859 = vmatprep.subr.bf16.mxu0 0
    %860 = vmatpush1.bf16.xpose.msra.mxu0 0
    %861 = vmatprep.subr.bf16.mxu0 0
    %862 = vmatpush1.bf16.xpose.msra.mxu0 0
    %863 = vmatprep.subr.bf16.mxu0 0
    %864 = vmatpush1.bf16.xpose.msra.mxu0 0
    %865 = vmatprep.subr.bf16.mxu0 0
    %866 = vmatpush1.bf16.xpose.msra.mxu0 0
    %867 = vmatprep.subr.bf16.mxu0 0
    %868 = vmatpush1.bf16.xpose.msra.mxu0 0
    %869 = vmatprep.subr.bf16.mxu0 0
    %870 = vmatpush1.bf16.xpose.msra.mxu0 0
    %871 = vmatprep.subr.bf16.mxu0 0
    %872 = vmatpush1.bf16.xpose.msra.mxu0 0
    %873 = vmatprep.subr.bf16.mxu0 0
    %874 = vmatpush1.bf16.xpose.msra.mxu0 0
    %875 = vmatprep.subr.bf16.mxu0 0
    %876 = vmatpush1.bf16.xpose.msra.mxu0 0
    %877 = vmatprep.subr.bf16.mxu0 0
    %878 = vmatpush1.bf16.xpose.msra.mxu0 0
    %879 = vmatprep.subr.bf16.mxu0 0
    %880 = vmatpush1.bf16.xpose.msra.mxu0 0
    %881 = vmatprep.subr.bf16.mxu0 0
    %882 = vmatpush1.bf16.xpose.msra.mxu0 0
    %883 = vmatprep.subr.bf16.mxu0 0
    %884 = vmatpush1.bf16.xpose.msra.mxu0 0
    %885 = vmatprep.mubr.bf16.mxu0 0
    %886 = vmatmul.mubr.bf16.gmra.mrb[0].mxu0 %v836
    %v887 = vpop.f32.mrb[0].mxu0
    %v888 = vadd.f32 %v351, %v887
    %v889 = vpop.f32.mrb[0].mxu0
    %v890 = vpop.f32.mrb[0].mxu0
    %v891 = vadd.f32 %v352, %v890
    %v892 = vpop.f32.mrb[0].mxu0
    %893 = vmatprep.mubr.bf16.mxu0 0
    %894 = vmatmul.mubr.bf16.gmra.mrb[0].mxu0 %v839
    %v895 = vpop.f32.mrb[0].mxu0
    %v896 = vadd.f32 %v353, %v895
    %v897 = vpop.f32.mrb[0].mxu0
    %v898 = vpop.f32.mrb[0].mxu0
    %v899 = vadd.f32 %v354, %v898
    %v900 = vpop.f32.mrb[0].mxu0
    %901 = vmatprep.mubr.bf16.mxu0 0
    %902 = vmatmul.mubr.bf16.gmra.mrb[0].mxu0 %v842
    %v903 = vpop.f32.mrb[0].mxu0
    %v904 = vadd.f32 %v355, %v903
    %v905 = vpop.f32.mrb[0].mxu0
    %v906 = vpop.f32.mrb[0].mxu0
    %v907 = vadd.f32 %v356, %v906
    %v908 = vpop.f32.mrb[0].mxu0
    %909 = vdwg.mxu0
    %v910 = vsel %vm687, %v888, -inf
    %911 = vmax.xlane.f32.xlu0 %v910
    %v912 = vpop.xlane.xlu0 %911
    %v913 = vsel %vm687, %v891, -inf
    %914 = vmax.xlane.f32.xlu0 %v913
    %v915 = vpop.xlane.xlu0 %914
    %v916 = vsel %vm687, %v896, -inf
    %917 = vmax.xlane.f32.xlu0 %v916
    %v918 = vpop.xlane.xlu0 %917
    %v919 = vsel %vm687, %v899, -inf
    %920 = vmax.xlane.f32.xlu0 %v919
    %v921 = vpop.xlane.xlu0 %920
    %v922 = vsel %vm687, %v904, -inf
    %923 = vmax.xlane.f32.xlu0 %v922
    %v924 = vpop.xlane.xlu0 %923
    %v925 = vsel %vm687, %v907, -inf
    %926 = vmax.xlane.f32.xlu0 %v925
    %v927 = vpop.xlane.xlu0 %926
    %v928 = vsub.f32 %v888, %v912
    %v929 = vsub.f32 %v891, %v915
    %v930 = vsub.f32 %v896, %v918
    %v931 = vsub.f32 %v899, %v921
    %v932 = vsub.f32 %v904, %v924
    %v933 = vsub.f32 %v907, %v927
    %v934 = vmul.f32 %v928, 1.442695
    %v935 = vpow.pop %v934
    %v936 = vmul.f32 %v929, 1.442695
    %v937 = vpow.pop %v936
    %v938 = vmul.f32 %v930, 1.442695
    %v939 = vpow.pop %v938
    %v940 = vmul.f32 %v931, 1.442695
    %v941 = vpow.pop %v940
    %v942 = vmul.f32 %v932, 1.442695
    %v943 = vpow.pop %v942
    %v944 = vmul.f32 %v933, 1.442695
    %v945 = vpow.pop %v944
    %v946 = vsel %vm687, %v935, 0.0
    %947 = vadd.xlane.f32.xlu0 %v946
    %v948 = vpop.xlane.xlu0 %947
    %v949 = vsel %vm687, %v937, 0.0
    %950 = vadd.xlane.f32.xlu0 %v949
    %v951 = vpop.xlane.xlu0 %950
    %v952 = vsel %vm687, %v939, 0.0
    %953 = vadd.xlane.f32.xlu0 %v952
    %v954 = vpop.xlane.xlu0 %953
    %v955 = vsel %vm687, %v941, 0.0
    %956 = vadd.xlane.f32.xlu0 %v955
    %v957 = vpop.xlane.xlu0 %956
    %v958 = vsel %vm687, %v943, 0.0
    %959 = vadd.xlane.f32.xlu0 %v958
    %v960 = vpop.xlane.xlu0 %959
    %v961 = vsel %vm687, %v945, 0.0
    %962 = vadd.xlane.f32.xlu0 %v961
    %v963 = vpop.xlane.xlu0 %962
    %v964 = vrcp.pop %v948
    %v965 = vrcp.pop %v951
    %v966 = vrcp.pop %v954
    %v967 = vrcp.pop %v957
    %v968 = vrcp.pop %v960
    %v969 = vrcp.pop %v963
    %v970 = vmul.f32 %v935, %v964
    %v971 = vmul.f32 %v937, %v965
    %v972 = vmul.f32 %v939, %v966
    %v973 = vmul.f32 %v941, %v967
    %v974 = vmul.f32 %v943, %v968
    %v975 = vmul.f32 %v945, %v969
    %v976 = vpack.c.bf16 %v971, %v970
    %v977 = vpack.c.bf16 %v973, %v972
    %v978 = vpack.c.bf16 %v975, %v974
    %982 = vrot.lane.b32.xlu0 %v597, 112
    %v983 = vpop.permute.xlu0 %982
    %984 = vrot.lane.b32.xlu0 %v599, 112
    %v985 = vpop.permute.xlu0 %984
    %986 = vrot.lane.b32.xlu0 %v601, 112
    %v987 = vpop.permute.xlu0 %986
    %v992 = vsel %vm687, %v976, 0
    %v995 = vsel %vm687, %v977, 0
    %v998 = vsel %vm687, %v978, 0
    %1000 = vmatprep.subr.bf16.mxu0 0
    %1001 = vmatpush1.bf16.msra.mxu0 %v983
    %1002 = vmatprep.subr.bf16.mxu0 0
    %1003 = vmatpush1.bf16.msra.mxu0 %v985
    %1004 = vmatprep.subr.bf16.mxu0 0
    %1005 = vmatpush1.bf16.msra.mxu0 %v987
    %1006 = vmatprep.subr.bf16.mxu0 0
    %1007 = vmatpush1.bf16.msra.mxu0 0
    %1008 = vmatprep.subr.bf16.mxu0 0
    %1009 = vmatpush1.bf16.msra.mxu0 0
    %1010 = vmatprep.subr.bf16.mxu0 0
    %1011 = vmatpush1.bf16.msra.mxu0 0
    %1012 = vmatprep.subr.bf16.mxu0 0
    %1013 = vmatpush1.bf16.msra.mxu0 0
    %1014 = vmatprep.subr.bf16.mxu0 0
    %1015 = vmatpush1.bf16.msra.mxu0 0
    %1016 = vmatprep.subr.bf16.mxu0 0
    %1017 = vmatpush1.bf16.msra.mxu0 0
    %1018 = vmatprep.subr.bf16.mxu0 0
    %1019 = vmatpush1.bf16.msra.mxu0 0
    %1020 = vmatprep.subr.bf16.mxu0 0
    %1021 = vmatpush1.bf16.msra.mxu0 0
    %1022 = vmatprep.subr.bf16.mxu0 0
    %1023 = vmatpush1.bf16.msra.mxu0 0
    %1024 = vmatprep.subr.bf16.mxu0 0
    %1025 = vmatpush1.bf16.msra.mxu0 0
    %1026 = vmatprep.subr.bf16.mxu0 0
    %1027 = vmatpush1.bf16.msra.mxu0 0
    %1028 = vmatprep.subr.bf16.mxu0 0
    %1029 = vmatpush1.bf16.msra.mxu0 0
    %1030 = vmatprep.subr.bf16.mxu0 0
    %1031 = vmatpush1.bf16.msra.mxu0 0
    %1032 = vmatprep.mubr.bf16.mxu0 0
    %1033 = vmatmul.mubr.bf16.gmra.mrb[0].mxu0 %v992
    %v1034 = vpop.f32.mrb[0].mxu0
    %v1035 = vadd.f32 0.0, %v1034
    %v1036 = vpop.f32.mrb[0].mxu0
    %v1037 = vpop.f32.mrb[0].mxu0
    %v1038 = vadd.f32 0.0, %v1037
    %v1039 = vpop.f32.mrb[0].mxu0
    %1040 = vmatprep.mubr.bf16.mxu0 0
    %1041 = vmatmul.mubr.bf16.gmra.mrb[0].mxu0 %v995
    %v1042 = vpop.f32.mrb[0].mxu0
    %v1043 = vadd.f32 0.0, %v1042
    %v1044 = vpop.f32.mrb[0].mxu0
    %v1045 = vpop.f32.mrb[0].mxu0
    %v1046 = vadd.f32 0.0, %v1045
    %v1047 = vpop.f32.mrb[0].mxu0
    %1048 = vmatprep.mubr.bf16.mxu0 0
    %1049 = vmatmul.mubr.bf16.gmra.mrb[0].mxu0 %v998
    %v1050 = vpop.f32.mrb[0].mxu0
    %v1051 = vadd.f32 0.0, %v1050
    %v1052 = vpop.f32.mrb[0].mxu0
    %v1053 = vpop.f32.mrb[0].mxu0
    %v1054 = vadd.f32 0.0, %v1053
    %v1055 = vpop.f32.mrb[0].mxu0
    %1056 = vdwg.mxu0
    %1057 = vrot.lane.b32.xlu0 %v596, 96
    %v1058 = vpop.permute.xlu0 %1057
    %1059 = vrot.lane.b32.xlu0 %v598, 96
    %v1060 = vpop.permute.xlu0 %1059
    %1061 = vrot.lane.b32.xlu0 %v600, 96
    %v1062 = vpop.permute.xlu0 %1061
    %1063 = vrot.lane.b32.xlu0 %v596, 32
    %v1064 = vpop.permute.xlu0 %1063
    %1065 = vrot.lane.b32.xlu0 %v598, 32
    %v1066 = vpop.permute.xlu0 %1065
    %1067 = vrot.lane.b32.xlu0 %v600, 32
    %v1068 = vpop.permute.xlu0 %1067
    %v1070 = vsel %vm611, %v1058, 0
    %v1073 = vsel %vm611, %v1060, 0
    %v1076 = vsel %vm611, %v1062, 0
    %v1079 = vsel %vm611, %v1064, 0
    %v1082 = vsel %vm611, %v1066, 0
    %v1085 = vsel %vm611, %v1068, 0
    %1087 = vmatprep.subr.bf16.mxu0 0
    %1088 = vmatpush1.bf16.xpose.msra.mxu0 %v1079
    %1089 = vmatprep.subr.bf16.mxu0 0
    %1090 = vmatpush1.bf16.xpose.msra.mxu0 %v1082
    %1091 = vmatprep.subr.bf16.mxu0 0
    %1092 = vmatpush1.bf16.xpose.msra.mxu0 %v1085
    %1093 = vmatprep.subr.bf16.mxu0 0
    %1094 = vmatpush1.bf16.xpose.msra.mxu0 0
    %1095 = vmatprep.subr.bf16.mxu0 0
    %1096 = vmatpush1.bf16.xpose.msra.mxu0 0
    %1097 = vmatprep.subr.bf16.mxu0 0
    %1098 = vmatpush1.bf16.xpose.msra.mxu0 0
    %1099 = vmatprep.subr.bf16.mxu0 0
    %1100 = vmatpush1.bf16.xpose.msra.mxu0 0
    %1101 = vmatprep.subr.bf16.mxu0 0
    %1102 = vmatpush1.bf16.xpose.msra.mxu0 0
    %1103 = vmatprep.subr.bf16.mxu0 0
    %1104 = vmatpush1.bf16.xpose.msra.mxu0 0
    %1105 = vmatprep.subr.bf16.mxu0 0
    %1106 = vmatpush1.bf16.xpose.msra.mxu0 0
    %1107 = vmatprep.subr.bf16.mxu0 0
    %1108 = vmatpush1.bf16.xpose.msra.mxu0 0
    %1109 = vmatprep.subr.bf16.mxu0 0
    %1110 = vmatpush1.bf16.xpose.msra.mxu0 0
    %1111 = vmatprep.subr.bf16.mxu0 0
    %1112 = vmatpush1.bf16.xpose.msra.mxu0 0
    %1113 = vmatprep.subr.bf16.mxu0 0
    %1114 = vmatpush1.bf16.xpose.msra.mxu0 0
    %1115 = vmatprep.subr.bf16.mxu0 0
    %1116 = vmatpush1.bf16.xpose.msra.mxu0 0
    %1117 = vmatprep.subr.bf16.mxu0 0
    %1118 = vmatpush1.bf16.xpose.msra.mxu0 0
    %1119 = vmatprep.mubr.bf16.mxu0 0
    %1120 = vmatmul.mubr.bf16.gmra.mrb[0].mxu0 %v1070
    %v1121 = vpop.f32.mrb[0].mxu0
    %v1122 = vadd.f32 %v351, %v1121
    %v1123 = vpop.f32.mrb[0].mxu0
    %v1124 = vpop.f32.mrb[0].mxu0
    %v1125 = vadd.f32 %v352, %v1124
    %v1126 = vpop.f32.mrb[0].mxu0
    %1127 = vmatprep.mubr.bf16.mxu0 0
    %1128 = vmatmul.mubr.bf16.gmra.mrb[0].mxu0 %v1073
    %v1129 = vpop.f32.mrb[0].mxu0
    %v1130 = vadd.f32 %v353, %v1129
    %v1131 = vpop.f32.mrb[0].mxu0
    %v1132 = vpop.f32.mrb[0].mxu0
    %v1133 = vadd.f32 %v354, %v1132
    %v1134 = vpop.f32.mrb[0].mxu0
    %1135 = vmatprep.mubr.bf16.mxu0 0
    %1136 = vmatmul.mubr.bf16.gmra.mrb[0].mxu0 %v1076
    %v1137 = vpop.f32.mrb[0].mxu0
    %v1138 = vadd.f32 %v355, %v1137
    %v1139 = vpop.f32.mrb[0].mxu0
    %v1140 = vpop.f32.mrb[0].mxu0
    %v1141 = vadd.f32 %v356, %v1140
    %v1142 = vpop.f32.mrb[0].mxu0
    %1143 = vdwg.mxu0
    %v1144 = vsel %vm687, %v1122, -inf
    %1145 = vmax.xlane.f32.xlu0 %v1144
    %v1146 = vpop.xlane.xlu0 %1145
    %v1147 = vsel %vm687, %v1125, -inf
    %1148 = vmax.xlane.f32.xlu0 %v1147
    %v1149 = vpop.xlane.xlu0 %1148
    %v1150 = vsel %vm687, %v1130, -inf
    %1151 = vmax.xlane.f32.xlu0 %v1150
    %v1152 = vpop.xlane.xlu0 %1151
    %v1153 = vsel %vm687, %v1133, -inf
    %1154 = vmax.xlane.f32.xlu0 %v1153
    %v1155 = vpop.xlane.xlu0 %1154
    %v1156 = vsel %vm687, %v1138, -inf
    %1157 = vmax.xlane.f32.xlu0 %v1156
    %v1158 = vpop.xlane.xlu0 %1157
    %v1159 = vsel %vm687, %v1141, -inf
    %1160 = vmax.xlane.f32.xlu0 %v1159
    %v1161 = vpop.xlane.xlu0 %1160
    %v1162 = vsub.f32 %v1122, %v1146
    %v1163 = vsub.f32 %v1125, %v1149
    %v1164 = vsub.f32 %v1130, %v1152
    %v1165 = vsub.f32 %v1133, %v1155
    %v1166 = vsub.f32 %v1138, %v1158
    %v1167 = vsub.f32 %v1141, %v1161
    %v1168 = vmul.f32 %v1162, 1.442695
    %v1169 = vpow.pop %v1168
    %v1170 = vmul.f32 %v1163, 1.442695
    %v1171 = vpow.pop %v1170
    %v1172 = vmul.f32 %v1164, 1.442695
    %v1173 = vpow.pop %v1172
    %v1174 = vmul.f32 %v1165, 1.442695
    %v1175 = vpow.pop %v1174
    %v1176 = vmul.f32 %v1166, 1.442695
    %v1177 = vpow.pop %v1176
    %v1178 = vmul.f32 %v1167, 1.442695
    %v1179 = vpow.pop %v1178
    %v1180 = vsel %vm687, %v1169, 0.0
    %1181 = vadd.xlane.f32.xlu0 %v1180
    %v1182 = vpop.xlane.xlu0 %1181
    %v1183 = vsel %vm687, %v1171, 0.0
    %1184 = vadd.xlane.f32.xlu0 %v1183
    %v1185 = vpop.xlane.xlu0 %1184
    %v1186 = vsel %vm687, %v1173, 0.0
    %1187 = vadd.xlane.f32.xlu0 %v1186
    %v1188 = vpop.xlane.xlu0 %1187
    %v1189 = vsel %vm687, %v1175, 0.0
    %1190 = vadd.xlane.f32.xlu0 %v1189
    %v1191 = vpop.xlane.xlu0 %1190
    %v1192 = vsel %vm687, %v1177, 0.0
    %1193 = vadd.xlane.f32.xlu0 %v1192
    %v1194 = vpop.xlane.xlu0 %1193
    %v1195 = vsel %vm687, %v1179, 0.0
    %1196 = vadd.xlane.f32.xlu0 %v1195
    %v1197 = vpop.xlane.xlu0 %1196
    %v1198 = vrcp.pop %v1182
    %v1199 = vrcp.pop %v1185
    %v1200 = vrcp.pop %v1188
    %v1201 = vrcp.pop %v1191
    %v1202 = vrcp.pop %v1194
    %v1203 = vrcp.pop %v1197
    %v1204 = vmul.f32 %v1169, %v1198
    %v1205 = vmul.f32 %v1171, %v1199
    %v1206 = vmul.f32 %v1173, %v1200
    %v1207 = vmul.f32 %v1175, %v1201
    %v1208 = vmul.f32 %v1177, %v1202
    %v1209 = vmul.f32 %v1179, %v1203
    %v1210 = vpack.c.bf16 %v1205, %v1204
    %v1211 = vpack.c.bf16 %v1207, %v1206
    %v1212 = vpack.c.bf16 %v1209, %v1208
    %1213 = vrot.lane.b32.xlu0 %v597, 96
    %v1214 = vpop.permute.xlu0 %1213
    %1215 = vrot.lane.b32.xlu0 %v599, 96
    %v1216 = vpop.permute.xlu0 %1215
    %1217 = vrot.lane.b32.xlu0 %v601, 96
    %v1218 = vpop.permute.xlu0 %1217
    %v1223 = vsel %vm687, %v1210, 0
    %v1226 = vsel %vm687, %v1211, 0
    %v1229 = vsel %vm687, %v1212, 0
    %1231 = vmatprep.subr.bf16.mxu0 0
    %1232 = vmatpush1.bf16.msra.mxu0 %v1214
    %1233 = vmatprep.subr.bf16.mxu0 0
    %1234 = vmatpush1.bf16.msra.mxu0 %v1216
    %1235 = vmatprep.subr.bf16.mxu0 0
    %1236 = vmatpush1.bf16.msra.mxu0 %v1218
    %1237 = vmatprep.subr.bf16.mxu0 0
    %1238 = vmatpush1.bf16.msra.mxu0 0
    %1239 = vmatprep.subr.bf16.mxu0 0
    %1240 = vmatpush1.bf16.msra.mxu0 0
    %1241 = vmatprep.subr.bf16.mxu0 0
    %1242 = vmatpush1.bf16.msra.mxu0 0
    %1243 = vmatprep.subr.bf16.mxu0 0
    %1244 = vmatpush1.bf16.msra.mxu0 0
    %1245 = vmatprep.subr.bf16.mxu0 0
    %1246 = vmatpush1.bf16.msra.mxu0 0
    %1247 = vmatprep.subr.bf16.mxu0 0
    %1248 = vmatpush1.bf16.msra.mxu0 0
    %1249 = vmatprep.subr.bf16.mxu0 0
    %1250 = vmatpush1.bf16.msra.mxu0 0
    %1251 = vmatprep.subr.bf16.mxu0 0
    %1252 = vmatpush1.bf16.msra.mxu0 0
    %1253 = vmatprep.subr.bf16.mxu0 0
    %1254 = vmatpush1.bf16.msra.mxu0 0
    %1255 = vmatprep.subr.bf16.mxu0 0
    %1256 = vmatpush1.bf16.msra.mxu0 0
    %1257 = vmatprep.subr.bf16.mxu0 0
    %1258 = vmatpush1.bf16.msra.mxu0 0
    %1259 = vmatprep.subr.bf16.mxu0 0
    %1260 = vmatpush1.bf16.msra.mxu0 0
    %1261 = vmatprep.subr.bf16.mxu0 0
    %1262 = vmatpush1.bf16.msra.mxu0 0
    %1263 = vmatprep.mubr.bf16.mxu0 0
    %1264 = vmatmul.mubr.bf16.gmra.mrb[0].mxu0 %v1223
    %v1265 = vpop.f32.mrb[0].mxu0
    %v1266 = vadd.f32 0.0, %v1265
    %v1267 = vpop.f32.mrb[0].mxu0
    %v1268 = vpop.f32.mrb[0].mxu0
    %v1269 = vadd.f32 0.0, %v1268
    %v1270 = vpop.f32.mrb[0].mxu0
    %1271 = vmatprep.mubr.bf16.mxu0 0
    %1272 = vmatmul.mubr.bf16.gmra.mrb[0].mxu0 %v1226
    %v1273 = vpop.f32.mrb[0].mxu0
    %v1274 = vadd.f32 0.0, %v1273
    %v1275 = vpop.f32.mrb[0].mxu0
    %v1276 = vpop.f32.mrb[0].mxu0
    %v1277 = vadd.f32 0.0, %v1276
    %v1278 = vpop.f32.mrb[0].mxu0
    %1279 = vmatprep.mubr.bf16.mxu0 0
    %1280 = vmatmul.mubr.bf16.gmra.mrb[0].mxu0 %v1229
    %v1281 = vpop.f32.mrb[0].mxu0
    %v1282 = vadd.f32 0.0, %v1281
    %v1283 = vpop.f32.mrb[0].mxu0
    %v1284 = vpop.f32.mrb[0].mxu0
    %v1285 = vadd.f32 0.0, %v1284
    %v1286 = vpop.f32.mrb[0].mxu0
    %1287 = vdwg.mxu0
    %1288 = vrot.lane.b32.xlu0 %v596, 80
    %v1289 = vpop.permute.xlu0 %1288
    %1290 = vrot.lane.b32.xlu0 %v598, 80
    %v1291 = vpop.permute.xlu0 %1290
    %1292 = vrot.lane.b32.xlu0 %v600, 80
    %v1293 = vpop.permute.xlu0 %1292
    %1294 = vrot.lane.b32.xlu0 %v596, 16
    %v1295 = vpop.permute.xlu0 %1294
    %1296 = vrot.lane.b32.xlu0 %v598, 16
    %v1297 = vpop.permute.xlu0 %1296
    %1298 = vrot.lane.b32.xlu0 %v600, 16
    %v1299 = vpop.permute.xlu0 %1298
    %v1301 = vsel %vm611, %v1289, 0
    %v1304 = vsel %vm611, %v1291, 0
    %v1307 = vsel %vm611, %v1293, 0
    %v1310 = vsel %vm611, %v1295, 0
    %v1313 = vsel %vm611, %v1297, 0
    %v1316 = vsel %vm611, %v1299, 0
    %1318 = vmatprep.subr.bf16.mxu0 0
    %1319 = vmatpush1.bf16.xpose.msra.mxu0 %v1310
    %1320 = vmatprep.subr.bf16.mxu0 0
    %1321 = vmatpush1.bf16.xpose.msra.mxu0 %v1313
    %1322 = vmatprep.subr.bf16.mxu0 0
    %1323 = vmatpush1.bf16.xpose.msra.mxu0 %v1316
    %1324 = vmatprep.subr.bf16.mxu0 0
    %1325 = vmatpush1.bf16.xpose.msra.mxu0 0
    %1326 = vmatprep.subr.bf16.mxu0 0
    %1327 = vmatpush1.bf16.xpose.msra.mxu0 0
    %1328 = vmatprep.subr.bf16.mxu0 0
    %1329 = vmatpush1.bf16.xpose.msra.mxu0 0
    %1330 = vmatprep.subr.bf16.mxu0 0
    %1331 = vmatpush1.bf16.xpose.msra.mxu0 0
    %1332 = vmatprep.subr.bf16.mxu0 0
    %1333 = vmatpush1.bf16.xpose.msra.mxu0 0
    %1334 = vmatprep.subr.bf16.mxu0 0
    %1335 = vmatpush1.bf16.xpose.msra.mxu0 0
    %1336 = vmatprep.subr.bf16.mxu0 0
    %1337 = vmatpush1.bf16.xpose.msra.mxu0 0
    %1338 = vmatprep.subr.bf16.mxu0 0
    %1339 = vmatpush1.bf16.xpose.msra.mxu0 0
    %1340 = vmatprep.subr.bf16.mxu0 0
    %1341 = vmatpush1.bf16.xpose.msra.mxu0 0
    %1342 = vmatprep.subr.bf16.mxu0 0
    %1343 = vmatpush1.bf16.xpose.msra.mxu0 0
    %1344 = vmatprep.subr.bf16.mxu0 0
    %1345 = vmatpush1.bf16.xpose.msra.mxu0 0
    %1346 = vmatprep.subr.bf16.mxu0 0
    %1347 = vmatpush1.bf16.xpose.msra.mxu0 0
    %1348 = vmatprep.subr.bf16.mxu0 0
    %1349 = vmatpush1.bf16.xpose.msra.mxu0 0
    %1350 = vmatprep.mubr.bf16.mxu0 0
    %1351 = vmatmul.mubr.bf16.gmra.mrb[0].mxu0 %v1301
    %v1352 = vpop.f32.mrb[0].mxu0
    %v1353 = vadd.f32 %v351, %v1352
    %v1354 = vpop.f32.mrb[0].mxu0
    %v1355 = vpop.f32.mrb[0].mxu0
    %v1356 = vadd.f32 %v352, %v1355
    %v1357 = vpop.f32.mrb[0].mxu0
    %1358 = vmatprep.mubr.bf16.mxu0 0
    %1359 = vmatmul.mubr.bf16.gmra.mrb[0].mxu0 %v1304
    %v1360 = vpop.f32.mrb[0].mxu0
    %v1361 = vadd.f32 %v353, %v1360
    %v1362 = vpop.f32.mrb[0].mxu0
    %v1363 = vpop.f32.mrb[0].mxu0
    %v1364 = vadd.f32 %v354, %v1363
    %v1365 = vpop.f32.mrb[0].mxu0
    %1366 = vmatprep.mubr.bf16.mxu0 0
    %1367 = vmatmul.mubr.bf16.gmra.mrb[0].mxu0 %v1307
    %v1368 = vpop.f32.mrb[0].mxu0
    %v1369 = vadd.f32 %v355, %v1368
    %v1370 = vpop.f32.mrb[0].mxu0
    %v1371 = vpop.f32.mrb[0].mxu0
    %v1372 = vadd.f32 %v356, %v1371
    %v1373 = vpop.f32.mrb[0].mxu0
    %1374 = vdwg.mxu0
    %v1375 = vsel %vm687, %v1353, -inf
    %1376 = vmax.xlane.f32.xlu0 %v1375
    %v1377 = vpop.xlane.xlu0 %1376
    %v1378 = vsel %vm687, %v1356, -inf
    %1379 = vmax.xlane.f32.xlu0 %v1378
    %v1380 = vpop.xlane.xlu0 %1379
    %v1381 = vsel %vm687, %v1361, -inf
    %1382 = vmax.xlane.f32.xlu0 %v1381
    %v1383 = vpop.xlane.xlu0 %1382
    %v1384 = vsel %vm687, %v1364, -inf
    %1385 = vmax.xlane.f32.xlu0 %v1384
    %v1386 = vpop.xlane.xlu0 %1385
    %v1387 = vsel %vm687, %v1369, -inf
    %1388 = vmax.xlane.f32.xlu0 %v1387
    %v1389 = vpop.xlane.xlu0 %1388
    %v1390 = vsel %vm687, %v1372, -inf
    %1391 = vmax.xlane.f32.xlu0 %v1390
    %v1392 = vpop.xlane.xlu0 %1391
    %v1393 = vsub.f32 %v1353, %v1377
    %v1394 = vsub.f32 %v1356, %v1380
    %v1395 = vsub.f32 %v1361, %v1383
    %v1396 = vsub.f32 %v1364, %v1386
    %v1397 = vsub.f32 %v1369, %v1389
    %v1398 = vsub.f32 %v1372, %v1392
    %v1399 = vmul.f32 %v1393, 1.442695
    %v1400 = vpow.pop %v1399
    %v1401 = vmul.f32 %v1394, 1.442695
    %v1402 = vpow.pop %v1401
    %v1403 = vmul.f32 %v1395, 1.442695
    %v1404 = vpow.pop %v1403
    %v1405 = vmul.f32 %v1396, 1.442695
    %v1406 = vpow.pop %v1405
    %v1407 = vmul.f32 %v1397, 1.442695
    %v1408 = vpow.pop %v1407
    %v1409 = vmul.f32 %v1398, 1.442695
    %v1410 = vpow.pop %v1409
    %v1411 = vsel %vm687, %v1400, 0.0
    %1412 = vadd.xlane.f32.xlu0 %v1411
    %v1413 = vpop.xlane.xlu0 %1412
    %v1414 = vsel %vm687, %v1402, 0.0
    %1415 = vadd.xlane.f32.xlu0 %v1414
    %v1416 = vpop.xlane.xlu0 %1415
    %v1417 = vsel %vm687, %v1404, 0.0
    %1418 = vadd.xlane.f32.xlu0 %v1417
    %v1419 = vpop.xlane.xlu0 %1418
    %v1420 = vsel %vm687, %v1406, 0.0
    %1421 = vadd.xlane.f32.xlu0 %v1420
    %v1422 = vpop.xlane.xlu0 %1421
    %v1423 = vsel %vm687, %v1408, 0.0
    %1424 = vadd.xlane.f32.xlu0 %v1423
    %v1425 = vpop.xlane.xlu0 %1424
    %v1426 = vsel %vm687, %v1410, 0.0
    %1427 = vadd.xlane.f32.xlu0 %v1426
    %v1428 = vpop.xlane.xlu0 %1427
    %v1429 = vrcp.pop %v1413
    %v1430 = vrcp.pop %v1416
    %v1431 = vrcp.pop %v1419
    %v1432 = vrcp.pop %v1422
    %v1433 = vrcp.pop %v1425
    %v1434 = vrcp.pop %v1428
    %v1435 = vmul.f32 %v1400, %v1429
    %v1436 = vmul.f32 %v1402, %v1430
    %v1437 = vmul.f32 %v1404, %v1431
    %v1438 = vmul.f32 %v1406, %v1432
    %v1439 = vmul.f32 %v1408, %v1433
    %v1440 = vmul.f32 %v1410, %v1434
    %v1441 = vpack.c.bf16 %v1436, %v1435
    %v1442 = vpack.c.bf16 %v1438, %v1437
    %v1443 = vpack.c.bf16 %v1440, %v1439
    %1444 = vrot.lane.b32.xlu0 %v597, 80
    %v1445 = vpop.permute.xlu0 %1444
    %1446 = vrot.lane.b32.xlu0 %v599, 80
    %v1447 = vpop.permute.xlu0 %1446
    %1448 = vrot.lane.b32.xlu0 %v601, 80
    %v1449 = vpop.permute.xlu0 %1448
    %v1454 = vsel %vm687, %v1441, 0
    %v1457 = vsel %vm687, %v1442, 0
    %v1460 = vsel %vm687, %v1443, 0
    %1462 = vmatprep.subr.bf16.mxu0 0
    %1463 = vmatpush1.bf16.msra.mxu0 %v1445
    %1464 = vmatprep.subr.bf16.mxu0 0
    %1465 = vmatpush1.bf16.msra.mxu0 %v1447
    %1466 = vmatprep.subr.bf16.mxu0 0
    %1467 = vmatpush1.bf16.msra.mxu0 %v1449
    %1468 = vmatprep.subr.bf16.mxu0 0
    %1469 = vmatpush1.bf16.msra.mxu0 0
    %1470 = vmatprep.subr.bf16.mxu0 0
    %1471 = vmatpush1.bf16.msra.mxu0 0
    %1472 = vmatprep.subr.bf16.mxu0 0
    %1473 = vmatpush1.bf16.msra.mxu0 0
    %1474 = vmatprep.subr.bf16.mxu0 0
    %1475 = vmatpush1.bf16.msra.mxu0 0
    %1476 = vmatprep.subr.bf16.mxu0 0
    %1477 = vmatpush1.bf16.msra.mxu0 0
    %1478 = vmatprep.subr.bf16.mxu0 0
    %1479 = vmatpush1.bf16.msra.mxu0 0
    %1480 = vmatprep.subr.bf16.mxu0 0
    %1481 = vmatpush1.bf16.msra.mxu0 0
    %1482 = vmatprep.subr.bf16.mxu0 0
    %1483 = vmatpush1.bf16.msra.mxu0 0
    %1484 = vmatprep.subr.bf16.mxu0 0
    %1485 = vmatpush1.bf16.msra.mxu0 0
    %1486 = vmatprep.subr.bf16.mxu0 0
    %1487 = vmatpush1.bf16.msra.mxu0 0
    %1488 = vmatprep.subr.bf16.mxu0 0
    %1489 = vmatpush1.bf16.msra.mxu0 0
    %1490 = vmatprep.subr.bf16.mxu0 0
    %1491 = vmatpush1.bf16.msra.mxu0 0
    %1492 = vmatprep.subr.bf16.mxu0 0
    %1493 = vmatpush1.bf16.msra.mxu0 0
    %1494 = vmatprep.mubr.bf16.mxu0 0
    %1495 = vmatmul.mubr.bf16.gmra.mrb[0].mxu0 %v1454
    %v1496 = vpop.f32.mrb[0].mxu0
    %v1497 = vadd.f32 0.0, %v1496
    %v1498 = vpop.f32.mrb[0].mxu0
    %v1499 = vpop.f32.mrb[0].mxu0
    %v1500 = vadd.f32 0.0, %v1499
    %v1501 = vpop.f32.mrb[0].mxu0
    %1502 = vmatprep.mubr.bf16.mxu0 0
    %1503 = vmatmul.mubr.bf16.gmra.mrb[0].mxu0 %v1457
    %v1504 = vpop.f32.mrb[0].mxu0
    %v1505 = vadd.f32 0.0, %v1504
    %v1506 = vpop.f32.mrb[0].mxu0
    %v1507 = vpop.f32.mrb[0].mxu0
    %v1508 = vadd.f32 0.0, %v1507
    %v1509 = vpop.f32.mrb[0].mxu0
    %1510 = vmatprep.mubr.bf16.mxu0 0
    %1511 = vmatmul.mubr.bf16.gmra.mrb[0].mxu0 %v1460
    %v1512 = vpop.f32.mrb[0].mxu0
    %v1513 = vadd.f32 0.0, %v1512
    %v1514 = vpop.f32.mrb[0].mxu0
    %v1515 = vpop.f32.mrb[0].mxu0
    %v1516 = vadd.f32 0.0, %v1515
    %v1517 = vpop.f32.mrb[0].mxu0
    %1518 = vdwg.mxu0
    %1525 = vrot.lane.b32.xlu0 %v1035, 16
    %v1526 = vpop.permute.xlu0 %1525
    %1527 = vrot.lane.b32.xlu0 %v1038, 16
    %v1528 = vpop.permute.xlu0 %1527
    %1529 = vrot.lane.b32.xlu0 %v1043, 16
    %v1530 = vpop.permute.xlu0 %1529
    %1531 = vrot.lane.b32.xlu0 %v1046, 16
    %v1532 = vpop.permute.xlu0 %1531
    %1533 = vrot.lane.b32.xlu0 %v1051, 16
    %v1534 = vpop.permute.xlu0 %1533
    %1535 = vrot.lane.b32.xlu0 %v1054, 16
    %v1536 = vpop.permute.xlu0 %1535
    %1549 = vrot.lane.b32.xlu0 %v1266, 32
    %v1550 = vpop.permute.xlu0 %1549
    %1551 = vrot.lane.b32.xlu0 %v1269, 32
    %v1552 = vpop.permute.xlu0 %1551
    %1553 = vrot.lane.b32.xlu0 %v1274, 32
    %v1554 = vpop.permute.xlu0 %1553
    %1555 = vrot.lane.b32.xlu0 %v1277, 32
    %v1556 = vpop.permute.xlu0 %1555
    %1557 = vrot.lane.b32.xlu0 %v1282, 32
    %v1558 = vpop.permute.xlu0 %1557
    %1559 = vrot.lane.b32.xlu0 %v1285, 32
    %v1560 = vpop.permute.xlu0 %1559
    %1573 = vrot.lane.b32.xlu0 %v1497, 48
    %v1574 = vpop.permute.xlu0 %1573
    %1575 = vrot.lane.b32.xlu0 %v1500, 48
    %v1576 = vpop.permute.xlu0 %1575
    %1577 = vrot.lane.b32.xlu0 %v1505, 48
    %v1578 = vpop.permute.xlu0 %1577
    %1579 = vrot.lane.b32.xlu0 %v1508, 48
    %v1580 = vpop.permute.xlu0 %1579
    %1581 = vrot.lane.b32.xlu0 %v1513, 48
    %v1582 = vpop.permute.xlu0 %1581
    %1583 = vrot.lane.b32.xlu0 %v1516, 48
    %v1584 = vpop.permute.xlu0 %1583
    %v1591 = vsel %vm611, %v801, %v1526
    %v1592 = vsel %vm611, %v804, %v1528
    %v1593 = vsel %vm611, %v809, %v1530
    %v1594 = vsel %vm611, %v812, %v1532
    %v1595 = vsel %vm611, %v817, %v1534
    %v1596 = vsel %vm611, %v820, %v1536
    %vm1597 = vcmask 261120
    %v1598 = vsel %vm1597, %v1591, %v1550
    %v1599 = vsel %vm1597, %v1592, %v1552
    %v1600 = vsel %vm1597, %v1593, %v1554
    %v1601 = vsel %vm1597, %v1594, %v1556
    %v1602 = vsel %vm1597, %v1595, %v1558
    %v1603 = vsel %vm1597, %v1596, %v1560
    %v1604 = vsel %vm687, %v1598, %v1574
    %v1605 = vsel %vm687, %v1599, %v1576
    %v1606 = vsel %vm687, %v1600, %v1578
    %v1607 = vsel %vm687, %v1601, %v1580
    %v1608 = vsel %vm687, %v1602, %v1582
    %v1609 = vsel %vm687, %v1603, %v1584
    %v1610 = vpack.c.bf16 %v1605, %v1604
    %v1611 = vpack.c.bf16 %v1607, %v1606
    %v1612 = vpack.c.bf16 %v1609, %v1608
    %v1613 = vld [vmem:[%s10] sm:$0xf]
    %v1614 = vld [vmem:[%s10 + $0x4] sm:$0xf]
    %v1615 = vld [vmem:[%s10 + $0x8] sm:$0xf]
    %v1616 = vld [vmem:[%s10 + $0xc] sm:$0xf]
    %v1617 = vld [vmem:[%s10 + $0x10] sm:$0xf]
    %v1618 = vld [vmem:[%s10 + $0x14] sm:$0xf]
    %v1619 = vld [vmem:[%s10 + $0x18] sm:$0xf]
    %v1620 = vld [vmem:[%s10 + $0x1c] sm:$0xf]
    %v1629 = vunpack.c.l.b16 %v1613
    %v1630 = vunpack.c.l.b16 %v1614
    %v1631 = vunpack.c.l.b16 %v1615
    %v1632 = vunpack.c.l.b16 %v1616
    %v1633 = vunpack.c.l.b16 %v1617
    %v1634 = vunpack.c.l.b16 %v1618
    %v1635 = vunpack.c.l.b16 %v1619
    %v1636 = vunpack.c.l.b16 %v1620
    %v1637 = vpack.c.b16 %v1630, %v1629
    %v1638 = vpack.c.b16 %v1632, %v1631
    %v1639 = vpack.c.b16 %v1634, %v1633
    %v1640 = vpack.c.b16 %v1636, %v1635
    %v1646 = vsel %vm178, %v1610, 0
    %v1649 = vsel %vm178, %v1611, 0
    %v1652 = vsel %vm178, %v1612, 0
    %1654 = vmatprep.subr.bf16.mxu0 0
    %1655 = vmatpush1.bf16.msra.mxu0 %v1637
    %1656 = vmatprep.subr.bf16.mxu0 0
    %1657 = vmatpush1.bf16.msra.mxu0 %v1638
    %1658 = vmatprep.subr.bf16.mxu0 0
    %1659 = vmatpush1.bf16.msra.mxu0 %v1639
    %1660 = vmatprep.subr.bf16.mxu0 0
    %1661 = vmatpush1.bf16.msra.mxu0 %v1640
    %1662 = vmatprep.subr.bf16.mxu0 0
    %1663 = vmatpush1.bf16.msra.mxu0 0
    %1664 = vmatprep.subr.bf16.mxu0 0
    %1665 = vmatpush1.bf16.msra.mxu0 0
    %1666 = vmatprep.subr.bf16.mxu0 0
    %1667 = vmatpush1.bf16.msra.mxu0 0
    %1668 = vmatprep.subr.bf16.mxu0 0
    %1669 = vmatpush1.bf16.msra.mxu0 0
    %1670 = vmatprep.subr.bf16.mxu0 0
    %1671 = vmatpush1.bf16.msra.mxu0 0
    %1672 = vmatprep.subr.bf16.mxu0 0
    %1673 = vmatpush1.bf16.msra.mxu0 0
    %1674 = vmatprep.subr.bf16.mxu0 0
    %1675 = vmatpush1.bf16.msra.mxu0 0
    %1676 = vmatprep.subr.bf16.mxu0 0
    %1677 = vmatpush1.bf16.msra.mxu0 0
    %1678 = vmatprep.subr.bf16.mxu0 0
    %1679 = vmatpush1.bf16.msra.mxu0 0
    %1680 = vmatprep.subr.bf16.mxu0 0
    %1681 = vmatpush1.bf16.msra.mxu0 0
    %1682 = vmatprep.subr.bf16.mxu0 0
    %1683 = vmatpush1.bf16.msra.mxu0 0
    %1684 = vmatprep.subr.bf16.mxu0 0
    %1685 = vmatpush1.bf16.msra.mxu0 0
    %1686 = vmatprep.mubr.bf16.mxu0 0
    %1687 = vmatmul.mubr.bf16.gmra.mrb[0].mxu0 %v1646
    %v1688 = vpop.f32.mrb[0].mxu0
    %v1689 = vadd.f32 0.0, %v1688
    %v1690 = vpop.f32.mrb[0].mxu0
    %v1691 = vpop.f32.mrb[0].mxu0
    %v1692 = vadd.f32 0.0, %v1691
    %v1693 = vpop.f32.mrb[0].mxu0
    %1694 = vmatprep.mubr.bf16.mxu0 0
    %1695 = vmatmul.mubr.bf16.gmra.mrb[0].mxu0 %v1649
    %v1696 = vpop.f32.mrb[0].mxu0
    %v1697 = vadd.f32 0.0, %v1696
    %v1698 = vpop.f32.mrb[0].mxu0
    %v1699 = vpop.f32.mrb[0].mxu0
    %v1700 = vadd.f32 0.0, %v1699
    %v1701 = vpop.f32.mrb[0].mxu0
    %1702 = vmatprep.mubr.bf16.mxu0 0
    %1703 = vmatmul.mubr.bf16.gmra.mrb[0].mxu0 %v1652
    %v1704 = vpop.f32.mrb[0].mxu0
    %v1705 = vadd.f32 0.0, %v1704
    %v1706 = vpop.f32.mrb[0].mxu0
    %v1707 = vpop.f32.mrb[0].mxu0
    %v1708 = vadd.f32 0.0, %v1707
    %v1709 = vpop.f32.mrb[0].mxu0
    %1710 = vdwg.mxu0
    %v1711 = vadd.f32 %v345, %v1689
    %v1712 = vadd.f32 %v346, %v1692
    %v1713 = vadd.f32 %v347, %v1697
    %v1714 = vadd.f32 %v348, %v1700
    %v1715 = vadd.f32 %v349, %v1705
    %v1716 = vadd.f32 %v350, %v1708
    %v1717 = vld [vmem:[%s11] sm:$0x1]
    %v1719 = vlaneseq
    %v1720 = vshrl.u32 %v1719, 7
    %v1721 = vsub.s32 0, %v1720
    %v1722 = vrot.slane %v1717, %v1721
    %v1724 = vadd.f32 %v1711, %v1722
    %v1725 = vadd.f32 %v1712, %v1722
    %v1726 = vadd.f32 %v1713, %v1722
    %v1727 = vadd.f32 %v1714, %v1722
    %v1728 = vadd.f32 %v1715, %v1722
    %v1729 = vadd.f32 %v1716, %v1722
    %v1730 = vld [vmem:[%s12] sm:$0x1]
    %v1731 = vld [vmem:[%s13] sm:$0x1]
    %v1732 = vsel %vm178, %v1724, 0.0
    %1733 = vadd.xlane.f32.xlu0 %v1732
    %v1734 = vpop.xlane.xlu0 %1733
    %v1735 = vsel %vm178, %v1725, 0.0
    %1736 = vadd.xlane.f32.xlu0 %v1735
    %v1737 = vpop.xlane.xlu0 %1736
    %v1738 = vsel %vm178, %v1726, 0.0
    %1739 = vadd.xlane.f32.xlu0 %v1738
    %v1740 = vpop.xlane.xlu0 %1739
    %v1741 = vsel %vm178, %v1727, 0.0
    %1742 = vadd.xlane.f32.xlu0 %v1741
    %v1743 = vpop.xlane.xlu0 %1742
    %v1744 = vsel %vm178, %v1728, 0.0
    %1745 = vadd.xlane.f32.xlu0 %v1744
    %v1746 = vpop.xlane.xlu0 %1745
    %v1747 = vsel %vm178, %v1729, 0.0
    %1748 = vadd.xlane.f32.xlu0 %v1747
    %v1749 = vpop.xlane.xlu0 %1748
    %v1750 = vmul.f32 %v1734, %v266
    %v1751 = vmul.f32 %v1737, %v266
    %v1752 = vmul.f32 %v1740, %v266
    %v1753 = vmul.f32 %v1743, %v266
    %v1754 = vmul.f32 %v1746, %v266
    %v1755 = vmul.f32 %v1749, %v266
    %v1756 = vsub.f32 %v1724, %v1750
    %v1757 = vsub.f32 %v1725, %v1751
    %v1758 = vsub.f32 %v1726, %v1752
    %v1759 = vsub.f32 %v1727, %v1753
    %v1760 = vsub.f32 %v1728, %v1754
    %v1761 = vsub.f32 %v1729, %v1755
    %v1762 = vmul.f32 %v1756, %v1756
    %v1763 = vmul.f32 %v1757, %v1757
    %v1764 = vmul.f32 %v1758, %v1758
    %v1765 = vmul.f32 %v1759, %v1759
    %v1766 = vmul.f32 %v1760, %v1760
    %v1767 = vmul.f32 %v1761, %v1761
    %v1768 = vsel %vm178, %v1762, 0.0
    %1769 = vadd.xlane.f32.xlu0 %v1768
    %v1770 = vpop.xlane.xlu0 %1769
    %v1771 = vsel %vm178, %v1763, 0.0
    %1772 = vadd.xlane.f32.xlu0 %v1771
    %v1773 = vpop.xlane.xlu0 %1772
    %v1774 = vsel %vm178, %v1764, 0.0
    %1775 = vadd.xlane.f32.xlu0 %v1774
    %v1776 = vpop.xlane.xlu0 %1775
    %v1777 = vsel %vm178, %v1765, 0.0
    %1778 = vadd.xlane.f32.xlu0 %v1777
    %v1779 = vpop.xlane.xlu0 %1778
    %v1780 = vsel %vm178, %v1766, 0.0
    %1781 = vadd.xlane.f32.xlu0 %v1780
    %v1782 = vpop.xlane.xlu0 %1781
    %v1783 = vsel %vm178, %v1767, 0.0
    %1784 = vadd.xlane.f32.xlu0 %v1783
    %v1785 = vpop.xlane.xlu0 %1784
    %v1786 = vmul.f32 %v1770, %v266
    %v1787 = vmul.f32 %v1773, %v266
    %v1788 = vmul.f32 %v1776, %v266
    %v1789 = vmul.f32 %v1779, %v266
    %v1790 = vmul.f32 %v1782, %v266
    %v1791 = vmul.f32 %v1785, %v266
    %v1792 = vadd.f32 %v1786, 1e-05
    %v1793 = vadd.f32 %v1787, 1e-05
    %v1794 = vadd.f32 %v1788, 1e-05
    %v1795 = vadd.f32 %v1789, 1e-05
    %v1796 = vadd.f32 %v1790, 1e-05
    %v1797 = vadd.f32 %v1791, 1e-05
    %v1798 = vrsqrt.pop %v1792
    %v1799 = vrsqrt.pop %v1793
    %v1800 = vrsqrt.pop %v1794
    %v1801 = vrsqrt.pop %v1795
    %v1802 = vrsqrt.pop %v1796
    %v1803 = vrsqrt.pop %v1797
    %v1804 = vmul.f32 %v1756, %v1798
    %v1805 = vmul.f32 %v1757, %v1799
    %v1806 = vmul.f32 %v1758, %v1800
    %v1807 = vmul.f32 %v1759, %v1801
    %v1808 = vmul.f32 %v1760, %v1802
    %v1809 = vmul.f32 %v1761, %v1803
    %v1811 = vlaneseq
    %v1812 = vshrl.u32 %v1811, 7
    %v1813 = vsub.s32 0, %v1812
    %v1814 = vrot.slane %v1730, %v1813
    %v1816 = vmul.f32 %v1804, %v1814
    %v1817 = vmul.f32 %v1805, %v1814
    %v1818 = vmul.f32 %v1806, %v1814
    %v1819 = vmul.f32 %v1807, %v1814
    %v1820 = vmul.f32 %v1808, %v1814
    %v1821 = vmul.f32 %v1809, %v1814
    %v1823 = vlaneseq
    %v1824 = vshrl.u32 %v1823, 7
    %v1825 = vsub.s32 0, %v1824
    %v1826 = vrot.slane %v1731, %v1825
    %v1828 = vadd.f32 %v1816, %v1826
    %v1829 = vadd.f32 %v1817, %v1826
    %v1830 = vadd.f32 %v1818, %v1826
    %v1831 = vadd.f32 %v1819, %v1826
    %v1832 = vadd.f32 %v1820, %v1826
    %v1833 = vadd.f32 %v1821, %v1826
    %v1834 = vld [vmem:[%s14] sm:$0xff]
    %v1835 = vld [vmem:[%s14 + $0x8] sm:$0xff]
    %v1836 = vld [vmem:[%s14 + $0x10] sm:$0xff]
    %v1837 = vld [vmem:[%s14 + $0x18] sm:$0xff]
    %v1838 = vld [vmem:[%s14 + $0x20] sm:$0xff]
    %v1839 = vld [vmem:[%s14 + $0x28] sm:$0xff]
    %v1840 = vld [vmem:[%s14 + $0x30] sm:$0xff]
    %v1841 = vld [vmem:[%s14 + $0x38] sm:$0xff]
    %v1842 = vpack.c.bf16 %v1829, %v1828
    %v1843 = vpack.c.bf16 %v1831, %v1830
    %v1844 = vpack.c.bf16 %v1833, %v1832
    %v1845 = vld [vmem:[%s15] sm:$0x3]
    %v1847 = vlaneseq
    %v1848 = vshrl.u32 %v1847, 7
    %v1849 = vsub.s32 0, %v1848
    %v1850 = vrot.slane %v1845, %v1849
    %v1851 = vlaneseq
    %v1852 = vshrl.u32 %v1851, 7
    %v1853 = vsub.s32 1, %v1852
    %v1854 = vrot.slane %v1845, %v1853
    %v1865 = vunpack.c.l.b16 %v1834
    %v1866 = vunpack.c.h.b16 %v1834
    %v1867 = vunpack.c.l.b16 %v1835
    %v1868 = vunpack.c.h.b16 %v1835
    %v1869 = vunpack.c.l.b16 %v1836
    %v1870 = vunpack.c.h.b16 %v1836
    %v1871 = vunpack.c.l.b16 %v1837
    %v1872 = vunpack.c.h.b16 %v1837
    %v1873 = vunpack.c.l.b16 %v1838
    %v1874 = vunpack.c.h.b16 %v1838
    %v1875 = vunpack.c.l.b16 %v1839
    %v1876 = vunpack.c.h.b16 %v1839
    %v1877 = vunpack.c.l.b16 %v1840
    %v1878 = vunpack.c.h.b16 %v1840
    %v1879 = vunpack.c.l.b16 %v1841
    %v1880 = vunpack.c.h.b16 %v1841
    %v1881 = vpack.c.b16 %v1867, %v1865
    %v1882 = vpack.c.b16 %v1868, %v1866
    %v1883 = vpack.c.b16 %v1871, %v1869
    %v1884 = vpack.c.b16 %v1872, %v1870
    %v1885 = vpack.c.b16 %v1875, %v1873
    %v1886 = vpack.c.b16 %v1876, %v1874
    %v1887 = vpack.c.b16 %v1879, %v1877
    %v1888 = vpack.c.b16 %v1880, %v1878
    %v1898 = vsel %vm178, %v1842, 0
    %v1901 = vsel %vm178, %v1843, 0
    %v1904 = vsel %vm178, %v1844, 0
    %1906 = vmatprep.subr.bf16.mxu0 %v1882
    %1907 = vmatpush1.bf16.msra.mxu0 %v1881
    %1908 = vmatprep.subr.bf16.mxu0 %v1884
    %1909 = vmatpush1.bf16.msra.mxu0 %v1883
    %1910 = vmatprep.subr.bf16.mxu0 %v1886
    %1911 = vmatpush1.bf16.msra.mxu0 %v1885
    %1912 = vmatprep.subr.bf16.mxu0 %v1888
    %1913 = vmatpush1.bf16.msra.mxu0 %v1887
    %1914 = vmatprep.subr.bf16.mxu0 0
    %1915 = vmatpush1.bf16.msra.mxu0 0
    %1916 = vmatprep.subr.bf16.mxu0 0
    %1917 = vmatpush1.bf16.msra.mxu0 0
    %1918 = vmatprep.subr.bf16.mxu0 0
    %1919 = vmatpush1.bf16.msra.mxu0 0
    %1920 = vmatprep.subr.bf16.mxu0 0
    %1921 = vmatpush1.bf16.msra.mxu0 0
    %1922 = vmatprep.subr.bf16.mxu0 0
    %1923 = vmatpush1.bf16.msra.mxu0 0
    %1924 = vmatprep.subr.bf16.mxu0 0
    %1925 = vmatpush1.bf16.msra.mxu0 0
    %1926 = vmatprep.subr.bf16.mxu0 0
    %1927 = vmatpush1.bf16.msra.mxu0 0
    %1928 = vmatprep.subr.bf16.mxu0 0
    %1929 = vmatpush1.bf16.msra.mxu0 0
    %1930 = vmatprep.subr.bf16.mxu0 0
    %1931 = vmatpush1.bf16.msra.mxu0 0
    %1932 = vmatprep.subr.bf16.mxu0 0
    %1933 = vmatpush1.bf16.msra.mxu0 0
    %1934 = vmatprep.subr.bf16.mxu0 0
    %1935 = vmatpush1.bf16.msra.mxu0 0
    %1936 = vmatprep.subr.bf16.mxu0 0
    %1937 = vmatpush1.bf16.msra.mxu0 0
    %1938 = vmatprep.mubr.bf16.mxu0 0
    %1939 = vmatmul.mubr.bf16.gmra.mrb[0].mxu0 %v1898
    %v1940 = vpop.f32.mrb[0].mxu0
    %v1941 = vadd.f32 %v1850, %v1940
    %v1942 = vpop.f32.mrb[0].mxu0
    %v1943 = vadd.f32 %v1854, %v1942
    %v1944 = vpop.f32.mrb[0].mxu0
    %v1945 = vadd.f32 %v1850, %v1944
    %v1946 = vpop.f32.mrb[0].mxu0
    %v1947 = vadd.f32 %v1854, %v1946
    %1948 = vmatprep.mubr.bf16.mxu0 0
    %1949 = vmatmul.mubr.bf16.gmra.mrb[0].mxu0 %v1901
    %v1950 = vpop.f32.mrb[0].mxu0
    %v1951 = vadd.f32 %v1850, %v1950
    %v1952 = vpop.f32.mrb[0].mxu0
    %v1953 = vadd.f32 %v1854, %v1952
    %v1954 = vpop.f32.mrb[0].mxu0
    %v1955 = vadd.f32 %v1850, %v1954
    %v1956 = vpop.f32.mrb[0].mxu0
    %v1957 = vadd.f32 %v1854, %v1956
    %1958 = vmatprep.mubr.bf16.mxu0 0
    %1959 = vmatmul.mubr.bf16.gmra.mrb[0].mxu0 %v1904
    %v1960 = vpop.f32.mrb[0].mxu0
    %v1961 = vadd.f32 %v1850, %v1960
    %v1962 = vpop.f32.mrb[0].mxu0
    %v1963 = vadd.f32 %v1854, %v1962
    %v1964 = vpop.f32.mrb[0].mxu0
    %v1965 = vadd.f32 %v1850, %v1964
    %v1966 = vpop.f32.mrb[0].mxu0
    %v1967 = vadd.f32 %v1854, %v1966
    %1968 = vdwg.mxu0
    %v1969 = vmul.f32 %v1941, 1.702
    %v1970 = vmul.f32 %v1943, 1.702
    %v1971 = vmul.f32 %v1945, 1.702
    %v1972 = vmul.f32 %v1947, 1.702
    %v1973 = vmul.f32 %v1951, 1.702
    %v1974 = vmul.f32 %v1953, 1.702
    %v1975 = vmul.f32 %v1955, 1.702
    %v1976 = vmul.f32 %v1957, 1.702
    %v1977 = vmul.f32 %v1961, 1.702
    %v1978 = vmul.f32 %v1963, 1.702
    %v1979 = vmul.f32 %v1965, 1.702
    %v1980 = vmul.f32 %v1967, 1.702
    %v1981 = vxor.u32 %v1969, 2147483648
    %v1982 = vxor.u32 %v1970, 2147483648
    %v1983 = vxor.u32 %v1971, 2147483648
    %v1984 = vxor.u32 %v1972, 2147483648
    %v1985 = vxor.u32 %v1973, 2147483648
    %v1986 = vxor.u32 %v1974, 2147483648
    %v1987 = vxor.u32 %v1975, 2147483648
    %v1988 = vxor.u32 %v1976, 2147483648
    %v1989 = vxor.u32 %v1977, 2147483648
    %v1990 = vxor.u32 %v1978, 2147483648
    %v1991 = vxor.u32 %v1979, 2147483648
    %v1992 = vxor.u32 %v1980, 2147483648
    %v1993 = vmul.f32 %v1981, 1.442695
    %v1994 = vpow.pop %v1993
    %v1995 = vmul.f32 %v1982, 1.442695
    %v1996 = vpow.pop %v1995
    %v1997 = vmul.f32 %v1983, 1.442695
    %v1998 = vpow.pop %v1997
    %v1999 = vmul.f32 %v1984, 1.442695
    %v2000 = vpow.pop %v1999
    %v2001 = vmul.f32 %v1985, 1.442695
    %v2002 = vpow.pop %v2001
    %v2003 = vmul.f32 %v1986, 1.442695
    %v2004 = vpow.pop %v2003
    %v2005 = vmul.f32 %v1987, 1.442695
    %v2006 = vpow.pop %v2005
    %v2007 = vmul.f32 %v1988, 1.442695
    %v2008 = vpow.pop %v2007
    %v2009 = vmul.f32 %v1989, 1.442695
    %v2010 = vpow.pop %v2009
    %v2011 = vmul.f32 %v1990, 1.442695
    %v2012 = vpow.pop %v2011
    %v2013 = vmul.f32 %v1991, 1.442695
    %v2014 = vpow.pop %v2013
    %v2015 = vmul.f32 %v1992, 1.442695
    %v2016 = vpow.pop %v2015
    %v2017 = vadd.f32 %v1994, 1.0
    %v2018 = vadd.f32 %v1996, 1.0
    %v2019 = vadd.f32 %v1998, 1.0
    %v2020 = vadd.f32 %v2000, 1.0
    %v2021 = vadd.f32 %v2002, 1.0
    %v2022 = vadd.f32 %v2004, 1.0
    %v2023 = vadd.f32 %v2006, 1.0
    %v2024 = vadd.f32 %v2008, 1.0
    %v2025 = vadd.f32 %v2010, 1.0
    %v2026 = vadd.f32 %v2012, 1.0
    %v2027 = vadd.f32 %v2014, 1.0
    %v2028 = vadd.f32 %v2016, 1.0
    %v2029 = vrcp.pop %v2017
    %v2030 = vmul.f32 1.0, %v2029
    %v2031 = vrcp.pop %v2018
    %v2032 = vmul.f32 1.0, %v2031
    %v2033 = vrcp.pop %v2019
    %v2034 = vmul.f32 1.0, %v2033
    %v2035 = vrcp.pop %v2020
    %v2036 = vmul.f32 1.0, %v2035
    %v2037 = vrcp.pop %v2021
    %v2038 = vmul.f32 1.0, %v2037
    %v2039 = vrcp.pop %v2022
    %v2040 = vmul.f32 1.0, %v2039
    %v2041 = vrcp.pop %v2023
    %v2042 = vmul.f32 1.0, %v2041
    %v2043 = vrcp.pop %v2024
    %v2044 = vmul.f32 1.0, %v2043
    %v2045 = vrcp.pop %v2025
    %v2046 = vmul.f32 1.0, %v2045
    %v2047 = vrcp.pop %v2026
    %v2048 = vmul.f32 1.0, %v2047
    %v2049 = vrcp.pop %v2027
    %v2050 = vmul.f32 1.0, %v2049
    %v2051 = vrcp.pop %v2028
    %v2052 = vmul.f32 1.0, %v2051
    %v2053 = vmul.f32 %v1941, %v2030
    %v2054 = vmul.f32 %v1943, %v2032
    %v2055 = vmul.f32 %v1945, %v2034
    %v2056 = vmul.f32 %v1947, %v2036
    %v2057 = vmul.f32 %v1951, %v2038
    %v2058 = vmul.f32 %v1953, %v2040
    %v2059 = vmul.f32 %v1955, %v2042
    %v2060 = vmul.f32 %v1957, %v2044
    %v2061 = vmul.f32 %v1961, %v2046
    %v2062 = vmul.f32 %v1963, %v2048
    %v2063 = vmul.f32 %v1965, %v2050
    %v2064 = vmul.f32 %v1967, %v2052
    %v2065 = vld [vmem:[%s16] sm:$0xf]
    %v2066 = vld [vmem:[%s16 + $0x4] sm:$0xf]
    %v2067 = vld [vmem:[%s16 + $0x8] sm:$0xf]
    %v2068 = vld [vmem:[%s16 + $0xc] sm:$0xf]
    %v2069 = vld [vmem:[%s16 + $0x10] sm:$0xf]
    %v2070 = vld [vmem:[%s16 + $0x14] sm:$0xf]
    %v2071 = vld [vmem:[%s16 + $0x18] sm:$0xf]
    %v2072 = vld [vmem:[%s16 + $0x1c] sm:$0xf]
    %v2073 = vld [vmem:[%s16 + $0x20] sm:$0xf]
    %v2074 = vld [vmem:[%s16 + $0x24] sm:$0xf]
    %v2075 = vld [vmem:[%s16 + $0x28] sm:$0xf]
    %v2076 = vld [vmem:[%s16 + $0x2c] sm:$0xf]
    %v2077 = vld [vmem:[%s16 + $0x30] sm:$0xf]
    %v2078 = vld [vmem:[%s16 + $0x34] sm:$0xf]
    %v2079 = vld [vmem:[%s16 + $0x38] sm:$0xf]
    %v2080 = vld [vmem:[%s16 + $0x3c] sm:$0xf]
    %v2081 = vld [vmem:[%s16 + $0x40] sm:$0xf]
    %v2082 = vld [vmem:[%s16 + $0x44] sm:$0xf]
    %v2083 = vld [vmem:[%s16 + $0x48] sm:$0xf]
    %v2084 = vld [vmem:[%s16 + $0x4c] sm:$0xf]
    %v2085 = vld [vmem:[%s16 + $0x50] sm:$0xf]
    %v2086 = vld [vmem:[%s16 + $0x54] sm:$0xf]
    %v2087 = vld [vmem:[%s16 + $0x58] sm:$0xf]
    %v2088 = vld [vmem:[%s16 + $0x5c] sm:$0xf]
    %v2089 = vld [vmem:[%s16 + $0x60] sm:$0xf]
    %v2090 = vld [vmem:[%s16 + $0x64] sm:$0xf]
    %v2091 = vld [vmem:[%s16 + $0x68] sm:$0xf]
    %v2092 = vld [vmem:[%s16 + $0x6c] sm:$0xf]
    %v2093 = vld [vmem:[%s16 + $0x70] sm:$0xf]
    %v2094 = vld [vmem:[%s16 + $0x74] sm:$0xf]
    %v2095 = vld [vmem:[%s16 + $0x78] sm:$0xf]
    %v2096 = vld [vmem:[%s16 + $0x7c] sm:$0xf]
    %v2097 = vpack.c.bf16 %v2055, %v2053
    %v2098 = vpack.c.bf16 %v2056, %v2054
    %v2099 = vpack.c.bf16 %v2059, %v2057
    %v2100 = vpack.c.bf16 %v2060, %v2058
    %v2101 = vpack.c.bf16 %v2063, %v2061
    %v2102 = vpack.c.bf16 %v2064, %v2062
    %v2135 = vunpack.c.l.b16 %v2065
    %v2136 = vunpack.c.l.b16 %v2066
    %v2137 = vunpack.c.l.b16 %v2067
    %v2138 = vunpack.c.l.b16 %v2068
    %v2139 = vunpack.c.l.b16 %v2069
    %v2140 = vunpack.c.l.b16 %v2070
    %v2141 = vunpack.c.l.b16 %v2071
    %v2142 = vunpack.c.l.b16 %v2072
    %v2143 = vunpack.c.l.b16 %v2073
    %v2144 = vunpack.c.l.b16 %v2074
    %v2145 = vunpack.c.l.b16 %v2075
    %v2146 = vunpack.c.l.b16 %v2076
    %v2147 = vunpack.c.l.b16 %v2077
    %v2148 = vunpack.c.l.b16 %v2078
    %v2149 = vunpack.c.l.b16 %v2079
    %v2150 = vunpack.c.l.b16 %v2080
    %v2151 = vunpack.c.l.b16 %v2081
    %v2152 = vunpack.c.l.b16 %v2082
    %v2153 = vunpack.c.l.b16 %v2083
    %v2154 = vunpack.c.l.b16 %v2084
    %v2155 = vunpack.c.l.b16 %v2085
    %v2156 = vunpack.c.l.b16 %v2086
    %v2157 = vunpack.c.l.b16 %v2087
    %v2158 = vunpack.c.l.b16 %v2088
    %v2159 = vunpack.c.l.b16 %v2089
    %v2160 = vunpack.c.l.b16 %v2090
    %v2161 = vunpack.c.l.b16 %v2091
    %v2162 = vunpack.c.l.b16 %v2092
    %v2163 = vunpack.c.l.b16 %v2093
    %v2164 = vunpack.c.l.b16 %v2094
    %v2165 = vunpack.c.l.b16 %v2095
    %v2166 = vunpack.c.l.b16 %v2096
    %v2167 = vpack.c.b16 %v2136, %v2135
    %v2168 = vpack.c.b16 %v2138, %v2137
    %v2169 = vpack.c.b16 %v2140, %v2139
    %v2170 = vpack.c.b16 %v2142, %v2141
    %v2171 = vpack.c.b16 %v2144, %v2143
    %v2172 = vpack.c.b16 %v2146, %v2145
    %v2173 = vpack.c.b16 %v2148, %v2147
    %v2174 = vpack.c.b16 %v2150, %v2149
    %v2175 = vpack.c.b16 %v2152, %v2151
    %v2176 = vpack.c.b16 %v2154, %v2153
    %v2177 = vpack.c.b16 %v2156, %v2155
    %v2178 = vpack.c.b16 %v2158, %v2157
    %v2179 = vpack.c.b16 %v2160, %v2159
    %v2180 = vpack.c.b16 %v2162, %v2161
    %v2181 = vpack.c.b16 %v2164, %v2163
    %v2182 = vpack.c.b16 %v2166, %v2165
    %2199 = vmatprep.subr.bf16.mxu0 0
    %2200 = vmatpush1.bf16.msra.mxu0 %v2167
    %2201 = vmatprep.subr.bf16.mxu0 0
    %2202 = vmatpush1.bf16.msra.mxu0 %v2168
    %2203 = vmatprep.subr.bf16.mxu0 0
    %2204 = vmatpush1.bf16.msra.mxu0 %v2169
    %2205 = vmatprep.subr.bf16.mxu0 0
    %2206 = vmatpush1.bf16.msra.mxu0 %v2170
    %2207 = vmatprep.subr.bf16.mxu0 0
    %2208 = vmatpush1.bf16.msra.mxu0 %v2171
    %2209 = vmatprep.subr.bf16.mxu0 0
    %2210 = vmatpush1.bf16.msra.mxu0 %v2172
    %2211 = vmatprep.subr.bf16.mxu0 0
    %2212 = vmatpush1.bf16.msra.mxu0 %v2173
    %2213 = vmatprep.subr.bf16.mxu0 0
    %2214 = vmatpush1.bf16.msra.mxu0 %v2174
    %2215 = vmatprep.subr.bf16.mxu0 0
    %2216 = vmatpush1.bf16.msra.mxu0 %v2175
    %2217 = vmatprep.subr.bf16.mxu0 0
    %2218 = vmatpush1.bf16.msra.mxu0 %v2176
    %2219 = vmatprep.subr.bf16.mxu0 0
    %2220 = vmatpush1.bf16.msra.mxu0 %v2177
    %2221 = vmatprep.subr.bf16.mxu0 0
    %2222 = vmatpush1.bf16.msra.mxu0 %v2178
    %2223 = vmatprep.subr.bf16.mxu0 0
    %2224 = vmatpush1.bf16.msra.mxu0 %v2179
    %2225 = vmatprep.subr.bf16.mxu0 0
    %2226 = vmatpush1.bf16.msra.mxu0 %v2180
    %2227 = vmatprep.subr.bf16.mxu0 0
    %2228 = vmatpush1.bf16.msra.mxu0 %v2181
    %2229 = vmatprep.subr.bf16.mxu0 0
    %2230 = vmatpush1.bf16.msra.mxu0 %v2182
    %2231 = vmatprep.mubr.bf16.mxu0 %v2098
    %2232 = vmatmul.mubr.bf16.gmra.mrb[0].mxu0 %v2097
    %v2233 = vpop.f32.mrb[0].mxu0
    %v2234 = vadd.f32 0.0, %v2233
    %v2235 = vpop.f32.mrb[0].mxu0
    %v2236 = vpop.f32.mrb[0].mxu0
    %v2237 = vadd.f32 0.0, %v2236
    %v2238 = vpop.f32.mrb[0].mxu0
    %2239 = vmatprep.mubr.bf16.mxu0 %v2100
    %2240 = vmatmul.mubr.bf16.gmra.mrb[0].mxu0 %v2099
    %v2241 = vpop.f32.mrb[0].mxu0
    %v2242 = vadd.f32 0.0, %v2241
    %v2243 = vpop.f32.mrb[0].mxu0
    %v2244 = vpop.f32.mrb[0].mxu0
    %v2245 = vadd.f32 0.0, %v2244
    %v2246 = vpop.f32.mrb[0].mxu0
    %2247 = vmatprep.mubr.bf16.mxu0 %v2102
    %2248 = vmatmul.mubr.bf16.gmra.mrb[0].mxu0 %v2101
    %v2249 = vpop.f32.mrb[0].mxu0
    %v2250 = vadd.f32 0.0, %v2249
    %v2251 = vpop.f32.mrb[0].mxu0
    %v2252 = vpop.f32.mrb[0].mxu0
    %v2253 = vadd.f32 0.0, %v2252
    %v2254 = vpop.f32.mrb[0].mxu0
    %2255 = vdwg.mxu0
    %v2256 = vadd.f32 %v1724, %v2234
    %v2257 = vadd.f32 %v1725, %v2237
    %v2258 = vadd.f32 %v1726, %v2242
    %v2259 = vadd.f32 %v1727, %v2245
    %v2260 = vadd.f32 %v1728, %v2250
    %v2261 = vadd.f32 %v1729, %v2253
    %v2262 = vld [vmem:[%s17] sm:$0x1]
    %v2264 = vlaneseq
    %v2265 = vshrl.u32 %v2264, 7
    %v2266 = vsub.s32 0, %v2265
    %v2267 = vrot.slane %v2262, %v2266
    %v2269 = vadd.f32 %v2256, %v2267
    %v2270 = vadd.f32 %v2257, %v2267
    %v2271 = vadd.f32 %v2258, %v2267
    %v2272 = vadd.f32 %v2259, %v2267
    %v2273 = vadd.f32 %v2260, %v2267
    %v2274 = vadd.f32 %v2261, %v2267
    %s2275 = scalar_lea.vmem %s6, 1
    %v2276 = vld [vmem:[%s2275] sm:$0x1]
    %s2277 = scalar_lea.vmem %s7, 1
    %v2278 = vld [vmem:[%s2277] sm:$0x1]
    %v2279 = vsel %vm178, %v2269, 0.0
    %2280 = vadd.xlane.f32.xlu0 %v2279
    %v2281 = vpop.xlane.xlu0 %2280
    %v2282 = vsel %vm178, %v2270, 0.0
    %2283 = vadd.xlane.f32.xlu0 %v2282
    %v2284 = vpop.xlane.xlu0 %2283
    %v2285 = vsel %vm178, %v2271, 0.0
    %2286 = vadd.xlane.f32.xlu0 %v2285
    %v2287 = vpop.xlane.xlu0 %2286
    %v2288 = vsel %vm178, %v2272, 0.0
    %2289 = vadd.xlane.f32.xlu0 %v2288
    %v2290 = vpop.xlane.xlu0 %2289
    %v2291 = vsel %vm178, %v2273, 0.0
    %2292 = vadd.xlane.f32.xlu0 %v2291
    %v2293 = vpop.xlane.xlu0 %2292
    %v2294 = vsel %vm178, %v2274, 0.0
    %2295 = vadd.xlane.f32.xlu0 %v2294
    %v2296 = vpop.xlane.xlu0 %2295
    %v2297 = vmul.f32 %v2281, %v266
    %v2298 = vmul.f32 %v2284, %v266
    %v2299 = vmul.f32 %v2287, %v266
    %v2300 = vmul.f32 %v2290, %v266
    %v2301 = vmul.f32 %v2293, %v266
    %v2302 = vmul.f32 %v2296, %v266
    %v2303 = vsub.f32 %v2269, %v2297
    %v2304 = vsub.f32 %v2270, %v2298
    %v2305 = vsub.f32 %v2271, %v2299
    %v2306 = vsub.f32 %v2272, %v2300
    %v2307 = vsub.f32 %v2273, %v2301
    %v2308 = vsub.f32 %v2274, %v2302
    %v2309 = vmul.f32 %v2303, %v2303
    %v2310 = vmul.f32 %v2304, %v2304
    %v2311 = vmul.f32 %v2305, %v2305
    %v2312 = vmul.f32 %v2306, %v2306
    %v2313 = vmul.f32 %v2307, %v2307
    %v2314 = vmul.f32 %v2308, %v2308
    %v2315 = vsel %vm178, %v2309, 0.0
    %2316 = vadd.xlane.f32.xlu0 %v2315
    %v2317 = vpop.xlane.xlu0 %2316
    %v2318 = vsel %vm178, %v2310, 0.0
    %2319 = vadd.xlane.f32.xlu0 %v2318
    %v2320 = vpop.xlane.xlu0 %2319
    %v2321 = vsel %vm178, %v2311, 0.0
    %2322 = vadd.xlane.f32.xlu0 %v2321
    %v2323 = vpop.xlane.xlu0 %2322
    %v2324 = vsel %vm178, %v2312, 0.0
    %2325 = vadd.xlane.f32.xlu0 %v2324
    %v2326 = vpop.xlane.xlu0 %2325
    %v2327 = vsel %vm178, %v2313, 0.0
    %2328 = vadd.xlane.f32.xlu0 %v2327
    %v2329 = vpop.xlane.xlu0 %2328
    %v2330 = vsel %vm178, %v2314, 0.0
    %2331 = vadd.xlane.f32.xlu0 %v2330
    %v2332 = vpop.xlane.xlu0 %2331
    %v2333 = vmul.f32 %v2317, %v266
    %v2334 = vmul.f32 %v2320, %v266
    %v2335 = vmul.f32 %v2323, %v266
    %v2336 = vmul.f32 %v2326, %v266
    %v2337 = vmul.f32 %v2329, %v266
    %v2338 = vmul.f32 %v2332, %v266
    %v2339 = vadd.f32 %v2333, 1e-05
    %v2340 = vadd.f32 %v2334, 1e-05
    %v2341 = vadd.f32 %v2335, 1e-05
    %v2342 = vadd.f32 %v2336, 1e-05
    %v2343 = vadd.f32 %v2337, 1e-05
    %v2344 = vadd.f32 %v2338, 1e-05
    %v2345 = vrsqrt.pop %v2339
    %v2346 = vrsqrt.pop %v2340
    %v2347 = vrsqrt.pop %v2341
    %v2348 = vrsqrt.pop %v2342
    %v2349 = vrsqrt.pop %v2343
    %v2350 = vrsqrt.pop %v2344
    %v2351 = vmul.f32 %v2303, %v2345
    %v2352 = vmul.f32 %v2304, %v2346
    %v2353 = vmul.f32 %v2305, %v2347
    %v2354 = vmul.f32 %v2306, %v2348
    %v2355 = vmul.f32 %v2307, %v2349
    %v2356 = vmul.f32 %v2308, %v2350
    %v2358 = vlaneseq
    %v2359 = vshrl.u32 %v2358, 7
    %v2360 = vsub.s32 0, %v2359
    %v2361 = vrot.slane %v2276, %v2360
    %v2363 = vmul.f32 %v2351, %v2361
    %v2364 = vmul.f32 %v2352, %v2361
    %v2365 = vmul.f32 %v2353, %v2361
    %v2366 = vmul.f32 %v2354, %v2361
    %v2367 = vmul.f32 %v2355, %v2361
    %v2368 = vmul.f32 %v2356, %v2361
    %v2370 = vlaneseq
    %v2371 = vshrl.u32 %v2370, 7
    %v2372 = vsub.s32 0, %v2371
    %v2373 = vrot.slane %v2278, %v2372
    %v2375 = vadd.f32 %v2363, %v2373
    %v2376 = vadd.f32 %v2364, %v2373
    %v2377 = vadd.f32 %v2365, %v2373
    %v2378 = vadd.f32 %v2366, %v2373
    %v2379 = vadd.f32 %v2367, %v2373
    %v2380 = vadd.f32 %v2368, %v2373
    %s2381 = scalar_lea.vmem %s8, 64
    %v2382 = vld [vmem:[%s2381] sm:$0xff]
    %v2383 = vld [vmem:[%s2381 + $0x8] sm:$0xff]
    %v2384 = vld [vmem:[%s2381 + $0x10] sm:$0xff]
    %v2385 = vld [vmem:[%s2381 + $0x18] sm:$0xff]
    %v2386 = vld [vmem:[%s2381 + $0x20] sm:$0xff]
    %v2387 = vld [vmem:[%s2381 + $0x28] sm:$0xff]
    %v2388 = vld [vmem:[%s2381 + $0x30] sm:$0xff]
    %v2389 = vld [vmem:[%s2381 + $0x38] sm:$0xff]
    %v2390 = vpack.c.bf16 %v2376, %v2375
    %v2391 = vpack.c.bf16 %v2378, %v2377
    %v2392 = vpack.c.bf16 %v2380, %v2379
    %s2393 = scalar_lea.vmem %s9, 2
    %v2394 = vld [vmem:[%s2393] sm:$0x3]
    %v2396 = vlaneseq
    %v2397 = vshrl.u32 %v2396, 7
    %v2398 = vsub.s32 0, %v2397
    %v2399 = vrot.slane %v2394, %v2398
    %v2400 = vlaneseq
    %v2401 = vshrl.u32 %v2400, 7
    %v2402 = vsub.s32 1, %v2401
    %v2403 = vrot.slane %v2394, %v2402
    %v2414 = vunpack.c.l.b16 %v2382
    %v2415 = vunpack.c.h.b16 %v2382
    %v2416 = vunpack.c.l.b16 %v2383
    %v2417 = vunpack.c.h.b16 %v2383
    %v2418 = vunpack.c.l.b16 %v2384
    %v2419 = vunpack.c.h.b16 %v2384
    %v2420 = vunpack.c.l.b16 %v2385
    %v2421 = vunpack.c.h.b16 %v2385
    %v2422 = vunpack.c.l.b16 %v2386
    %v2423 = vunpack.c.h.b16 %v2386
    %v2424 = vunpack.c.l.b16 %v2387
    %v2425 = vunpack.c.h.b16 %v2387
    %v2426 = vunpack.c.l.b16 %v2388
    %v2427 = vunpack.c.h.b16 %v2388
    %v2428 = vunpack.c.l.b16 %v2389
    %v2429 = vunpack.c.h.b16 %v2389
    %v2430 = vpack.c.b16 %v2416, %v2414
    %v2431 = vpack.c.b16 %v2417, %v2415
    %v2432 = vpack.c.b16 %v2420, %v2418
    %v2433 = vpack.c.b16 %v2421, %v2419
    %v2434 = vpack.c.b16 %v2424, %v2422
    %v2435 = vpack.c.b16 %v2425, %v2423
    %v2436 = vpack.c.b16 %v2428, %v2426
    %v2437 = vpack.c.b16 %v2429, %v2427
    %v2447 = vsel %vm178, %v2390, 0
    %v2450 = vsel %vm178, %v2391, 0
    %v2453 = vsel %vm178, %v2392, 0
    %2455 = vmatprep.subr.bf16.mxu0 %v2431
    %2456 = vmatpush1.bf16.msra.mxu0 %v2430
    %2457 = vmatprep.subr.bf16.mxu0 %v2433
    %2458 = vmatpush1.bf16.msra.mxu0 %v2432
    %2459 = vmatprep.subr.bf16.mxu0 %v2435
    %2460 = vmatpush1.bf16.msra.mxu0 %v2434
    %2461 = vmatprep.subr.bf16.mxu0 %v2437
    %2462 = vmatpush1.bf16.msra.mxu0 %v2436
    %2463 = vmatprep.subr.bf16.mxu0 0
    %2464 = vmatpush1.bf16.msra.mxu0 0
    %2465 = vmatprep.subr.bf16.mxu0 0
    %2466 = vmatpush1.bf16.msra.mxu0 0
    %2467 = vmatprep.subr.bf16.mxu0 0
    %2468 = vmatpush1.bf16.msra.mxu0 0
    %2469 = vmatprep.subr.bf16.mxu0 0
    %2470 = vmatpush1.bf16.msra.mxu0 0
    %2471 = vmatprep.subr.bf16.mxu0 0
    %2472 = vmatpush1.bf16.msra.mxu0 0
    %2473 = vmatprep.subr.bf16.mxu0 0
    %2474 = vmatpush1.bf16.msra.mxu0 0
    %2475 = vmatprep.subr.bf16.mxu0 0
    %2476 = vmatpush1.bf16.msra.mxu0 0
    %2477 = vmatprep.subr.bf16.mxu0 0
    %2478 = vmatpush1.bf16.msra.mxu0 0
    %2479 = vmatprep.subr.bf16.mxu0 0
    %2480 = vmatpush1.bf16.msra.mxu0 0
    %2481 = vmatprep.subr.bf16.mxu0 0
    %2482 = vmatpush1.bf16.msra.mxu0 0
    %2483 = vmatprep.subr.bf16.mxu0 0
    %2484 = vmatpush1.bf16.msra.mxu0 0
    %2485 = vmatprep.subr.bf16.mxu0 0
    %2486 = vmatpush1.bf16.msra.mxu0 0
    %2487 = vmatprep.mubr.bf16.mxu0 0
    %2488 = vmatmul.mubr.bf16.gmra.mrb[0].mxu0 %v2447
    %v2489 = vpop.f32.mrb[0].mxu0
    %v2490 = vadd.f32 %v2399, %v2489
    %v2491 = vpop.f32.mrb[0].mxu0
    %v2492 = vadd.f32 %v2403, %v2491
    %v2493 = vpop.f32.mrb[0].mxu0
    %v2494 = vadd.f32 %v2399, %v2493
    %v2495 = vpop.f32.mrb[0].mxu0
    %v2496 = vadd.f32 %v2403, %v2495
    %2497 = vmatprep.mubr.bf16.mxu0 0
    %2498 = vmatmul.mubr.bf16.gmra.mrb[0].mxu0 %v2450
    %v2499 = vpop.f32.mrb[0].mxu0
    %v2500 = vadd.f32 %v2399, %v2499
    %v2501 = vpop.f32.mrb[0].mxu0
    %v2502 = vadd.f32 %v2403, %v2501
    %v2503 = vpop.f32.mrb[0].mxu0
    %v2504 = vadd.f32 %v2399, %v2503
    %v2505 = vpop.f32.mrb[0].mxu0
    %v2506 = vadd.f32 %v2403, %v2505
    %2507 = vmatprep.mubr.bf16.mxu0 0
    %2508 = vmatmul.mubr.bf16.gmra.mrb[0].mxu0 %v2453
    %v2509 = vpop.f32.mrb[0].mxu0
    %v2510 = vadd.f32 %v2399, %v2509
    %v2511 = vpop.f32.mrb[0].mxu0
    %v2512 = vadd.f32 %v2403, %v2511
    %v2513 = vpop.f32.mrb[0].mxu0
    %v2514 = vadd.f32 %v2399, %v2513
    %v2515 = vpop.f32.mrb[0].mxu0
    %v2516 = vadd.f32 %v2403, %v2515
    %2517 = vdwg.mxu0
    %v2518 = vpack.c.bf16 %v2494, %v2490
    %v2519 = vpack.c.bf16 %v2496, %v2492
    %v2520 = vpack.c.bf16 %v2504, %v2500
    %v2521 = vpack.c.bf16 %v2506, %v2502
    %v2522 = vpack.c.bf16 %v2514, %v2510
    %v2523 = vpack.c.bf16 %v2516, %v2512
    %2527 = vrot.lane.b32.xlu0 %v2518, 64
    %v2528 = vpop.permute.xlu0 %2527
    %2529 = vrot.lane.b32.xlu0 %v2520, 64
    %v2530 = vpop.permute.xlu0 %2529
    %2531 = vrot.lane.b32.xlu0 %v2522, 64
    %v2532 = vpop.permute.xlu0 %2531
    %v2534 = vsel %vm611, %v2518, 0
    %v2537 = vsel %vm611, %v2520, 0
    %v2540 = vsel %vm611, %v2522, 0
    %v2543 = vsel %vm611, %v2528, 0
    %v2546 = vsel %vm611, %v2530, 0
    %v2549 = vsel %vm611, %v2532, 0
    %2551 = vmatprep.subr.bf16.mxu0 0
    %2552 = vmatpush1.bf16.xpose.msra.mxu0 %v2543
    %2553 = vmatprep.subr.bf16.mxu0 0
    %2554 = vmatpush1.bf16.xpose.msra.mxu0 %v2546
    %2555 = vmatprep.subr.bf16.mxu0 0
    %2556 = vmatpush1.bf16.xpose.msra.mxu0 %v2549
    %2557 = vmatprep.subr.bf16.mxu0 0
    %2558 = vmatpush1.bf16.xpose.msra.mxu0 0
    %2559 = vmatprep.subr.bf16.mxu0 0
    %2560 = vmatpush1.bf16.xpose.msra.mxu0 0
    %2561 = vmatprep.subr.bf16.mxu0 0
    %2562 = vmatpush1.bf16.xpose.msra.mxu0 0
    %2563 = vmatprep.subr.bf16.mxu0 0
    %2564 = vmatpush1.bf16.xpose.msra.mxu0 0
    %2565 = vmatprep.subr.bf16.mxu0 0
    %2566 = vmatpush1.bf16.xpose.msra.mxu0 0
    %2567 = vmatprep.subr.bf16.mxu0 0
    %2568 = vmatpush1.bf16.xpose.msra.mxu0 0
    %2569 = vmatprep.subr.bf16.mxu0 0
    %2570 = vmatpush1.bf16.xpose.msra.mxu0 0
    %2571 = vmatprep.subr.bf16.mxu0 0
    %2572 = vmatpush1.bf16.xpose.msra.mxu0 0
    %2573 = vmatprep.subr.bf16.mxu0 0
    %2574 = vmatpush1.bf16.xpose.msra.mxu0 0
    %2575 = vmatprep.subr.bf16.mxu0 0
    %2576 = vmatpush1.bf16.xpose.msra.mxu0 0
    %2577 = vmatprep.subr.bf16.mxu0 0
    %2578 = vmatpush1.bf16.xpose.msra.mxu0 0
    %2579 = vmatprep.subr.bf16.mxu0 0
    %2580 = vmatpush1.bf16.xpose.msra.mxu0 0
    %2581 = vmatprep.subr.bf16.mxu0 0
    %2582 = vmatpush1.bf16.xpose.msra.mxu0 0
    %2583 = vmatprep.mubr.bf16.mxu0 0
    %2584 = vmatmul.mubr.bf16.gmra.mrb[0].mxu0 %v2534
    %v2585 = vpop.f32.mrb[0].mxu0
    %v2586 = vadd.f32 %v351, %v2585
    %v2587 = vpop.f32.mrb[0].mxu0
    %v2588 = vpop.f32.mrb[0].mxu0
    %v2589 = vadd.f32 %v352, %v2588
    %v2590 = vpop.f32.mrb[0].mxu0
    %2591 = vmatprep.mubr.bf16.mxu0 0
    %2592 = vmatmul.mubr.bf16.gmra.mrb[0].mxu0 %v2537
    %v2593 = vpop.f32.mrb[0].mxu0
    %v2594 = vadd.f32 %v353, %v2593
    %v2595 = vpop.f32.mrb[0].mxu0
    %v2596 = vpop.f32.mrb[0].mxu0
    %v2597 = vadd.f32 %v354, %v2596
    %v2598 = vpop.f32.mrb[0].mxu0
    %2599 = vmatprep.mubr.bf16.mxu0 0
    %2600 = vmatmul.mubr.bf16.gmra.mrb[0].mxu0 %v2540
    %v2601 = vpop.f32.mrb[0].mxu0
    %v2602 = vadd.f32 %v355, %v2601
    %v2603 = vpop.f32.mrb[0].mxu0
    %v2604 = vpop.f32.mrb[0].mxu0
    %v2605 = vadd.f32 %v356, %v2604
    %v2606 = vpop.f32.mrb[0].mxu0
    %2607 = vdwg.mxu0
    %v2608 = vsel %vm687, %v2586, -inf
    %2609 = vmax.xlane.f32.xlu0 %v2608
    %v2610 = vpop.xlane.xlu0 %2609
    %v2611 = vsel %vm687, %v2589, -inf
    %2612 = vmax.xlane.f32.xlu0 %v2611
    %v2613 = vpop.xlane.xlu0 %2612
    %v2614 = vsel %vm687, %v2594, -inf
    %2615 = vmax.xlane.f32.xlu0 %v2614
    %v2616 = vpop.xlane.xlu0 %2615
    %v2617 = vsel %vm687, %v2597, -inf
    %2618 = vmax.xlane.f32.xlu0 %v2617
    %v2619 = vpop.xlane.xlu0 %2618
    %v2620 = vsel %vm687, %v2602, -inf
    %2621 = vmax.xlane.f32.xlu0 %v2620
    %v2622 = vpop.xlane.xlu0 %2621
    %v2623 = vsel %vm687, %v2605, -inf
    %2624 = vmax.xlane.f32.xlu0 %v2623
    %v2625 = vpop.xlane.xlu0 %2624
    %v2626 = vsub.f32 %v2586, %v2610
    %v2627 = vsub.f32 %v2589, %v2613
    %v2628 = vsub.f32 %v2594, %v2616
    %v2629 = vsub.f32 %v2597, %v2619
    %v2630 = vsub.f32 %v2602, %v2622
    %v2631 = vsub.f32 %v2605, %v2625
    %v2632 = vmul.f32 %v2626, 1.442695
    %v2633 = vpow.pop %v2632
    %v2634 = vmul.f32 %v2627, 1.442695
    %v2635 = vpow.pop %v2634
    %v2636 = vmul.f32 %v2628, 1.442695
    %v2637 = vpow.pop %v2636
    %v2638 = vmul.f32 %v2629, 1.442695
    %v2639 = vpow.pop %v2638
    %v2640 = vmul.f32 %v2630, 1.442695
    %v2641 = vpow.pop %v2640
    %v2642 = vmul.f32 %v2631, 1.442695
    %v2643 = vpow.pop %v2642
    %v2644 = vsel %vm687, %v2633, 0.0
    %2645 = vadd.xlane.f32.xlu0 %v2644
    %v2646 = vpop.xlane.xlu0 %2645
    %v2647 = vsel %vm687, %v2635, 0.0
    %2648 = vadd.xlane.f32.xlu0 %v2647
    %v2649 = vpop.xlane.xlu0 %2648
    %v2650 = vsel %vm687, %v2637, 0.0
    %2651 = vadd.xlane.f32.xlu0 %v2650
    %v2652 = vpop.xlane.xlu0 %2651
    %v2653 = vsel %vm687, %v2639, 0.0
    %2654 = vadd.xlane.f32.xlu0 %v2653
    %v2655 = vpop.xlane.xlu0 %2654
    %v2656 = vsel %vm687, %v2641, 0.0
    %2657 = vadd.xlane.f32.xlu0 %v2656
    %v2658 = vpop.xlane.xlu0 %2657
    %v2659 = vsel %vm687, %v2643, 0.0
    %2660 = vadd.xlane.f32.xlu0 %v2659
    %v2661 = vpop.xlane.xlu0 %2660
    %v2662 = vrcp.pop %v2646
    %v2663 = vrcp.pop %v2649
    %v2664 = vrcp.pop %v2652
    %v2665 = vrcp.pop %v2655
    %v2666 = vrcp.pop %v2658
    %v2667 = vrcp.pop %v2661
    %v2668 = vmul.f32 %v2633, %v2662
    %v2669 = vmul.f32 %v2635, %v2663
    %v2670 = vmul.f32 %v2637, %v2664
    %v2671 = vmul.f32 %v2639, %v2665
    %v2672 = vmul.f32 %v2641, %v2666
    %v2673 = vmul.f32 %v2643, %v2667
    %v2674 = vpack.c.bf16 %v2669, %v2668
    %v2675 = vpack.c.bf16 %v2671, %v2670
    %v2676 = vpack.c.bf16 %v2673, %v2672
    %v2678 = vsel %vm687, %v2674, 0
    %v2681 = vsel %vm687, %v2675, 0
    %v2684 = vsel %vm687, %v2676, 0
    %2686 = vmatprep.subr.bf16.mxu0 0
    %2687 = vmatpush1.bf16.msra.mxu0 %v2519
    %2688 = vmatprep.subr.bf16.mxu0 0
    %2689 = vmatpush1.bf16.msra.mxu0 %v2521
    %2690 = vmatprep.subr.bf16.mxu0 0
    %2691 = vmatpush1.bf16.msra.mxu0 %v2523
    %2692 = vmatprep.subr.bf16.mxu0 0
    %2693 = vmatpush1.bf16.msra.mxu0 0
    %2694 = vmatprep.subr.bf16.mxu0 0
    %2695 = vmatpush1.bf16.msra.mxu0 0
    %2696 = vmatprep.subr.bf16.mxu0 0
    %2697 = vmatpush1.bf16.msra.mxu0 0
    %2698 = vmatprep.subr.bf16.mxu0 0
    %2699 = vmatpush1.bf16.msra.mxu0 0
    %2700 = vmatprep.subr.bf16.mxu0 0
    %2701 = vmatpush1.bf16.msra.mxu0 0
    %2702 = vmatprep.subr.bf16.mxu0 0
    %2703 = vmatpush1.bf16.msra.mxu0 0
    %2704 = vmatprep.subr.bf16.mxu0 0
    %2705 = vmatpush1.bf16.msra.mxu0 0
    %2706 = vmatprep.subr.bf16.mxu0 0
    %2707 = vmatpush1.bf16.msra.mxu0 0
    %2708 = vmatprep.subr.bf16.mxu0 0
    %2709 = vmatpush1.bf16.msra.mxu0 0
    %2710 = vmatprep.subr.bf16.mxu0 0
    %2711 = vmatpush1.bf16.msra.mxu0 0
    %2712 = vmatprep.subr.bf16.mxu0 0
    %2713 = vmatpush1.bf16.msra.mxu0 0
    %2714 = vmatprep.subr.bf16.mxu0 0
    %2715 = vmatpush1.bf16.msra.mxu0 0
    %2716 = vmatprep.subr.bf16.mxu0 0
    %2717 = vmatpush1.bf16.msra.mxu0 0
    %2718 = vmatprep.mubr.bf16.mxu0 0
    %2719 = vmatmul.mubr.bf16.gmra.mrb[0].mxu0 %v2678
    %v2720 = vpop.f32.mrb[0].mxu0
    %v2721 = vadd.f32 0.0, %v2720
    %v2722 = vpop.f32.mrb[0].mxu0
    %v2723 = vpop.f32.mrb[0].mxu0
    %v2724 = vadd.f32 0.0, %v2723
    %v2725 = vpop.f32.mrb[0].mxu0
    %2726 = vmatprep.mubr.bf16.mxu0 0
    %2727 = vmatmul.mubr.bf16.gmra.mrb[0].mxu0 %v2681
    %v2728 = vpop.f32.mrb[0].mxu0
    %v2729 = vadd.f32 0.0, %v2728
    %v2730 = vpop.f32.mrb[0].mxu0
    %v2731 = vpop.f32.mrb[0].mxu0
    %v2732 = vadd.f32 0.0, %v2731
    %v2733 = vpop.f32.mrb[0].mxu0
    %2734 = vmatprep.mubr.bf16.mxu0 0
    %2735 = vmatmul.mubr.bf16.gmra.mrb[0].mxu0 %v2684
    %v2736 = vpop.f32.mrb[0].mxu0
    %v2737 = vadd.f32 0.0, %v2736
    %v2738 = vpop.f32.mrb[0].mxu0
    %v2739 = vpop.f32.mrb[0].mxu0
    %v2740 = vadd.f32 0.0, %v2739
    %v2741 = vpop.f32.mrb[0].mxu0
    %2742 = vdwg.mxu0
    %2743 = vrot.lane.b32.xlu0 %v2518, 112
    %v2744 = vpop.permute.xlu0 %2743
    %2745 = vrot.lane.b32.xlu0 %v2520, 112
    %v2746 = vpop.permute.xlu0 %2745
    %2747 = vrot.lane.b32.xlu0 %v2522, 112
    %v2748 = vpop.permute.xlu0 %2747
    %2749 = vrot.lane.b32.xlu0 %v2518, 48
    %v2750 = vpop.permute.xlu0 %2749
    %2751 = vrot.lane.b32.xlu0 %v2520, 48
    %v2752 = vpop.permute.xlu0 %2751
    %2753 = vrot.lane.b32.xlu0 %v2522, 48
    %v2754 = vpop.permute.xlu0 %2753
    %v2756 = vsel %vm611, %v2744, 0
    %v2759 = vsel %vm611, %v2746, 0
    %v2762 = vsel %vm611, %v2748, 0
    %v2765 = vsel %vm611, %v2750, 0
    %v2768 = vsel %vm611, %v2752, 0
    %v2771 = vsel %vm611, %v2754, 0
    %2773 = vmatprep.subr.bf16.mxu0 0
    %2774 = vmatpush1.bf16.xpose.msra.mxu0 %v2765
    %2775 = vmatprep.subr.bf16.mxu0 0
    %2776 = vmatpush1.bf16.xpose.msra.mxu0 %v2768
    %2777 = vmatprep.subr.bf16.mxu0 0
    %2778 = vmatpush1.bf16.xpose.msra.mxu0 %v2771
    %2779 = vmatprep.subr.bf16.mxu0 0
    %2780 = vmatpush1.bf16.xpose.msra.mxu0 0
    %2781 = vmatprep.subr.bf16.mxu0 0
    %2782 = vmatpush1.bf16.xpose.msra.mxu0 0
    %2783 = vmatprep.subr.bf16.mxu0 0
    %2784 = vmatpush1.bf16.xpose.msra.mxu0 0
    %2785 = vmatprep.subr.bf16.mxu0 0
    %2786 = vmatpush1.bf16.xpose.msra.mxu0 0
    %2787 = vmatprep.subr.bf16.mxu0 0
    %2788 = vmatpush1.bf16.xpose.msra.mxu0 0
    %2789 = vmatprep.subr.bf16.mxu0 0
    %2790 = vmatpush1.bf16.xpose.msra.mxu0 0
    %2791 = vmatprep.subr.bf16.mxu0 0
    %2792 = vmatpush1.bf16.xpose.msra.mxu0 0
    %2793 = vmatprep.subr.bf16.mxu0 0
    %2794 = vmatpush1.bf16.xpose.msra.mxu0 0
    %2795 = vmatprep.subr.bf16.mxu0 0
    %2796 = vmatpush1.bf16.xpose.msra.mxu0 0
    %2797 = vmatprep.subr.bf16.mxu0 0
    %2798 = vmatpush1.bf16.xpose.msra.mxu0 0
    %2799 = vmatprep.subr.bf16.mxu0 0
    %2800 = vmatpush1.bf16.xpose.msra.mxu0 0
    %2801 = vmatprep.subr.bf16.mxu0 0
    %2802 = vmatpush1.bf16.xpose.msra.mxu0 0
    %2803 = vmatprep.subr.bf16.mxu0 0
    %2804 = vmatpush1.bf16.xpose.msra.mxu0 0
    %2805 = vmatprep.mubr.bf16.mxu0 0
    %2806 = vmatmul.mubr.bf16.gmra.mrb[0].mxu0 %v2756
    %v2807 = vpop.f32.mrb[0].mxu0
    %v2808 = vadd.f32 %v351, %v2807
    %v2809 = vpop.f32.mrb[0].mxu0
    %v2810 = vpop.f32.mrb[0].mxu0
    %v2811 = vadd.f32 %v352, %v2810
    %v2812 = vpop.f32.mrb[0].mxu0
    %2813 = vmatprep.mubr.bf16.mxu0 0
    %2814 = vmatmul.mubr.bf16.gmra.mrb[0].mxu0 %v2759
    %v2815 = vpop.f32.mrb[0].mxu0
    %v2816 = vadd.f32 %v353, %v2815
    %v2817 = vpop.f32.mrb[0].mxu0
    %v2818 = vpop.f32.mrb[0].mxu0
    %v2819 = vadd.f32 %v354, %v2818
    %v2820 = vpop.f32.mrb[0].mxu0
    %2821 = vmatprep.mubr.bf16.mxu0 0
    %2822 = vmatmul.mubr.bf16.gmra.mrb[0].mxu0 %v2762
    %v2823 = vpop.f32.mrb[0].mxu0
    %v2824 = vadd.f32 %v355, %v2823
    %v2825 = vpop.f32.mrb[0].mxu0
    %v2826 = vpop.f32.mrb[0].mxu0
    %v2827 = vadd.f32 %v356, %v2826
    %v2828 = vpop.f32.mrb[0].mxu0
    %2829 = vdwg.mxu0
    %v2830 = vsel %vm687, %v2808, -inf
    %2831 = vmax.xlane.f32.xlu0 %v2830
    %v2832 = vpop.xlane.xlu0 %2831
    %v2833 = vsel %vm687, %v2811, -inf
    %2834 = vmax.xlane.f32.xlu0 %v2833
    %v2835 = vpop.xlane.xlu0 %2834
    %v2836 = vsel %vm687, %v2816, -inf
    %2837 = vmax.xlane.f32.xlu0 %v2836
    %v2838 = vpop.xlane.xlu0 %2837
    %v2839 = vsel %vm687, %v2819, -inf
    %2840 = vmax.xlane.f32.xlu0 %v2839
    %v2841 = vpop.xlane.xlu0 %2840
    %v2842 = vsel %vm687, %v2824, -inf
    %2843 = vmax.xlane.f32.xlu0 %v2842
    %v2844 = vpop.xlane.xlu0 %2843
    %v2845 = vsel %vm687, %v2827, -inf
    %2846 = vmax.xlane.f32.xlu0 %v2845
    %v2847 = vpop.xlane.xlu0 %2846
    %v2848 = vsub.f32 %v2808, %v2832
    %v2849 = vsub.f32 %v2811, %v2835
    %v2850 = vsub.f32 %v2816, %v2838
    %v2851 = vsub.f32 %v2819, %v2841
    %v2852 = vsub.f32 %v2824, %v2844
    %v2853 = vsub.f32 %v2827, %v2847
    %v2854 = vmul.f32 %v2848, 1.442695
    %v2855 = vpow.pop %v2854
    %v2856 = vmul.f32 %v2849, 1.442695
    %v2857 = vpow.pop %v2856
    %v2858 = vmul.f32 %v2850, 1.442695
    %v2859 = vpow.pop %v2858
    %v2860 = vmul.f32 %v2851, 1.442695
    %v2861 = vpow.pop %v2860
    %v2862 = vmul.f32 %v2852, 1.442695
    %v2863 = vpow.pop %v2862
    %v2864 = vmul.f32 %v2853, 1.442695
    %v2865 = vpow.pop %v2864
    %v2866 = vsel %vm687, %v2855, 0.0
    %2867 = vadd.xlane.f32.xlu0 %v2866
    %v2868 = vpop.xlane.xlu0 %2867
    %v2869 = vsel %vm687, %v2857, 0.0
    %2870 = vadd.xlane.f32.xlu0 %v2869
    %v2871 = vpop.xlane.xlu0 %2870
    %v2872 = vsel %vm687, %v2859, 0.0
    %2873 = vadd.xlane.f32.xlu0 %v2872
    %v2874 = vpop.xlane.xlu0 %2873
    %v2875 = vsel %vm687, %v2861, 0.0
    %2876 = vadd.xlane.f32.xlu0 %v2875
    %v2877 = vpop.xlane.xlu0 %2876
    %v2878 = vsel %vm687, %v2863, 0.0
    %2879 = vadd.xlane.f32.xlu0 %v2878
    %v2880 = vpop.xlane.xlu0 %2879
    %v2881 = vsel %vm687, %v2865, 0.0
    %2882 = vadd.xlane.f32.xlu0 %v2881
    %v2883 = vpop.xlane.xlu0 %2882
    %v2884 = vrcp.pop %v2868
    %v2885 = vrcp.pop %v2871
    %v2886 = vrcp.pop %v2874
    %v2887 = vrcp.pop %v2877
    %v2888 = vrcp.pop %v2880
    %v2889 = vrcp.pop %v2883
    %v2890 = vmul.f32 %v2855, %v2884
    %v2891 = vmul.f32 %v2857, %v2885
    %v2892 = vmul.f32 %v2859, %v2886
    %v2893 = vmul.f32 %v2861, %v2887
    %v2894 = vmul.f32 %v2863, %v2888
    %v2895 = vmul.f32 %v2865, %v2889
    %v2896 = vpack.c.bf16 %v2891, %v2890
    %v2897 = vpack.c.bf16 %v2893, %v2892
    %v2898 = vpack.c.bf16 %v2895, %v2894
    %2902 = vrot.lane.b32.xlu0 %v2519, 112
    %v2903 = vpop.permute.xlu0 %2902
    %2904 = vrot.lane.b32.xlu0 %v2521, 112
    %v2905 = vpop.permute.xlu0 %2904
    %2906 = vrot.lane.b32.xlu0 %v2523, 112
    %v2907 = vpop.permute.xlu0 %2906
    %v2912 = vsel %vm687, %v2896, 0
    %v2915 = vsel %vm687, %v2897, 0
    %v2918 = vsel %vm687, %v2898, 0
    %2920 = vmatprep.subr.bf16.mxu0 0
    %2921 = vmatpush1.bf16.msra.mxu0 %v2903
    %2922 = vmatprep.subr.bf16.mxu0 0
    %2923 = vmatpush1.bf16.msra.mxu0 %v2905
    %2924 = vmatprep.subr.bf16.mxu0 0
    %2925 = vmatpush1.bf16.msra.mxu0 %v2907
    %2926 = vmatprep.subr.bf16.mxu0 0
    %2927 = vmatpush1.bf16.msra.mxu0 0
    %2928 = vmatprep.subr.bf16.mxu0 0
    %2929 = vmatpush1.bf16.msra.mxu0 0
    %2930 = vmatprep.subr.bf16.mxu0 0
    %2931 = vmatpush1.bf16.msra.mxu0 0
    %2932 = vmatprep.subr.bf16.mxu0 0
    %2933 = vmatpush1.bf16.msra.mxu0 0
    %2934 = vmatprep.subr.bf16.mxu0 0
    %2935 = vmatpush1.bf16.msra.mxu0 0
    %2936 = vmatprep.subr.bf16.mxu0 0
    %2937 = vmatpush1.bf16.msra.mxu0 0
    %2938 = vmatprep.subr.bf16.mxu0 0
    %2939 = vmatpush1.bf16.msra.mxu0 0
    %2940 = vmatprep.subr.bf16.mxu0 0
    %2941 = vmatpush1.bf16.msra.mxu0 0
    %2942 = vmatprep.subr.bf16.mxu0 0
    %2943 = vmatpush1.bf16.msra.mxu0 0
    %2944 = vmatprep.subr.bf16.mxu0 0
    %2945 = vmatpush1.bf16.msra.mxu0 0
    %2946 = vmatprep.subr.bf16.mxu0 0
    %2947 = vmatpush1.bf16.msra.mxu0 0
    %2948 = vmatprep.subr.bf16.mxu0 0
    %2949 = vmatpush1.bf16.msra.mxu0 0
    %2950 = vmatprep.subr.bf16.mxu0 0
    %2951 = vmatpush1.bf16.msra.mxu0 0
    %2952 = vmatprep.mubr.bf16.mxu0 0
    %2953 = vmatmul.mubr.bf16.gmra.mrb[0].mxu0 %v2912
    %v2954 = vpop.f32.mrb[0].mxu0
    %v2955 = vadd.f32 0.0, %v2954
    %v2956 = vpop.f32.mrb[0].mxu0
    %v2957 = vpop.f32.mrb[0].mxu0
    %v2958 = vadd.f32 0.0, %v2957
    %v2959 = vpop.f32.mrb[0].mxu0
    %2960 = vmatprep.mubr.bf16.mxu0 0
    %2961 = vmatmul.mubr.bf16.gmra.mrb[0].mxu0 %v2915
    %v2962 = vpop.f32.mrb[0].mxu0
    %v2963 = vadd.f32 0.0, %v2962
    %v2964 = vpop.f32.mrb[0].mxu0
    %v2965 = vpop.f32.mrb[0].mxu0
    %v2966 = vadd.f32 0.0, %v2965
    %v2967 = vpop.f32.mrb[0].mxu0
    %2968 = vmatprep.mubr.bf16.mxu0 0
    %2969 = vmatmul.mubr.bf16.gmra.mrb[0].mxu0 %v2918
    %v2970 = vpop.f32.mrb[0].mxu0
    %v2971 = vadd.f32 0.0, %v2970
    %v2972 = vpop.f32.mrb[0].mxu0
    %v2973 = vpop.f32.mrb[0].mxu0
    %v2974 = vadd.f32 0.0, %v2973
    %v2975 = vpop.f32.mrb[0].mxu0
    %2976 = vdwg.mxu0
    %2977 = vrot.lane.b32.xlu0 %v2518, 96
    %v2978 = vpop.permute.xlu0 %2977
    %2979 = vrot.lane.b32.xlu0 %v2520, 96
    %v2980 = vpop.permute.xlu0 %2979
    %2981 = vrot.lane.b32.xlu0 %v2522, 96
    %v2982 = vpop.permute.xlu0 %2981
    %2983 = vrot.lane.b32.xlu0 %v2518, 32
    %v2984 = vpop.permute.xlu0 %2983
    %2985 = vrot.lane.b32.xlu0 %v2520, 32
    %v2986 = vpop.permute.xlu0 %2985
    %2987 = vrot.lane.b32.xlu0 %v2522, 32
    %v2988 = vpop.permute.xlu0 %2987
    %v2990 = vsel %vm611, %v2978, 0
    %v2993 = vsel %vm611, %v2980, 0
    %v2996 = vsel %vm611, %v2982, 0
    %v2999 = vsel %vm611, %v2984, 0
    %v3002 = vsel %vm611, %v2986, 0
    %v3005 = vsel %vm611, %v2988, 0
    %3007 = vmatprep.subr.bf16.mxu0 0
    %3008 = vmatpush1.bf16.xpose.msra.mxu0 %v2999
    %3009 = vmatprep.subr.bf16.mxu0 0
    %3010 = vmatpush1.bf16.xpose.msra.mxu0 %v3002
    %3011 = vmatprep.subr.bf16.mxu0 0
    %3012 = vmatpush1.bf16.xpose.msra.mxu0 %v3005
    %3013 = vmatprep.subr.bf16.mxu0 0
    %3014 = vmatpush1.bf16.xpose.msra.mxu0 0
    %3015 = vmatprep.subr.bf16.mxu0 0
    %3016 = vmatpush1.bf16.xpose.msra.mxu0 0
    %3017 = vmatprep.subr.bf16.mxu0 0
    %3018 = vmatpush1.bf16.xpose.msra.mxu0 0
    %3019 = vmatprep.subr.bf16.mxu0 0
    %3020 = vmatpush1.bf16.xpose.msra.mxu0 0
    %3021 = vmatprep.subr.bf16.mxu0 0
    %3022 = vmatpush1.bf16.xpose.msra.mxu0 0
    %3023 = vmatprep.subr.bf16.mxu0 0
    %3024 = vmatpush1.bf16.xpose.msra.mxu0 0
    %3025 = vmatprep.subr.bf16.mxu0 0
    %3026 = vmatpush1.bf16.xpose.msra.mxu0 0
    %3027 = vmatprep.subr.bf16.mxu0 0
    %3028 = vmatpush1.bf16.xpose.msra.mxu0 0
    %3029 = vmatprep.subr.bf16.mxu0 0
    %3030 = vmatpush1.bf16.xpose.msra.mxu0 0
    %3031 = vmatprep.subr.bf16.mxu0 0
    %3032 = vmatpush1.bf16.xpose.msra.mxu0 0
    %3033 = vmatprep.subr.bf16.mxu0 0
    %3034 = vmatpush1.bf16.xpose.msra.mxu0 0
    %3035 = vmatprep.subr.bf16.mxu0 0
    %3036 = vmatpush1.bf16.xpose.msra.mxu0 0
    %3037 = vmatprep.subr.bf16.mxu0 0
    %3038 = vmatpush1.bf16.xpose.msra.mxu0 0
    %3039 = vmatprep.mubr.bf16.mxu0 0
    %3040 = vmatmul.mubr.bf16.gmra.mrb[0].mxu0 %v2990
    %v3041 = vpop.f32.mrb[0].mxu0
    %v3042 = vadd.f32 %v351, %v3041
    %v3043 = vpop.f32.mrb[0].mxu0
    %v3044 = vpop.f32.mrb[0].mxu0
    %v3045 = vadd.f32 %v352, %v3044
    %v3046 = vpop.f32.mrb[0].mxu0
    %3047 = vmatprep.mubr.bf16.mxu0 0
    %3048 = vmatmul.mubr.bf16.gmra.mrb[0].mxu0 %v2993
    %v3049 = vpop.f32.mrb[0].mxu0
    %v3050 = vadd.f32 %v353, %v3049
    %v3051 = vpop.f32.mrb[0].mxu0
    %v3052 = vpop.f32.mrb[0].mxu0
    %v3053 = vadd.f32 %v354, %v3052
    %v3054 = vpop.f32.mrb[0].mxu0
    %3055 = vmatprep.mubr.bf16.mxu0 0
    %3056 = vmatmul.mubr.bf16.gmra.mrb[0].mxu0 %v2996
    %v3057 = vpop.f32.mrb[0].mxu0
    %v3058 = vadd.f32 %v355, %v3057
    %v3059 = vpop.f32.mrb[0].mxu0
    %v3060 = vpop.f32.mrb[0].mxu0
    %v3061 = vadd.f32 %v356, %v3060
    %v3062 = vpop.f32.mrb[0].mxu0
    %3063 = vdwg.mxu0
    %v3064 = vsel %vm687, %v3042, -inf
    %3065 = vmax.xlane.f32.xlu0 %v3064
    %v3066 = vpop.xlane.xlu0 %3065
    %v3067 = vsel %vm687, %v3045, -inf
    %3068 = vmax.xlane.f32.xlu0 %v3067
    %v3069 = vpop.xlane.xlu0 %3068
    %v3070 = vsel %vm687, %v3050, -inf
    %3071 = vmax.xlane.f32.xlu0 %v3070
    %v3072 = vpop.xlane.xlu0 %3071
    %v3073 = vsel %vm687, %v3053, -inf
    %3074 = vmax.xlane.f32.xlu0 %v3073
    %v3075 = vpop.xlane.xlu0 %3074
    %v3076 = vsel %vm687, %v3058, -inf
    %3077 = vmax.xlane.f32.xlu0 %v3076
    %v3078 = vpop.xlane.xlu0 %3077
    %v3079 = vsel %vm687, %v3061, -inf
    %3080 = vmax.xlane.f32.xlu0 %v3079
    %v3081 = vpop.xlane.xlu0 %3080
    %v3082 = vsub.f32 %v3042, %v3066
    %v3083 = vsub.f32 %v3045, %v3069
    %v3084 = vsub.f32 %v3050, %v3072
    %v3085 = vsub.f32 %v3053, %v3075
    %v3086 = vsub.f32 %v3058, %v3078
    %v3087 = vsub.f32 %v3061, %v3081
    %v3088 = vmul.f32 %v3082, 1.442695
    %v3089 = vpow.pop %v3088
    %v3090 = vmul.f32 %v3083, 1.442695
    %v3091 = vpow.pop %v3090
    %v3092 = vmul.f32 %v3084, 1.442695
    %v3093 = vpow.pop %v3092
    %v3094 = vmul.f32 %v3085, 1.442695
    %v3095 = vpow.pop %v3094
    %v3096 = vmul.f32 %v3086, 1.442695
    %v3097 = vpow.pop %v3096
    %v3098 = vmul.f32 %v3087, 1.442695
    %v3099 = vpow.pop %v3098
    %v3100 = vsel %vm687, %v3089, 0.0
    %3101 = vadd.xlane.f32.xlu0 %v3100
    %v3102 = vpop.xlane.xlu0 %3101
    %v3103 = vsel %vm687, %v3091, 0.0
    %3104 = vadd.xlane.f32.xlu0 %v3103
    %v3105 = vpop.xlane.xlu0 %3104
    %v3106 = vsel %vm687, %v3093, 0.0
    %3107 = vadd.xlane.f32.xlu0 %v3106
    %v3108 = vpop.xlane.xlu0 %3107
    %v3109 = vsel %vm687, %v3095, 0.0
    %3110 = vadd.xlane.f32.xlu0 %v3109
    %v3111 = vpop.xlane.xlu0 %3110
    %v3112 = vsel %vm687, %v3097, 0.0
    %3113 = vadd.xlane.f32.xlu0 %v3112
    %v3114 = vpop.xlane.xlu0 %3113
    %v3115 = vsel %vm687, %v3099, 0.0
    %3116 = vadd.xlane.f32.xlu0 %v3115
    %v3117 = vpop.xlane.xlu0 %3116
    %v3118 = vrcp.pop %v3102
    %v3119 = vrcp.pop %v3105
    %v3120 = vrcp.pop %v3108
    %v3121 = vrcp.pop %v3111
    %v3122 = vrcp.pop %v3114
    %v3123 = vrcp.pop %v3117
    %v3124 = vmul.f32 %v3089, %v3118
    %v3125 = vmul.f32 %v3091, %v3119
    %v3126 = vmul.f32 %v3093, %v3120
    %v3127 = vmul.f32 %v3095, %v3121
    %v3128 = vmul.f32 %v3097, %v3122
    %v3129 = vmul.f32 %v3099, %v3123
    %v3130 = vpack.c.bf16 %v3125, %v3124
    %v3131 = vpack.c.bf16 %v3127, %v3126
    %v3132 = vpack.c.bf16 %v3129, %v3128
    %3133 = vrot.lane.b32.xlu0 %v2519, 96
    %v3134 = vpop.permute.xlu0 %3133
    %3135 = vrot.lane.b32.xlu0 %v2521, 96
    %v3136 = vpop.permute.xlu0 %3135
    %3137 = vrot.lane.b32.xlu0 %v2523, 96
    %v3138 = vpop.permute.xlu0 %3137
    %v3143 = vsel %vm687, %v3130, 0
    %v3146 = vsel %vm687, %v3131, 0
    %v3149 = vsel %vm687, %v3132, 0
    %3151 = vmatprep.subr.bf16.mxu0 0
    %3152 = vmatpush1.bf16.msra.mxu0 %v3134
    %3153 = vmatprep.subr.bf16.mxu0 0
    %3154 = vmatpush1.bf16.msra.mxu0 %v3136
    %3155 = vmatprep.subr.bf16.mxu0 0
    %3156 = vmatpush1.bf16.msra.mxu0 %v3138
    %3157 = vmatprep.subr.bf16.mxu0 0
    %3158 = vmatpush1.bf16.msra.mxu0 0
    %3159 = vmatprep.subr.bf16.mxu0 0
    %3160 = vmatpush1.bf16.msra.mxu0 0
    %3161 = vmatprep.subr.bf16.mxu0 0
    %3162 = vmatpush1.bf16.msra.mxu0 0
    %3163 = vmatprep.subr.bf16.mxu0 0
    %3164 = vmatpush1.bf16.msra.mxu0 0
    %3165 = vmatprep.subr.bf16.mxu0 0
    %3166 = vmatpush1.bf16.msra.mxu0 0
    %3167 = vmatprep.subr.bf16.mxu0 0
    %3168 = vmatpush1.bf16.msra.mxu0 0
    %3169 = vmatprep.subr.bf16.mxu0 0
    %3170 = vmatpush1.bf16.msra.mxu0 0
    %3171 = vmatprep.subr.bf16.mxu0 0
    %3172 = vmatpush1.bf16.msra.mxu0 0
    %3173 = vmatprep.subr.bf16.mxu0 0
    %3174 = vmatpush1.bf16.msra.mxu0 0
    %3175 = vmatprep.subr.bf16.mxu0 0
    %3176 = vmatpush1.bf16.msra.mxu0 0
    %3177 = vmatprep.subr.bf16.mxu0 0
    %3178 = vmatpush1.bf16.msra.mxu0 0
    %3179 = vmatprep.subr.bf16.mxu0 0
    %3180 = vmatpush1.bf16.msra.mxu0 0
    %3181 = vmatprep.subr.bf16.mxu0 0
    %3182 = vmatpush1.bf16.msra.mxu0 0
    %3183 = vmatprep.mubr.bf16.mxu0 0
    %3184 = vmatmul.mubr.bf16.gmra.mrb[0].mxu0 %v3143
    %v3185 = vpop.f32.mrb[0].mxu0
    %v3186 = vadd.f32 0.0, %v3185
    %v3187 = vpop.f32.mrb[0].mxu0
    %v3188 = vpop.f32.mrb[0].mxu0
    %v3189 = vadd.f32 0.0, %v3188
    %v3190 = vpop.f32.mrb[0].mxu0
    %3191 = vmatprep.mubr.bf16.mxu0 0
    %3192 = vmatmul.mubr.bf16.gmra.mrb[0].mxu0 %v3146
    %v3193 = vpop.f32.mrb[0].mxu0
    %v3194 = vadd.f32 0.0, %v3193
    %v3195 = vpop.f32.mrb[0].mxu0
    %v3196 = vpop.f32.mrb[0].mxu0
    %v3197 = vadd.f32 0.0, %v3196
    %v3198 = vpop.f32.mrb[0].mxu0
    %3199 = vmatprep.mubr.bf16.mxu0 0
    %3200 = vmatmul.mubr.bf16.gmra.mrb[0].mxu0 %v3149
    %v3201 = vpop.f32.mrb[0].mxu0
    %v3202 = vadd.f32 0.0, %v3201
    %v3203 = vpop.f32.mrb[0].mxu0
    %v3204 = vpop.f32.mrb[0].mxu0
    %v3205 = vadd.f32 0.0, %v3204
    %v3206 = vpop.f32.mrb[0].mxu0
    %3207 = vdwg.mxu0
    %3208 = vrot.lane.b32.xlu0 %v2518, 80
    %v3209 = vpop.permute.xlu0 %3208
    %3210 = vrot.lane.b32.xlu0 %v2520, 80
    %v3211 = vpop.permute.xlu0 %3210
    %3212 = vrot.lane.b32.xlu0 %v2522, 80
    %v3213 = vpop.permute.xlu0 %3212
    %3214 = vrot.lane.b32.xlu0 %v2518, 16
    %v3215 = vpop.permute.xlu0 %3214
    %3216 = vrot.lane.b32.xlu0 %v2520, 16
    %v3217 = vpop.permute.xlu0 %3216
    %3218 = vrot.lane.b32.xlu0 %v2522, 16
    %v3219 = vpop.permute.xlu0 %3218
    %v3221 = vsel %vm611, %v3209, 0
    %v3224 = vsel %vm611, %v3211, 0
    %v3227 = vsel %vm611, %v3213, 0
    %v3230 = vsel %vm611, %v3215, 0
    %v3233 = vsel %vm611, %v3217, 0
    %v3236 = vsel %vm611, %v3219, 0
    %3238 = vmatprep.subr.bf16.mxu0 0
    %3239 = vmatpush1.bf16.xpose.msra.mxu0 %v3230
    %3240 = vmatprep.subr.bf16.mxu0 0
    %3241 = vmatpush1.bf16.xpose.msra.mxu0 %v3233
    %3242 = vmatprep.subr.bf16.mxu0 0
    %3243 = vmatpush1.bf16.xpose.msra.mxu0 %v3236
    %3244 = vmatprep.subr.bf16.mxu0 0
    %3245 = vmatpush1.bf16.xpose.msra.mxu0 0
    %3246 = vmatprep.subr.bf16.mxu0 0
    %3247 = vmatpush1.bf16.xpose.msra.mxu0 0
    %3248 = vmatprep.subr.bf16.mxu0 0
    %3249 = vmatpush1.bf16.xpose.msra.mxu0 0
    %3250 = vmatprep.subr.bf16.mxu0 0
    %3251 = vmatpush1.bf16.xpose.msra.mxu0 0
    %3252 = vmatprep.subr.bf16.mxu0 0
    %3253 = vmatpush1.bf16.xpose.msra.mxu0 0
    %3254 = vmatprep.subr.bf16.mxu0 0
    %3255 = vmatpush1.bf16.xpose.msra.mxu0 0
    %3256 = vmatprep.subr.bf16.mxu0 0
    %3257 = vmatpush1.bf16.xpose.msra.mxu0 0
    %3258 = vmatprep.subr.bf16.mxu0 0
    %3259 = vmatpush1.bf16.xpose.msra.mxu0 0
    %3260 = vmatprep.subr.bf16.mxu0 0
    %3261 = vmatpush1.bf16.xpose.msra.mxu0 0
    %3262 = vmatprep.subr.bf16.mxu0 0
    %3263 = vmatpush1.bf16.xpose.msra.mxu0 0
    %3264 = vmatprep.subr.bf16.mxu0 0
    %3265 = vmatpush1.bf16.xpose.msra.mxu0 0
    %3266 = vmatprep.subr.bf16.mxu0 0
    %3267 = vmatpush1.bf16.xpose.msra.mxu0 0
    %3268 = vmatprep.subr.bf16.mxu0 0
    %3269 = vmatpush1.bf16.xpose.msra.mxu0 0
    %3270 = vmatprep.mubr.bf16.mxu0 0
    %3271 = vmatmul.mubr.bf16.gmra.mrb[0].mxu0 %v3221
    %v3272 = vpop.f32.mrb[0].mxu0
    %v3273 = vadd.f32 %v351, %v3272
    %v3274 = vpop.f32.mrb[0].mxu0
    %v3275 = vpop.f32.mrb[0].mxu0
    %v3276 = vadd.f32 %v352, %v3275
    %v3277 = vpop.f32.mrb[0].mxu0
    %3278 = vmatprep.mubr.bf16.mxu0 0
    %3279 = vmatmul.mubr.bf16.gmra.mrb[0].mxu0 %v3224
    %v3280 = vpop.f32.mrb[0].mxu0
    %v3281 = vadd.f32 %v353, %v3280
    %v3282 = vpop.f32.mrb[0].mxu0
    %v3283 = vpop.f32.mrb[0].mxu0
    %v3284 = vadd.f32 %v354, %v3283
    %v3285 = vpop.f32.mrb[0].mxu0
    %3286 = vmatprep.mubr.bf16.mxu0 0
    %3287 = vmatmul.mubr.bf16.gmra.mrb[0].mxu0 %v3227
    %v3288 = vpop.f32.mrb[0].mxu0
    %v3289 = vadd.f32 %v355, %v3288
    %v3290 = vpop.f32.mrb[0].mxu0
    %v3291 = vpop.f32.mrb[0].mxu0
    %v3292 = vadd.f32 %v356, %v3291
    %v3293 = vpop.f32.mrb[0].mxu0
    %3294 = vdwg.mxu0
    %v3295 = vsel %vm687, %v3273, -inf
    %3296 = vmax.xlane.f32.xlu0 %v3295
    %v3297 = vpop.xlane.xlu0 %3296
    %v3298 = vsel %vm687, %v3276, -inf
    %3299 = vmax.xlane.f32.xlu0 %v3298
    %v3300 = vpop.xlane.xlu0 %3299
    %v3301 = vsel %vm687, %v3281, -inf
    %3302 = vmax.xlane.f32.xlu0 %v3301
    %v3303 = vpop.xlane.xlu0 %3302
    %v3304 = vsel %vm687, %v3284, -inf
    %3305 = vmax.xlane.f32.xlu0 %v3304
    %v3306 = vpop.xlane.xlu0 %3305
    %v3307 = vsel %vm687, %v3289, -inf
    %3308 = vmax.xlane.f32.xlu0 %v3307
    %v3309 = vpop.xlane.xlu0 %3308
    %v3310 = vsel %vm687, %v3292, -inf
    %3311 = vmax.xlane.f32.xlu0 %v3310
    %v3312 = vpop.xlane.xlu0 %3311
    %v3313 = vsub.f32 %v3273, %v3297
    %v3314 = vsub.f32 %v3276, %v3300
    %v3315 = vsub.f32 %v3281, %v3303
    %v3316 = vsub.f32 %v3284, %v3306
    %v3317 = vsub.f32 %v3289, %v3309
    %v3318 = vsub.f32 %v3292, %v3312
    %v3319 = vmul.f32 %v3313, 1.442695
    %v3320 = vpow.pop %v3319
    %v3321 = vmul.f32 %v3314, 1.442695
    %v3322 = vpow.pop %v3321
    %v3323 = vmul.f32 %v3315, 1.442695
    %v3324 = vpow.pop %v3323
    %v3325 = vmul.f32 %v3316, 1.442695
    %v3326 = vpow.pop %v3325
    %v3327 = vmul.f32 %v3317, 1.442695
    %v3328 = vpow.pop %v3327
    %v3329 = vmul.f32 %v3318, 1.442695
    %v3330 = vpow.pop %v3329
    %v3331 = vsel %vm687, %v3320, 0.0
    %3332 = vadd.xlane.f32.xlu0 %v3331
    %v3333 = vpop.xlane.xlu0 %3332
    %v3334 = vsel %vm687, %v3322, 0.0
    %3335 = vadd.xlane.f32.xlu0 %v3334
    %v3336 = vpop.xlane.xlu0 %3335
    %v3337 = vsel %vm687, %v3324, 0.0
    %3338 = vadd.xlane.f32.xlu0 %v3337
    %v3339 = vpop.xlane.xlu0 %3338
    %v3340 = vsel %vm687, %v3326, 0.0
    %3341 = vadd.xlane.f32.xlu0 %v3340
    %v3342 = vpop.xlane.xlu0 %3341
    %v3343 = vsel %vm687, %v3328, 0.0
    %3344 = vadd.xlane.f32.xlu0 %v3343
    %v3345 = vpop.xlane.xlu0 %3344
    %v3346 = vsel %vm687, %v3330, 0.0
    %3347 = vadd.xlane.f32.xlu0 %v3346
    %v3348 = vpop.xlane.xlu0 %3347
    %v3349 = vrcp.pop %v3333
    %v3350 = vrcp.pop %v3336
    %v3351 = vrcp.pop %v3339
    %v3352 = vrcp.pop %v3342
    %v3353 = vrcp.pop %v3345
    %v3354 = vrcp.pop %v3348
    %v3355 = vmul.f32 %v3320, %v3349
    %v3356 = vmul.f32 %v3322, %v3350
    %v3357 = vmul.f32 %v3324, %v3351
    %v3358 = vmul.f32 %v3326, %v3352
    %v3359 = vmul.f32 %v3328, %v3353
    %v3360 = vmul.f32 %v3330, %v3354
    %v3361 = vpack.c.bf16 %v3356, %v3355
    %v3362 = vpack.c.bf16 %v3358, %v3357
    %v3363 = vpack.c.bf16 %v3360, %v3359
    %3364 = vrot.lane.b32.xlu0 %v2519, 80
    %v3365 = vpop.permute.xlu0 %3364
    %3366 = vrot.lane.b32.xlu0 %v2521, 80
    %v3367 = vpop.permute.xlu0 %3366
    %3368 = vrot.lane.b32.xlu0 %v2523, 80
    %v3369 = vpop.permute.xlu0 %3368
    %v3374 = vsel %vm687, %v3361, 0
    %v3377 = vsel %vm687, %v3362, 0
    %v3380 = vsel %vm687, %v3363, 0
    %3382 = vmatprep.subr.bf16.mxu0 0
    %3383 = vmatpush1.bf16.msra.mxu0 %v3365
    %3384 = vmatprep.subr.bf16.mxu0 0
    %3385 = vmatpush1.bf16.msra.mxu0 %v3367
    %3386 = vmatprep.subr.bf16.mxu0 0
    %3387 = vmatpush1.bf16.msra.mxu0 %v3369
    %3388 = vmatprep.subr.bf16.mxu0 0
    %3389 = vmatpush1.bf16.msra.mxu0 0
    %3390 = vmatprep.subr.bf16.mxu0 0
    %3391 = vmatpush1.bf16.msra.mxu0 0
    %3392 = vmatprep.subr.bf16.mxu0 0
    %3393 = vmatpush1.bf16.msra.mxu0 0
    %3394 = vmatprep.subr.bf16.mxu0 0
    %3395 = vmatpush1.bf16.msra.mxu0 0
    %3396 = vmatprep.subr.bf16.mxu0 0
    %3397 = vmatpush1.bf16.msra.mxu0 0
    %3398 = vmatprep.subr.bf16.mxu0 0
    %3399 = vmatpush1.bf16.msra.mxu0 0
    %3400 = vmatprep.subr.bf16.mxu0 0
    %3401 = vmatpush1.bf16.msra.mxu0 0
    %3402 = vmatprep.subr.bf16.mxu0 0
    %3403 = vmatpush1.bf16.msra.mxu0 0
    %3404 = vmatprep.subr.bf16.mxu0 0
    %3405 = vmatpush1.bf16.msra.mxu0 0
    %3406 = vmatprep.subr.bf16.mxu0 0
    %3407 = vmatpush1.bf16.msra.mxu0 0
    %3408 = vmatprep.subr.bf16.mxu0 0
    %3409 = vmatpush1.bf16.msra.mxu0 0
    %3410 = vmatprep.subr.bf16.mxu0 0
    %3411 = vmatpush1.bf16.msra.mxu0 0
    %3412 = vmatprep.subr.bf16.mxu0 0
    %3413 = vmatpush1.bf16.msra.mxu0 0
    %3414 = vmatprep.mubr.bf16.mxu0 0
    %3415 = vmatmul.mubr.bf16.gmra.mrb[0].mxu0 %v3374
    %v3416 = vpop.f32.mrb[0].mxu0
    %v3417 = vadd.f32 0.0, %v3416
    %v3418 = vpop.f32.mrb[0].mxu0
    %v3419 = vpop.f32.mrb[0].mxu0
    %v3420 = vadd.f32 0.0, %v3419
    %v3421 = vpop.f32.mrb[0].mxu0
    %3422 = vmatprep.mubr.bf16.mxu0 0
    %3423 = vmatmul.mubr.bf16.gmra.mrb[0].mxu0 %v3377
    %v3424 = vpop.f32.mrb[0].mxu0
    %v3425 = vadd.f32 0.0, %v3424
    %v3426 = vpop.f32.mrb[0].mxu0
    %v3427 = vpop.f32.mrb[0].mxu0
    %v3428 = vadd.f32 0.0, %v3427
    %v3429 = vpop.f32.mrb[0].mxu0
    %3430 = vmatprep.mubr.bf16.mxu0 0
    %3431 = vmatmul.mubr.bf16.gmra.mrb[0].mxu0 %v3380
    %v3432 = vpop.f32.mrb[0].mxu0
    %v3433 = vadd.f32 0.0, %v3432
    %v3434 = vpop.f32.mrb[0].mxu0
    %v3435 = vpop.f32.mrb[0].mxu0
    %v3436 = vadd.f32 0.0, %v3435
    %v3437 = vpop.f32.mrb[0].mxu0
    %3438 = vdwg.mxu0
    %3445 = vrot.lane.b32.xlu0 %v2955, 16
    %v3446 = vpop.permute.xlu0 %3445
    %3447 = vrot.lane.b32.xlu0 %v2958, 16
    %v3448 = vpop.permute.xlu0 %3447
    %3449 = vrot.lane.b32.xlu0 %v2963, 16
    %v3450 = vpop.permute.xlu0 %3449
    %3451 = vrot.lane.b32.xlu0 %v2966, 16
    %v3452 = vpop.permute.xlu0 %3451
    %3453 = vrot.lane.b32.xlu0 %v2971, 16
    %v3454 = vpop.permute.xlu0 %3453
    %3455 = vrot.lane.b32.xlu0 %v2974, 16
    %v3456 = vpop.permute.xlu0 %3455
    %3469 = vrot.lane.b32.xlu0 %v3186, 32
    %v3470 = vpop.permute.xlu0 %3469
    %3471 = vrot.lane.b32.xlu0 %v3189, 32
    %v3472 = vpop.permute.xlu0 %3471
    %3473 = vrot.lane.b32.xlu0 %v3194, 32
    %v3474 = vpop.permute.xlu0 %3473
    %3475 = vrot.lane.b32.xlu0 %v3197, 32
    %v3476 = vpop.permute.xlu0 %3475
    %3477 = vrot.lane.b32.xlu0 %v3202, 32
    %v3478 = vpop.permute.xlu0 %3477
    %3479 = vrot.lane.b32.xlu0 %v3205, 32
    %v3480 = vpop.permute.xlu0 %3479
    %3493 = vrot.lane.b32.xlu0 %v3417, 48
    %v3494 = vpop.permute.xlu0 %3493
    %3495 = vrot.lane.b32.xlu0 %v3420, 48
    %v3496 = vpop.permute.xlu0 %3495
    %3497 = vrot.lane.b32.xlu0 %v3425, 48
    %v3498 = vpop.permute.xlu0 %3497
    %3499 = vrot.lane.b32.xlu0 %v3428, 48
    %v3500 = vpop.permute.xlu0 %3499
    %3501 = vrot.lane.b32.xlu0 %v3433, 48
    %v3502 = vpop.permute.xlu0 %3501
    %3503 = vrot.lane.b32.xlu0 %v3436, 48
    %v3504 = vpop.permute.xlu0 %3503
    %v3511 = vsel %vm611, %v2721, %v3446
    %v3512 = vsel %vm611, %v2724, %v3448
    %v3513 = vsel %vm611, %v2729, %v3450
    %v3514 = vsel %vm611, %v2732, %v3452
    %v3515 = vsel %vm611, %v2737, %v3454
    %v3516 = vsel %vm611, %v2740, %v3456
    %v3517 = vsel %vm1597, %v3511, %v3470
    %v3518 = vsel %vm1597, %v3512, %v3472
    %v3519 = vsel %vm1597, %v3513, %v3474
    %v3520 = vsel %vm1597, %v3514, %v3476
    %v3521 = vsel %vm1597, %v3515, %v3478
    %v3522 = vsel %vm1597, %v3516, %v3480
    %v3523 = vsel %vm687, %v3517, %v3494
    %v3524 = vsel %vm687, %v3518, %v3496
    %v3525 = vsel %vm687, %v3519, %v3498
    %v3526 = vsel %vm687, %v3520, %v3500
    %v3527 = vsel %vm687, %v3521, %v3502
    %v3528 = vsel %vm687, %v3522, %v3504
    %v3529 = vpack.c.bf16 %v3524, %v3523
    %v3530 = vpack.c.bf16 %v3526, %v3525
    %v3531 = vpack.c.bf16 %v3528, %v3527
    %s3532 = scalar_lea.vmem %s10, 32
    %v3533 = vld [vmem:[%s3532] sm:$0xf]
    %v3534 = vld [vmem:[%s3532 + $0x4] sm:$0xf]
    %v3535 = vld [vmem:[%s3532 + $0x8] sm:$0xf]
    %v3536 = vld [vmem:[%s3532 + $0xc] sm:$0xf]
    %v3537 = vld [vmem:[%s3532 + $0x10] sm:$0xf]
    %v3538 = vld [vmem:[%s3532 + $0x14] sm:$0xf]
    %v3539 = vld [vmem:[%s3532 + $0x18] sm:$0xf]
    %v3540 = vld [vmem:[%s3532 + $0x1c] sm:$0xf]
    %v3549 = vunpack.c.l.b16 %v3533
    %v3550 = vunpack.c.l.b16 %v3534
    %v3551 = vunpack.c.l.b16 %v3535
    %v3552 = vunpack.c.l.b16 %v3536
    %v3553 = vunpack.c.l.b16 %v3537
    %v3554 = vunpack.c.l.b16 %v3538
    %v3555 = vunpack.c.l.b16 %v3539
    %v3556 = vunpack.c.l.b16 %v3540
    %v3557 = vpack.c.b16 %v3550, %v3549
    %v3558 = vpack.c.b16 %v3552, %v3551
    %v3559 = vpack.c.b16 %v3554, %v3553
    %v3560 = vpack.c.b16 %v3556, %v3555
    %v3566 = vsel %vm178, %v3529, 0
    %v3569 = vsel %vm178, %v3530, 0
    %v3572 = vsel %vm178, %v3531, 0
    %3574 = vmatprep.subr.bf16.mxu0 0
    %3575 = vmatpush1.bf16.msra.mxu0 %v3557
    %3576 = vmatprep.subr.bf16.mxu0 0
    %3577 = vmatpush1.bf16.msra.mxu0 %v3558
    %3578 = vmatprep.subr.bf16.mxu0 0
    %3579 = vmatpush1.bf16.msra.mxu0 %v3559
    %3580 = vmatprep.subr.bf16.mxu0 0
    %3581 = vmatpush1.bf16.msra.mxu0 %v3560
    %3582 = vmatprep.subr.bf16.mxu0 0
    %3583 = vmatpush1.bf16.msra.mxu0 0
    %3584 = vmatprep.subr.bf16.mxu0 0
    %3585 = vmatpush1.bf16.msra.mxu0 0
    %3586 = vmatprep.subr.bf16.mxu0 0
    %3587 = vmatpush1.bf16.msra.mxu0 0
    %3588 = vmatprep.subr.bf16.mxu0 0
    %3589 = vmatpush1.bf16.msra.mxu0 0
    %3590 = vmatprep.subr.bf16.mxu0 0
    %3591 = vmatpush1.bf16.msra.mxu0 0
    %3592 = vmatprep.subr.bf16.mxu0 0
    %3593 = vmatpush1.bf16.msra.mxu0 0
    %3594 = vmatprep.subr.bf16.mxu0 0
    %3595 = vmatpush1.bf16.msra.mxu0 0
    %3596 = vmatprep.subr.bf16.mxu0 0
    %3597 = vmatpush1.bf16.msra.mxu0 0
    %3598 = vmatprep.subr.bf16.mxu0 0
    %3599 = vmatpush1.bf16.msra.mxu0 0
    %3600 = vmatprep.subr.bf16.mxu0 0
    %3601 = vmatpush1.bf16.msra.mxu0 0
    %3602 = vmatprep.subr.bf16.mxu0 0
    %3603 = vmatpush1.bf16.msra.mxu0 0
    %3604 = vmatprep.subr.bf16.mxu0 0
    %3605 = vmatpush1.bf16.msra.mxu0 0
    %3606 = vmatprep.mubr.bf16.mxu0 0
    %3607 = vmatmul.mubr.bf16.gmra.mrb[0].mxu0 %v3566
    %v3608 = vpop.f32.mrb[0].mxu0
    %v3609 = vadd.f32 0.0, %v3608
    %v3610 = vpop.f32.mrb[0].mxu0
    %v3611 = vpop.f32.mrb[0].mxu0
    %v3612 = vadd.f32 0.0, %v3611
    %v3613 = vpop.f32.mrb[0].mxu0
    %3614 = vmatprep.mubr.bf16.mxu0 0
    %3615 = vmatmul.mubr.bf16.gmra.mrb[0].mxu0 %v3569
    %v3616 = vpop.f32.mrb[0].mxu0
    %v3617 = vadd.f32 0.0, %v3616
    %v3618 = vpop.f32.mrb[0].mxu0
    %v3619 = vpop.f32.mrb[0].mxu0
    %v3620 = vadd.f32 0.0, %v3619
    %v3621 = vpop.f32.mrb[0].mxu0
    %3622 = vmatprep.mubr.bf16.mxu0 0
    %3623 = vmatmul.mubr.bf16.gmra.mrb[0].mxu0 %v3572
    %v3624 = vpop.f32.mrb[0].mxu0
    %v3625 = vadd.f32 0.0, %v3624
    %v3626 = vpop.f32.mrb[0].mxu0
    %v3627 = vpop.f32.mrb[0].mxu0
    %v3628 = vadd.f32 0.0, %v3627
    %v3629 = vpop.f32.mrb[0].mxu0
    %3630 = vdwg.mxu0
    %v3631 = vadd.f32 %v2269, %v3609
    %v3632 = vadd.f32 %v2270, %v3612
    %v3633 = vadd.f32 %v2271, %v3617
    %v3634 = vadd.f32 %v2272, %v3620
    %v3635 = vadd.f32 %v2273, %v3625
    %v3636 = vadd.f32 %v2274, %v3628
    %s3637 = scalar_lea.vmem %s11, 1
    %v3638 = vld [vmem:[%s3637] sm:$0x1]
    %v3640 = vlaneseq
    %v3641 = vshrl.u32 %v3640, 7
    %v3642 = vsub.s32 0, %v3641
    %v3643 = vrot.slane %v3638, %v3642
    %v3645 = vadd.f32 %v3631, %v3643
    %v3646 = vadd.f32 %v3632, %v3643
    %v3647 = vadd.f32 %v3633, %v3643
    %v3648 = vadd.f32 %v3634, %v3643
    %v3649 = vadd.f32 %v3635, %v3643
    %v3650 = vadd.f32 %v3636, %v3643
    %s3651 = scalar_lea.vmem %s12, 1
    %v3652 = vld [vmem:[%s3651] sm:$0x1]
    %s3653 = scalar_lea.vmem %s13, 1
    %v3654 = vld [vmem:[%s3653] sm:$0x1]
    %v3655 = vsel %vm178, %v3645, 0.0
    %3656 = vadd.xlane.f32.xlu0 %v3655
    %v3657 = vpop.xlane.xlu0 %3656
    %v3658 = vsel %vm178, %v3646, 0.0
    %3659 = vadd.xlane.f32.xlu0 %v3658
    %v3660 = vpop.xlane.xlu0 %3659
    %v3661 = vsel %vm178, %v3647, 0.0
    %3662 = vadd.xlane.f32.xlu0 %v3661
    %v3663 = vpop.xlane.xlu0 %3662
    %v3664 = vsel %vm178, %v3648, 0.0
    %3665 = vadd.xlane.f32.xlu0 %v3664
    %v3666 = vpop.xlane.xlu0 %3665
    %v3667 = vsel %vm178, %v3649, 0.0
    %3668 = vadd.xlane.f32.xlu0 %v3667
    %v3669 = vpop.xlane.xlu0 %3668
    %v3670 = vsel %vm178, %v3650, 0.0
    %3671 = vadd.xlane.f32.xlu0 %v3670
    %v3672 = vpop.xlane.xlu0 %3671
    %v3673 = vmul.f32 %v3657, %v266
    %v3674 = vmul.f32 %v3660, %v266
    %v3675 = vmul.f32 %v3663, %v266
    %v3676 = vmul.f32 %v3666, %v266
    %v3677 = vmul.f32 %v3669, %v266
    %v3678 = vmul.f32 %v3672, %v266
    %v3679 = vsub.f32 %v3645, %v3673
    %v3680 = vsub.f32 %v3646, %v3674
    %v3681 = vsub.f32 %v3647, %v3675
    %v3682 = vsub.f32 %v3648, %v3676
    %v3683 = vsub.f32 %v3649, %v3677
    %v3684 = vsub.f32 %v3650, %v3678
    %v3685 = vmul.f32 %v3679, %v3679
    %v3686 = vmul.f32 %v3680, %v3680
    %v3687 = vmul.f32 %v3681, %v3681
    %v3688 = vmul.f32 %v3682, %v3682
    %v3689 = vmul.f32 %v3683, %v3683
    %v3690 = vmul.f32 %v3684, %v3684
    %v3691 = vsel %vm178, %v3685, 0.0
    %3692 = vadd.xlane.f32.xlu0 %v3691
    %v3693 = vpop.xlane.xlu0 %3692
    %v3694 = vsel %vm178, %v3686, 0.0
    %3695 = vadd.xlane.f32.xlu0 %v3694
    %v3696 = vpop.xlane.xlu0 %3695
    %v3697 = vsel %vm178, %v3687, 0.0
    %3698 = vadd.xlane.f32.xlu0 %v3697
    %v3699 = vpop.xlane.xlu0 %3698
    %v3700 = vsel %vm178, %v3688, 0.0
    %3701 = vadd.xlane.f32.xlu0 %v3700
    %v3702 = vpop.xlane.xlu0 %3701
    %v3703 = vsel %vm178, %v3689, 0.0
    %3704 = vadd.xlane.f32.xlu0 %v3703
    %v3705 = vpop.xlane.xlu0 %3704
    %v3706 = vsel %vm178, %v3690, 0.0
    %3707 = vadd.xlane.f32.xlu0 %v3706
    %v3708 = vpop.xlane.xlu0 %3707
    %v3709 = vmul.f32 %v3693, %v266
    %v3710 = vmul.f32 %v3696, %v266
    %v3711 = vmul.f32 %v3699, %v266
    %v3712 = vmul.f32 %v3702, %v266
    %v3713 = vmul.f32 %v3705, %v266
    %v3714 = vmul.f32 %v3708, %v266
    %v3715 = vadd.f32 %v3709, 1e-05
    %v3716 = vadd.f32 %v3710, 1e-05
    %v3717 = vadd.f32 %v3711, 1e-05
    %v3718 = vadd.f32 %v3712, 1e-05
    %v3719 = vadd.f32 %v3713, 1e-05
    %v3720 = vadd.f32 %v3714, 1e-05
    %v3721 = vrsqrt.pop %v3715
    %v3722 = vrsqrt.pop %v3716
    %v3723 = vrsqrt.pop %v3717
    %v3724 = vrsqrt.pop %v3718
    %v3725 = vrsqrt.pop %v3719
    %v3726 = vrsqrt.pop %v3720
    %v3727 = vmul.f32 %v3679, %v3721
    %v3728 = vmul.f32 %v3680, %v3722
    %v3729 = vmul.f32 %v3681, %v3723
    %v3730 = vmul.f32 %v3682, %v3724
    %v3731 = vmul.f32 %v3683, %v3725
    %v3732 = vmul.f32 %v3684, %v3726
    %v3734 = vlaneseq
    %v3735 = vshrl.u32 %v3734, 7
    %v3736 = vsub.s32 0, %v3735
    %v3737 = vrot.slane %v3652, %v3736
    %v3739 = vmul.f32 %v3727, %v3737
    %v3740 = vmul.f32 %v3728, %v3737
    %v3741 = vmul.f32 %v3729, %v3737
    %v3742 = vmul.f32 %v3730, %v3737
    %v3743 = vmul.f32 %v3731, %v3737
    %v3744 = vmul.f32 %v3732, %v3737
    %v3746 = vlaneseq
    %v3747 = vshrl.u32 %v3746, 7
    %v3748 = vsub.s32 0, %v3747
    %v3749 = vrot.slane %v3654, %v3748
    %v3751 = vadd.f32 %v3739, %v3749
    %v3752 = vadd.f32 %v3740, %v3749
    %v3753 = vadd.f32 %v3741, %v3749
    %v3754 = vadd.f32 %v3742, %v3749
    %v3755 = vadd.f32 %v3743, %v3749
    %v3756 = vadd.f32 %v3744, %v3749
    %s3757 = scalar_lea.vmem %s14, 64
    %v3758 = vld [vmem:[%s3757] sm:$0xff]
    %v3759 = vld [vmem:[%s3757 + $0x8] sm:$0xff]
    %v3760 = vld [vmem:[%s3757 + $0x10] sm:$0xff]
    %v3761 = vld [vmem:[%s3757 + $0x18] sm:$0xff]
    %v3762 = vld [vmem:[%s3757 + $0x20] sm:$0xff]
    %v3763 = vld [vmem:[%s3757 + $0x28] sm:$0xff]
    %v3764 = vld [vmem:[%s3757 + $0x30] sm:$0xff]
    %v3765 = vld [vmem:[%s3757 + $0x38] sm:$0xff]
    %v3766 = vpack.c.bf16 %v3752, %v3751
    %v3767 = vpack.c.bf16 %v3754, %v3753
    %v3768 = vpack.c.bf16 %v3756, %v3755
    %s3769 = scalar_lea.vmem %s15, 2
    %v3770 = vld [vmem:[%s3769] sm:$0x3]
    %v3772 = vlaneseq
    %v3773 = vshrl.u32 %v3772, 7
    %v3774 = vsub.s32 0, %v3773
    %v3775 = vrot.slane %v3770, %v3774
    %v3776 = vlaneseq
    %v3777 = vshrl.u32 %v3776, 7
    %v3778 = vsub.s32 1, %v3777
    %v3779 = vrot.slane %v3770, %v3778
    %v3790 = vunpack.c.l.b16 %v3758
    %v3791 = vunpack.c.h.b16 %v3758
    %v3792 = vunpack.c.l.b16 %v3759
    %v3793 = vunpack.c.h.b16 %v3759
    %v3794 = vunpack.c.l.b16 %v3760
    %v3795 = vunpack.c.h.b16 %v3760
    %v3796 = vunpack.c.l.b16 %v3761
    %v3797 = vunpack.c.h.b16 %v3761
    %v3798 = vunpack.c.l.b16 %v3762
    %v3799 = vunpack.c.h.b16 %v3762
    %v3800 = vunpack.c.l.b16 %v3763
    %v3801 = vunpack.c.h.b16 %v3763
    %v3802 = vunpack.c.l.b16 %v3764
    %v3803 = vunpack.c.h.b16 %v3764
    %v3804 = vunpack.c.l.b16 %v3765
    %v3805 = vunpack.c.h.b16 %v3765
    %v3806 = vpack.c.b16 %v3792, %v3790
    %v3807 = vpack.c.b16 %v3793, %v3791
    %v3808 = vpack.c.b16 %v3796, %v3794
    %v3809 = vpack.c.b16 %v3797, %v3795
    %v3810 = vpack.c.b16 %v3800, %v3798
    %v3811 = vpack.c.b16 %v3801, %v3799
    %v3812 = vpack.c.b16 %v3804, %v3802
    %v3813 = vpack.c.b16 %v3805, %v3803
    %v3823 = vsel %vm178, %v3766, 0
    %v3826 = vsel %vm178, %v3767, 0
    %v3829 = vsel %vm178, %v3768, 0
    %3831 = vmatprep.subr.bf16.mxu0 %v3807
    %3832 = vmatpush1.bf16.msra.mxu0 %v3806
    %3833 = vmatprep.subr.bf16.mxu0 %v3809
    %3834 = vmatpush1.bf16.msra.mxu0 %v3808
    %3835 = vmatprep.subr.bf16.mxu0 %v3811
    %3836 = vmatpush1.bf16.msra.mxu0 %v3810
    %3837 = vmatprep.subr.bf16.mxu0 %v3813
    %3838 = vmatpush1.bf16.msra.mxu0 %v3812
    %3839 = vmatprep.subr.bf16.mxu0 0
    %3840 = vmatpush1.bf16.msra.mxu0 0
    %3841 = vmatprep.subr.bf16.mxu0 0
    %3842 = vmatpush1.bf16.msra.mxu0 0
    %3843 = vmatprep.subr.bf16.mxu0 0
    %3844 = vmatpush1.bf16.msra.mxu0 0
    %3845 = vmatprep.subr.bf16.mxu0 0
    %3846 = vmatpush1.bf16.msra.mxu0 0
    %3847 = vmatprep.subr.bf16.mxu0 0
    %3848 = vmatpush1.bf16.msra.mxu0 0
    %3849 = vmatprep.subr.bf16.mxu0 0
    %3850 = vmatpush1.bf16.msra.mxu0 0
    %3851 = vmatprep.subr.bf16.mxu0 0
    %3852 = vmatpush1.bf16.msra.mxu0 0
    %3853 = vmatprep.subr.bf16.mxu0 0
    %3854 = vmatpush1.bf16.msra.mxu0 0
    %3855 = vmatprep.subr.bf16.mxu0 0
    %3856 = vmatpush1.bf16.msra.mxu0 0
    %3857 = vmatprep.subr.bf16.mxu0 0
    %3858 = vmatpush1.bf16.msra.mxu0 0
    %3859 = vmatprep.subr.bf16.mxu0 0
    %3860 = vmatpush1.bf16.msra.mxu0 0
    %3861 = vmatprep.subr.bf16.mxu0 0
    %3862 = vmatpush1.bf16.msra.mxu0 0
    %3863 = vmatprep.mubr.bf16.mxu0 0
    %3864 = vmatmul.mubr.bf16.gmra.mrb[0].mxu0 %v3823
    %v3865 = vpop.f32.mrb[0].mxu0
    %v3866 = vadd.f32 %v3775, %v3865
    %v3867 = vpop.f32.mrb[0].mxu0
    %v3868 = vadd.f32 %v3779, %v3867
    %v3869 = vpop.f32.mrb[0].mxu0
    %v3870 = vadd.f32 %v3775, %v3869
    %v3871 = vpop.f32.mrb[0].mxu0
    %v3872 = vadd.f32 %v3779, %v3871
    %3873 = vmatprep.mubr.bf16.mxu0 0
    %3874 = vmatmul.mubr.bf16.gmra.mrb[0].mxu0 %v3826
    %v3875 = vpop.f32.mrb[0].mxu0
    %v3876 = vadd.f32 %v3775, %v3875
    %v3877 = vpop.f32.mrb[0].mxu0
    %v3878 = vadd.f32 %v3779, %v3877
    %v3879 = vpop.f32.mrb[0].mxu0
    %v3880 = vadd.f32 %v3775, %v3879
    %v3881 = vpop.f32.mrb[0].mxu0
    %v3882 = vadd.f32 %v3779, %v3881
    %3883 = vmatprep.mubr.bf16.mxu0 0
    %3884 = vmatmul.mubr.bf16.gmra.mrb[0].mxu0 %v3829
    %v3885 = vpop.f32.mrb[0].mxu0
    %v3886 = vadd.f32 %v3775, %v3885
    %v3887 = vpop.f32.mrb[0].mxu0
    %v3888 = vadd.f32 %v3779, %v3887
    %v3889 = vpop.f32.mrb[0].mxu0
    %v3890 = vadd.f32 %v3775, %v3889
    %v3891 = vpop.f32.mrb[0].mxu0
    %v3892 = vadd.f32 %v3779, %v3891
    %3893 = vdwg.mxu0
    %v3894 = vmul.f32 %v3866, 1.702
    %v3895 = vmul.f32 %v3868, 1.702
    %v3896 = vmul.f32 %v3870, 1.702
    %v3897 = vmul.f32 %v3872, 1.702
    %v3898 = vmul.f32 %v3876, 1.702
    %v3899 = vmul.f32 %v3878, 1.702
    %v3900 = vmul.f32 %v3880, 1.702
    %v3901 = vmul.f32 %v3882, 1.702
    %v3902 = vmul.f32 %v3886, 1.702
    %v3903 = vmul.f32 %v3888, 1.702
    %v3904 = vmul.f32 %v3890, 1.702
    %v3905 = vmul.f32 %v3892, 1.702
    %v3906 = vxor.u32 %v3894, 2147483648
    %v3907 = vxor.u32 %v3895, 2147483648
    %v3908 = vxor.u32 %v3896, 2147483648
    %v3909 = vxor.u32 %v3897, 2147483648
    %v3910 = vxor.u32 %v3898, 2147483648
    %v3911 = vxor.u32 %v3899, 2147483648
    %v3912 = vxor.u32 %v3900, 2147483648
    %v3913 = vxor.u32 %v3901, 2147483648
    %v3914 = vxor.u32 %v3902, 2147483648
    %v3915 = vxor.u32 %v3903, 2147483648
    %v3916 = vxor.u32 %v3904, 2147483648
    %v3917 = vxor.u32 %v3905, 2147483648
    %v3918 = vmul.f32 %v3906, 1.442695
    %v3919 = vpow.pop %v3918
    %v3920 = vmul.f32 %v3907, 1.442695
    %v3921 = vpow.pop %v3920
    %v3922 = vmul.f32 %v3908, 1.442695
    %v3923 = vpow.pop %v3922
    %v3924 = vmul.f32 %v3909, 1.442695
    %v3925 = vpow.pop %v3924
    %v3926 = vmul.f32 %v3910, 1.442695
    %v3927 = vpow.pop %v3926
    %v3928 = vmul.f32 %v3911, 1.442695
    %v3929 = vpow.pop %v3928
    %v3930 = vmul.f32 %v3912, 1.442695
    %v3931 = vpow.pop %v3930
    %v3932 = vmul.f32 %v3913, 1.442695
    %v3933 = vpow.pop %v3932
    %v3934 = vmul.f32 %v3914, 1.442695
    %v3935 = vpow.pop %v3934
    %v3936 = vmul.f32 %v3915, 1.442695
    %v3937 = vpow.pop %v3936
    %v3938 = vmul.f32 %v3916, 1.442695
    %v3939 = vpow.pop %v3938
    %v3940 = vmul.f32 %v3917, 1.442695
    %v3941 = vpow.pop %v3940
    %v3942 = vadd.f32 %v3919, 1.0
    %v3943 = vadd.f32 %v3921, 1.0
    %v3944 = vadd.f32 %v3923, 1.0
    %v3945 = vadd.f32 %v3925, 1.0
    %v3946 = vadd.f32 %v3927, 1.0
    %v3947 = vadd.f32 %v3929, 1.0
    %v3948 = vadd.f32 %v3931, 1.0
    %v3949 = vadd.f32 %v3933, 1.0
    %v3950 = vadd.f32 %v3935, 1.0
    %v3951 = vadd.f32 %v3937, 1.0
    %v3952 = vadd.f32 %v3939, 1.0
    %v3953 = vadd.f32 %v3941, 1.0
    %v3954 = vrcp.pop %v3942
    %v3955 = vmul.f32 1.0, %v3954
    %v3956 = vrcp.pop %v3943
    %v3957 = vmul.f32 1.0, %v3956
    %v3958 = vrcp.pop %v3944
    %v3959 = vmul.f32 1.0, %v3958
    %v3960 = vrcp.pop %v3945
    %v3961 = vmul.f32 1.0, %v3960
    %v3962 = vrcp.pop %v3946
    %v3963 = vmul.f32 1.0, %v3962
    %v3964 = vrcp.pop %v3947
    %v3965 = vmul.f32 1.0, %v3964
    %v3966 = vrcp.pop %v3948
    %v3967 = vmul.f32 1.0, %v3966
    %v3968 = vrcp.pop %v3949
    %v3969 = vmul.f32 1.0, %v3968
    %v3970 = vrcp.pop %v3950
    %v3971 = vmul.f32 1.0, %v3970
    %v3972 = vrcp.pop %v3951
    %v3973 = vmul.f32 1.0, %v3972
    %v3974 = vrcp.pop %v3952
    %v3975 = vmul.f32 1.0, %v3974
    %v3976 = vrcp.pop %v3953
    %v3977 = vmul.f32 1.0, %v3976
    %v3978 = vmul.f32 %v3866, %v3955
    %v3979 = vmul.f32 %v3868, %v3957
    %v3980 = vmul.f32 %v3870, %v3959
    %v3981 = vmul.f32 %v3872, %v3961
    %v3982 = vmul.f32 %v3876, %v3963
    %v3983 = vmul.f32 %v3878, %v3965
    %v3984 = vmul.f32 %v3880, %v3967
    %v3985 = vmul.f32 %v3882, %v3969
    %v3986 = vmul.f32 %v3886, %v3971
    %v3987 = vmul.f32 %v3888, %v3973
    %v3988 = vmul.f32 %v3890, %v3975
    %v3989 = vmul.f32 %v3892, %v3977
    %s3990 = scalar_lea.vmem %s16, 128
    %v3991 = vld [vmem:[%s3990] sm:$0xf]
    %v3992 = vld [vmem:[%s3990 + $0x4] sm:$0xf]
    %v3993 = vld [vmem:[%s3990 + $0x8] sm:$0xf]
    %v3994 = vld [vmem:[%s3990 + $0xc] sm:$0xf]
    %v3995 = vld [vmem:[%s3990 + $0x10] sm:$0xf]
    %v3996 = vld [vmem:[%s3990 + $0x14] sm:$0xf]
    %v3997 = vld [vmem:[%s3990 + $0x18] sm:$0xf]
    %v3998 = vld [vmem:[%s3990 + $0x1c] sm:$0xf]
    %v3999 = vld [vmem:[%s3990 + $0x20] sm:$0xf]
    %v4000 = vld [vmem:[%s3990 + $0x24] sm:$0xf]
    %v4001 = vld [vmem:[%s3990 + $0x28] sm:$0xf]
    %v4002 = vld [vmem:[%s3990 + $0x2c] sm:$0xf]
    %v4003 = vld [vmem:[%s3990 + $0x30] sm:$0xf]
    %v4004 = vld [vmem:[%s3990 + $0x34] sm:$0xf]
    %v4005 = vld [vmem:[%s3990 + $0x38] sm:$0xf]
    %v4006 = vld [vmem:[%s3990 + $0x3c] sm:$0xf]
    %v4007 = vld [vmem:[%s3990 + $0x40] sm:$0xf]
    %v4008 = vld [vmem:[%s3990 + $0x44] sm:$0xf]
    %v4009 = vld [vmem:[%s3990 + $0x48] sm:$0xf]
    %v4010 = vld [vmem:[%s3990 + $0x4c] sm:$0xf]
    %v4011 = vld [vmem:[%s3990 + $0x50] sm:$0xf]
    %v4012 = vld [vmem:[%s3990 + $0x54] sm:$0xf]
    %v4013 = vld [vmem:[%s3990 + $0x58] sm:$0xf]
    %v4014 = vld [vmem:[%s3990 + $0x5c] sm:$0xf]
    %v4015 = vld [vmem:[%s3990 + $0x60] sm:$0xf]
    %v4016 = vld [vmem:[%s3990 + $0x64] sm:$0xf]
    %v4017 = vld [vmem:[%s3990 + $0x68] sm:$0xf]
    %v4018 = vld [vmem:[%s3990 + $0x6c] sm:$0xf]
    %v4019 = vld [vmem:[%s3990 + $0x70] sm:$0xf]
    %v4020 = vld [vmem:[%s3990 + $0x74] sm:$0xf]
    %v4021 = vld [vmem:[%s3990 + $0x78] sm:$0xf]
    %v4022 = vld [vmem:[%s3990 + $0x7c] sm:$0xf]
    %v4023 = vpack.c.bf16 %v3980, %v3978
    %v4024 = vpack.c.bf16 %v3981, %v3979
    %v4025 = vpack.c.bf16 %v3984, %v3982
    %v4026 = vpack.c.bf16 %v3985, %v3983
    %v4027 = vpack.c.bf16 %v3988, %v3986
    %v4028 = vpack.c.bf16 %v3989, %v3987
    %v4061 = vunpack.c.l.b16 %v3991
    %v4062 = vunpack.c.l.b16 %v3992
    %v4063 = vunpack.c.l.b16 %v3993
    %v4064 = vunpack.c.l.b16 %v3994
    %v4065 = vunpack.c.l.b16 %v3995
    %v4066 = vunpack.c.l.b16 %v3996
    %v4067 = vunpack.c.l.b16 %v3997
    %v4068 = vunpack.c.l.b16 %v3998
    %v4069 = vunpack.c.l.b16 %v3999
    %v4070 = vunpack.c.l.b16 %v4000
    %v4071 = vunpack.c.l.b16 %v4001
    %v4072 = vunpack.c.l.b16 %v4002
    %v4073 = vunpack.c.l.b16 %v4003
    %v4074 = vunpack.c.l.b16 %v4004
    %v4075 = vunpack.c.l.b16 %v4005
    %v4076 = vunpack.c.l.b16 %v4006
    %v4077 = vunpack.c.l.b16 %v4007
    %v4078 = vunpack.c.l.b16 %v4008
    %v4079 = vunpack.c.l.b16 %v4009
    %v4080 = vunpack.c.l.b16 %v4010
    %v4081 = vunpack.c.l.b16 %v4011
    %v4082 = vunpack.c.l.b16 %v4012
    %v4083 = vunpack.c.l.b16 %v4013
    %v4084 = vunpack.c.l.b16 %v4014
    %v4085 = vunpack.c.l.b16 %v4015
    %v4086 = vunpack.c.l.b16 %v4016
    %v4087 = vunpack.c.l.b16 %v4017
    %v4088 = vunpack.c.l.b16 %v4018
    %v4089 = vunpack.c.l.b16 %v4019
    %v4090 = vunpack.c.l.b16 %v4020
    %v4091 = vunpack.c.l.b16 %v4021
    %v4092 = vunpack.c.l.b16 %v4022
    %v4093 = vpack.c.b16 %v4062, %v4061
    %v4094 = vpack.c.b16 %v4064, %v4063
    %v4095 = vpack.c.b16 %v4066, %v4065
    %v4096 = vpack.c.b16 %v4068, %v4067
    %v4097 = vpack.c.b16 %v4070, %v4069
    %v4098 = vpack.c.b16 %v4072, %v4071
    %v4099 = vpack.c.b16 %v4074, %v4073
    %v4100 = vpack.c.b16 %v4076, %v4075
    %v4101 = vpack.c.b16 %v4078, %v4077
    %v4102 = vpack.c.b16 %v4080, %v4079
    %v4103 = vpack.c.b16 %v4082, %v4081
    %v4104 = vpack.c.b16 %v4084, %v4083
    %v4105 = vpack.c.b16 %v4086, %v4085
    %v4106 = vpack.c.b16 %v4088, %v4087
    %v4107 = vpack.c.b16 %v4090, %v4089
    %v4108 = vpack.c.b16 %v4092, %v4091
    %4125 = vmatprep.subr.bf16.mxu0 0
    %4126 = vmatpush1.bf16.msra.mxu0 %v4093
    %4127 = vmatprep.subr.bf16.mxu0 0
    %4128 = vmatpush1.bf16.msra.mxu0 %v4094
    %4129 = vmatprep.subr.bf16.mxu0 0
    %4130 = vmatpush1.bf16.msra.mxu0 %v4095
    %4131 = vmatprep.subr.bf16.mxu0 0
    %4132 = vmatpush1.bf16.msra.mxu0 %v4096
    %4133 = vmatprep.subr.bf16.mxu0 0
    %4134 = vmatpush1.bf16.msra.mxu0 %v4097
    %4135 = vmatprep.subr.bf16.mxu0 0
    %4136 = vmatpush1.bf16.msra.mxu0 %v4098
    %4137 = vmatprep.subr.bf16.mxu0 0
    %4138 = vmatpush1.bf16.msra.mxu0 %v4099
    %4139 = vmatprep.subr.bf16.mxu0 0
    %4140 = vmatpush1.bf16.msra.mxu0 %v4100
    %4141 = vmatprep.subr.bf16.mxu0 0
    %4142 = vmatpush1.bf16.msra.mxu0 %v4101
    %4143 = vmatprep.subr.bf16.mxu0 0
    %4144 = vmatpush1.bf16.msra.mxu0 %v4102
    %4145 = vmatprep.subr.bf16.mxu0 0
    %4146 = vmatpush1.bf16.msra.mxu0 %v4103
    %4147 = vmatprep.subr.bf16.mxu0 0
    %4148 = vmatpush1.bf16.msra.mxu0 %v4104
    %4149 = vmatprep.subr.bf16.mxu0 0
    %4150 = vmatpush1.bf16.msra.mxu0 %v4105
    %4151 = vmatprep.subr.bf16.mxu0 0
    %4152 = vmatpush1.bf16.msra.mxu0 %v4106
    %4153 = vmatprep.subr.bf16.mxu0 0
    %4154 = vmatpush1.bf16.msra.mxu0 %v4107
    %4155 = vmatprep.subr.bf16.mxu0 0
    %4156 = vmatpush1.bf16.msra.mxu0 %v4108
    %4157 = vmatprep.mubr.bf16.mxu0 %v4024
    %4158 = vmatmul.mubr.bf16.gmra.mrb[0].mxu0 %v4023
    %v4159 = vpop.f32.mrb[0].mxu0
    %v4160 = vpop.f32.mrb[0].mxu0
    %v4161 = vpop.f32.mrb[0].mxu0
    %v4162 = vpop.f32.mrb[0].mxu0
    %4163 = vmatprep.mubr.bf16.mxu0 %v4026
    %4164 = vmatmul.mubr.bf16.gmra.mrb[0].mxu0 %v4025
    %v4165 = vpop.f32.mrb[0].mxu0
    %v4166 = vadd.f32 0.0, %v4165
    %v4167 = vpop.f32.mrb[0].mxu0
    %v4168 = vpop.f32.mrb[0].mxu0
    %v4169 = vpop.f32.mrb[0].mxu0
    %4170 = vmatprep.mubr.bf16.mxu0 %v4028
    %4171 = vmatmul.mubr.bf16.gmra.mrb[0].mxu0 %v4027
    %v4172 = vpop.f32.mrb[0].mxu0
    %v4173 = vpop.f32.mrb[0].mxu0
    %v4174 = vpop.f32.mrb[0].mxu0
    %v4175 = vadd.f32 0.0, %v4174
    %v4176 = vpop.f32.mrb[0].mxu0
    %4177 = vdwg.mxu0
    %v4178 = vadd.f32 %v3647, %v4166
    %v4179 = vadd.f32 %v3650, %v4175
    %s4180 = scalar_lea.vmem %s17, 1
    %v4181 = vld [vmem:[%s4180] sm:$0x1]
    %v4183 = vlaneseq
    %v4184 = vshrl.u32 %v4183, 7
    %v4185 = vsub.s32 0, %v4184
    %v4186 = vrot.slane %v4181, %v4185
    %v4188 = vadd.f32 %v4178, %v4186
    %v4189 = vadd.f32 %v4179, %v4186
    %v4191 = vrot.slane %v4189, 7
    %vm4193 = vcmask 1040384
    %v4194 = vsel %vm4193, %v4188, %v4191
    %v4195 = vld [vmem:[%s18] sm:$0x1]
    %v4196 = vld [vmem:[%s19] sm:$0x1]
    %vm4197 = vcmask 517120
    %v4198 = vsel %vm4197, %v4194, 0.0
    %4199 = vadd.xlane.f32.xlu0 %v4198
    %v4200 = vpop.xlane.xlu0 %4199
    %v4201 = vmul.f32 %v4200, %v266
    %v4202 = vsub.f32 %v4194, %v4201
    %v4203 = vmul.f32 %v4202, %v4202
    %v4204 = vsel %vm4197, %v4203, 0.0
    %4205 = vadd.xlane.f32.xlu0 %v4204
    %v4206 = vpop.xlane.xlu0 %4205
    %v4207 = vmul.f32 %v4206, %v266
    %v4208 = vadd.f32 %v4207, 1e-05
    %v4209 = vrsqrt.pop %v4208
    %v4210 = vmul.f32 %v4202, %v4209
    %v4212 = vlaneseq
    %v4213 = vshrl.u32 %v4212, 7
    %v4214 = vsub.s32 0, %v4213
    %v4215 = vrot.slane %v4195, %v4214
    %v4217 = vmul.f32 %v4210, %v4215
    %v4219 = vlaneseq
    %v4220 = vshrl.u32 %v4219, 7
    %v4221 = vsub.s32 0, %v4220
    %v4222 = vrot.slane %v4196, %v4221
    %v4224 = vadd.f32 %v4217, %v4222
    %v4225 = vld [vmem:[%s20] sm:$0xf]
    %v4226 = vld [vmem:[%s20 + $0x4] sm:$0xf]
    %v4227 = vld [vmem:[%s20 + $0x8] sm:$0xf]
    %v4228 = vld [vmem:[%s20 + $0xc] sm:$0xf]
    %v4229 = vld [vmem:[%s20 + $0x10] sm:$0xf]
    %v4230 = vld [vmem:[%s20 + $0x14] sm:$0xf]
    %v4231 = vld [vmem:[%s20 + $0x18] sm:$0xf]
    %v4232 = vld [vmem:[%s20 + $0x1c] sm:$0xf]
    %v4233 = vpack.c.bf16 %v4224, %v4224
    %v4242 = vunpack.c.l.b16 %v4225
    %v4243 = vunpack.c.l.b16 %v4226
    %v4244 = vunpack.c.l.b16 %v4227
    %v4245 = vunpack.c.l.b16 %v4228
    %v4246 = vunpack.c.l.b16 %v4229
    %v4247 = vunpack.c.l.b16 %v4230
    %v4248 = vunpack.c.l.b16 %v4231
    %v4249 = vunpack.c.l.b16 %v4232
    %v4250 = vpack.c.b16 %v4243, %v4242
    %v4251 = vpack.c.b16 %v4245, %v4244
    %v4252 = vpack.c.b16 %v4247, %v4246
    %v4253 = vpack.c.b16 %v4249, %v4248
    %v4259 = vsel %vm178, %v4233, 0
    %4261 = vmatprep.subr.bf16.mxu0 0
    %4262 = vmatpush1.bf16.msra.mxu0 %v4250
    %4263 = vmatprep.subr.bf16.mxu0 0
    %4264 = vmatpush1.bf16.msra.mxu0 %v4251
    %4265 = vmatprep.subr.bf16.mxu0 0
    %4266 = vmatpush1.bf16.msra.mxu0 %v4252
    %4267 = vmatprep.subr.bf16.mxu0 0
    %4268 = vmatpush1.bf16.msra.mxu0 %v4253
    %4269 = vmatprep.subr.bf16.mxu0 0
    %4270 = vmatpush1.bf16.msra.mxu0 0
    %4271 = vmatprep.subr.bf16.mxu0 0
    %4272 = vmatpush1.bf16.msra.mxu0 0
    %4273 = vmatprep.subr.bf16.mxu0 0
    %4274 = vmatpush1.bf16.msra.mxu0 0
    %4275 = vmatprep.subr.bf16.mxu0 0
    %4276 = vmatpush1.bf16.msra.mxu0 0
    %4277 = vmatprep.subr.bf16.mxu0 0
    %4278 = vmatpush1.bf16.msra.mxu0 0
    %4279 = vmatprep.subr.bf16.mxu0 0
    %4280 = vmatpush1.bf16.msra.mxu0 0
    %4281 = vmatprep.subr.bf16.mxu0 0
    %4282 = vmatpush1.bf16.msra.mxu0 0
    %4283 = vmatprep.subr.bf16.mxu0 0
    %4284 = vmatpush1.bf16.msra.mxu0 0
    %4285 = vmatprep.subr.bf16.mxu0 0
    %4286 = vmatpush1.bf16.msra.mxu0 0
    %4287 = vmatprep.subr.bf16.mxu0 0
    %4288 = vmatpush1.bf16.msra.mxu0 0
    %4289 = vmatprep.subr.bf16.mxu0 0
    %4290 = vmatpush1.bf16.msra.mxu0 0
    %4291 = vmatprep.subr.bf16.mxu0 0
    %4292 = vmatpush1.bf16.msra.mxu0 0
    %4293 = vmatprep.mubr.bf16.mxu0 0
    %4294 = vmatmul.mubr.bf16.gmra.mrb[0].mxu0 %v4259
    %v4295 = vpop.f32.mrb[0].mxu0
    %v4296 = vadd.f32 0.0, %v4295
    %v4297 = vpop.f32.mrb[0].mxu0
    %v4298 = vpop.f32.mrb[0].mxu0
    %v4299 = vpop.f32.mrb[0].mxu0
    %4300 = vdwg.mxu0
    %vm4301 = vcmask 254976
    %4302 = vst.msk [vmem:[#allocation2] sm:$0x3] %vm4301, %v4296
    // Predicated region
    $region86: #{clip_image_encoder_forward.1} parent=1 // pred_check
      _
    $region87: #{clip_image_encoder_forward.1} parent=1 // pred_check_branch
      %4304 = sbr.rel (0) target = $region89
    $region88: #{clip_image_encoder_forward.1} parent=1 // pred_region
      %s4306 = ssub.s32 32, 32
      %4307 = vsyncadd [#allocation3], %s4306
      %s4309 = sshll.u32 [#allocation2], 4
      %s4310 = int_to_ptr.vmem [resolvable:$true] %s4309
      %4312 = dma.vmem_to_hbm [thread:$0]  %s4310, 32, %s21, [#allocation3]
    $region89: #{clip_image_encoder_forward.1} parent=1 // pred_fallthru
      _
    // Predicated region
    $region90: #{clip_image_encoder_forward.1} parent=1 // pred_check
      _
    $region91: #{clip_image_encoder_forward.1} parent=1 // pred_check_branch
      %4314 = sbr.rel (0) target = $region93
    $region92: #{clip_image_encoder_forward.1} parent=1 // pred_region
      %4315 = dma.done [#allocation3], 32
    $region93: #{clip_image_encoder_forward.1} parent=1 // pred_fallthru
      _
    %4316 = vsyncpa [#allocation3], 1

</llo_original>
